<compile_context>
chip_gen: v5e
topology: v5e:2x2
jax: 0.10.0
libtpu: 0.0.40
codegen_flags: <defaults>
</compile_context>

<pallas_src>
import functools
import math

import jax
import jax.numpy as jnp
from jax.experimental import pallas as pl
from jax.experimental.pallas import tpu as pltpu

CFGS = {
    2: [64, 'M', 'M', 'M', 'M', 512, 'M'],
    5: [64, 'M', 128, 'M', 256, 'M', 512, 'M', 512, 'M'],
    16: [64, 64, 'M', 128, 128, 'M', 256, 256, 256, 'M',
         512, 512, 512, 'M', 512, 512, 512, 'M'],
    19: [64, 64, 'M', 128, 128, 'M', 256, 256, 256, 256, 'M',
         512, 512, 512, 512, 'M', 512, 512, 512, 512, 'M'],
}


def _chip_budget():
    """(vmem_limit_bytes, row-tile cap) tuned per chip generation."""
    vmem_bytes = 0
    try:
        info = pltpu.get_tpu_info()
        vmem_bytes = int(getattr(info, "vmem_capacity_bytes", 0))
    except Exception:
        pass
    if vmem_bytes >= 100 * 1024 * 1024:      # v5e / v6e: 128 MiB physical VMEM
        return 96 * 1024 * 1024, 64
    return 48 * 1024 * 1024, 32              # v7x (64 MiB) or unknown: conservative


_VMEM_LIMIT, _TH_CAP = _chip_budget()


def _largest_divisor(n, cap):
    t = min(n, cap)
    while n % t:
        t -= 1
    return t


def _pick_row_tile(H, pool, cap):
    """Largest output-row tile <= cap that divides H (even when the pool is fused)."""
    th = min(H, cap)
    while H % th or (pool and th % 2):
        th -= 1
    return th


# ----------------------------- conv 3x3 + ReLU (+ fused maxpool) ------------

def conv3x3_relu_kernel(x_ref, w_ref, b_ref, o_ref, *, H, W, Cin, TH, pool, fold_kw):
    """3x3 conv (padding=1) + bias + ReLU, optionally fused 2x2/2 maxpool.

    x_ref : (H, W, Cin) bf16    full image, VMEM-resident across the inner axes.
    w_ref : (3, 3*Cin, TC)      when fold_kw (Cin % 128 == 0), else (3, 3, Cin, TC).
    b_ref : (1, TC) f32
    o_ref : (TH, W, TC) or (TH//2, W//2, TC) bf16 when the maxpool is fused.
    """
    r = pl.program_id(2)
    TC = o_ref.shape[-1]
    row0 = r * TH

    # ---- height halo (padding=1): neighbour rows, zero-masked at the edges --
    mid = x_ref[pl.ds(row0, TH)]                              # (TH, W, Cin)
    top = x_ref[pl.ds(jnp.maximum(row0 - 1, 0), 1)]           # (1, W, Cin)
    bot = x_ref[pl.ds(jnp.minimum(row0 + TH, H - 1), 1)]      # (1, W, Cin)
    top = top * (row0 > 0).astype(top.dtype)
    bot = bot * (row0 + TH < H).astype(bot.dtype)
    rows = jnp.concatenate([top, mid, bot], axis=0)           # (TH+2, W, Cin)

    # ---- width shift hoisted out of the tap loop: 3 buffers, center is free --
    zc = jnp.zeros((TH + 2, 1, Cin), rows.dtype)
    sh0 = jnp.concatenate([zc, rows[:, :W - 1, :]], axis=1)   # column j-1 (left pad)
    sh1 = rows                                                # column j   (no copy)
    sh2 = jnp.concatenate([rows[:, 1:, :], zc], axis=1)       # column j+1 (right pad)

    acc = jnp.zeros((TH * W, TC), jnp.float32)
    if fold_kw:
        # kw folded into the contraction: lane-aligned concat (Cin % 128 == 0),
        # 3 dots with K=3*Cin and 3 accumulator sweeps instead of 9.
        wide = jnp.concatenate([sh0, sh1, sh2], axis=-1)      # (TH+2, W, 3*Cin)
        for kh in range(3):
            patch = wide[kh:kh + TH].reshape(TH * W, 3 * Cin)
            acc = acc + jnp.dot(patch, w_ref[kh],
                                preferred_element_type=jnp.float32)
    else:
        # 9-tap path (Cin = 3 / 64): kh is a cheap leading-dim slice.
        for kw, sh in enumerate((sh0, sh1, sh2)):
            for kh in range(3):
                patch = sh[kh:kh + TH].reshape(TH * W, Cin)
                acc = acc + jnp.dot(patch, w_ref[kh, kw],
                                    preferred_element_type=jnp.float32)

    acc = jnp.maximum(acc + b_ref[...], 0.0)                  # bias + ReLU on f32
    y = acc.reshape(TH, W, TC)
    if pool:                                                  # fused MaxPool2d(2, 2)
        y = jnp.max(y.reshape(TH // 2, 2, W, TC), axis=1)
        y = jnp.max(y.reshape(TH // 2, W // 2, 2, TC), axis=2)
    o_ref[...] = y.astype(o_ref.dtype)


def conv3x3_relu(x, w, b, *, pool):
    """Grid (Cout tiles, batch, output-row blocks).  `pool=True` fuses the
    following MaxPool2d(2, 2) into the epilogue."""
    N, H, W, Cin = x.shape
    fold_kw = (w.ndim == 3)                # weight pre-reshaped to (3, 3*Cin, Cout)
    Cout = w.shape[-1]
    TH = _pick_row_tile(H, pool, _TH_CAP)
    TC = _largest_divisor(Cout, 256)       # 256-wide Cout tiles (v6e/v7x MXU width)
    Ho, Wo = (H // 2, W // 2) if pool else (H, W)
    THo = TH // 2 if pool else TH

    kernel = functools.partial(conv3x3_relu_kernel, H=H, W=W, Cin=Cin, TH=TH,
                               pool=pool, fold_kw=fold_kw)
    if fold_kw:
        w_spec = pl.BlockSpec((3, 3 * Cin, TC), lambda j, n, r: (0, 0, j))
    else:
        w_spec = pl.BlockSpec((3, 3, Cin, TC), lambda j, n, r: (0, 0, 0, j))

    # Cout-tile axis outermost so a 2-core split lands on Cout even when N is 1-2
    # (v7x megacore); weights / bias depend only on j, the resident image only on n.
    return pl.pallas_call(
        kernel,
        out_shape=jax.ShapeDtypeStruct((N, Ho, Wo, Cout), x.dtype),
        grid=(Cout // TC, N, H // TH),
        in_specs=[
            pl.BlockSpec((None, H, W, Cin), lambda j, n, r: (n, 0, 0, 0)),
            w_spec,
            pl.BlockSpec((1, TC), lambda j, n, r: (0, j)),
        ],
        out_specs=pl.BlockSpec((None, THo, Wo, TC), lambda j, n, r: (n, r, 0, j)),
        compiler_params=pltpu.CompilerParams(
            dimension_semantics=("parallel", "parallel", "parallel"),
            vmem_limit_bytes=_VMEM_LIMIT),
    )(x, w, b)


# ------------------------------ max pool 2x2 (standalone) -------------------
# Only used when an 'M' is not directly preceded by a conv (e.g. depth=2 cfg);
# for VGG-16/19 every pool is fused into the conv epilogue above.

def maxpool2_kernel(x_ref, o_ref):
    H, W, C = x_ref.shape
    x = x_ref[...]
    x = jnp.max(x.reshape(H // 2, 2, W, C), axis=1)
    x = jnp.max(x.reshape(H // 2, W // 2, 2, C), axis=2)
    o_ref[...] = x


def maxpool2(x):
    N, H, W, C = x.shape
    Ho, Wo = H // 2, W // 2
    return pl.pallas_call(
        maxpool2_kernel,
        out_shape=jax.ShapeDtypeStruct((N, Ho, Wo, C), x.dtype),
        grid=(N,),
        in_specs=[pl.BlockSpec((None, H, W, C), lambda n: (n, 0, 0, 0))],
        out_specs=pl.BlockSpec((None, Ho, Wo, C), lambda n: (n, 0, 0, 0)),
        compiler_params=pltpu.CompilerParams(
            dimension_semantics=("parallel",),
            vmem_limit_bytes=_VMEM_LIMIT),
    )(x)


# -------------------------- adaptive avg pool (7,7) -------------------------

def adaptive_avgpool_kernel(x_ref, o_ref, *, out_h, out_w):
    Hi, Wi, C = x_ref.shape
    x = x_ref[...].astype(jnp.float32)
    rows = []
    for i in range(out_h):
        h0 = (i * Hi) // out_h
        h1 = -((-(i + 1) * Hi) // out_h)          # ceil((i+1)*Hi/out_h)
        cols = []
        for j in range(out_w):
            w0 = (j * Wi) // out_w
            w1 = -((-(j + 1) * Wi) // out_w)
            patch = x[h0:h1, w0:w1, :]
            cols.append(jnp.mean(patch, axis=(0, 1), keepdims=True))
        rows.append(jnp.concatenate(cols, axis=1))
    o_ref[...] = jnp.concatenate(rows, axis=0).astype(o_ref.dtype)


def adaptive_avgpool(x, out_h, out_w):
    N, Hi, Wi, C = x.shape
    if (Hi, Wi) == (out_h, out_w):   # ImageNet 7x7 case: the pool is an identity
        return x
    kernel = functools.partial(adaptive_avgpool_kernel, out_h=out_h, out_w=out_w)
    return pl.pallas_call(
        kernel,
        out_shape=jax.ShapeDtypeStruct((N, out_h, out_w, C), x.dtype),
        grid=(N,),
        in_specs=[pl.BlockSpec((None, Hi, Wi, C), lambda n: (n, 0, 0, 0))],
        out_specs=pl.BlockSpec((None, out_h, out_w, C), lambda n: (n, 0, 0, 0)),
        compiler_params=pltpu.CompilerParams(
            dimension_semantics=("parallel",),
            vmem_limit_bytes=_VMEM_LIMIT),
    )(x)


# -------------------------------- linear ------------------------------------

def linear_kernel(x_ref, w_ref, b_ref, o_ref, acc_ref, *, relu):
    k = pl.program_id(1)

    @pl.when(k == 0)
    def _():
        acc_ref[...] = jnp.zeros_like(acc_ref)

    acc_ref[...] += jnp.dot(x_ref[...], w_ref[...],
                            preferred_element_type=jnp.float32)

    @pl.when(k == pl.num_programs(1) - 1)
    def _():
        out = acc_ref[...] + b_ref[...]     # bias added once, on the last K step
        if relu:
            out = jnp.maximum(out, 0.0)
        o_ref[...] = out.astype(o_ref.dtype)


def linear(x, w, b, *, relu, out_dtype):
    """x: (B, K) bf16, w: (K, Np) bf16 (Np already padded to a multiple of 128 at
    init), b: (1, Np) f32.  f32 VMEM accumulator, K-tiled."""
    B, K = x.shape
    Np = w.shape[1]
    tn = _largest_divisor(Np, 1024)
    # Size tk so the double-buffered bf16 weight block stays under ~16 MiB.
    tk = _largest_divisor(K, max(256, (16 * 1024 * 1024) // (2 * 2 * tn)))
    kernel = functools.partial(linear_kernel, relu=relu)
    return pl.pallas_call(
        kernel,
        out_shape=jax.ShapeDtypeStruct((B, Np), out_dtype),
        grid=(Np // tn, K // tk),
        in_specs=[
            pl.BlockSpec((B, tk), lambda j, k: (0, k)),
            pl.BlockSpec((tk, tn), lambda j, k: (k, j)),
            # bias block index only depends on j -> not re-DMAed across K steps
            pl.BlockSpec((1, tn), lambda j, k: (0, j)),
        ],
        out_specs=pl.BlockSpec((B, tn), lambda j, k: (0, j)),
        scratch_shapes=[pltpu.VMEM((B, tn), jnp.float32)],
        compiler_params=pltpu.CompilerParams(
            dimension_semantics=("parallel", "arbitrary"),
            vmem_limit_bytes=_VMEM_LIMIT),
    )(x, w, b)


# ------------------------------ parameters ----------------------------------

def init_params(key, cfg, num_classes):
    """Deterministic init matching VGG._initialize_weights shapes/distributions.

    All weight-layout transforms happen once here (not per forward call):
      * conv weights -> bf16; kw folded into the contraction ((3, 3*Cin, Cout))
        for Cin % 128 == 0 layers.
      * FC weights -> bf16; FC1 rows permuted from the PyTorch (C,H,W) flatten
        order to the kernels' NHWC (H,W,C) flatten order; last layer's output
        dim zero-padded up to a multiple of 128 for lane-dense stores.
    """
    convs = []
    in_c = 3
    for v in cfg:
        if v == 'M':
            continue
        key, k1 = jax.random.split(key)
        fan_out = v * 3 * 3                       # kaiming_normal_, mode='fan_out', relu
        std = math.sqrt(2.0 / fan_out)
        w = jax.random.normal(k1, (3, 3, in_c, v), jnp.float32) * std
        if in_c % 128 == 0:
            # fold kw into the contraction: (kh, kw*Cin + cin, cout), matching the
            # lane-aligned [sh0 | sh1 | sh2] concat in the kernel.
            w = w.reshape(3, 3 * in_c, v)
        convs.append((w.astype(jnp.bfloat16), jnp.zeros((1, v), jnp.float32)))
        in_c = v

    linears = []
    dims = [(512 * 7 * 7, 4096), (4096, 4096), (4096, num_classes)]
    for li, (din, dout) in enumerate(dims):
        key, k1 = jax.random.split(key)
        w = jax.random.normal(k1, (din, dout), jnp.float32) * 0.01  # normal(0, 0.01)
        b = jnp.zeros((1, dout), jnp.float32)
        if li == 0:
            # PyTorch flattens (C, H, W); the kernels flatten NHWC (H, W, C).
            # Permute FC1's rows once so no transpose is needed in the forward.
            idx = jnp.arange(din).reshape(512, 7, 7).transpose(1, 2, 0).reshape(-1)
            w = w[idx, :]
        dpad = -(-dout // 128) * 128              # lane-dense output columns
        if dpad != dout:
            w = jnp.pad(w, ((0, 0), (0, dpad - dout)))
            b = jnp.pad(b, ((0, 0), (0, dpad - dout)))
        linears.append((w.astype(jnp.bfloat16), b))
    return {"convs": convs, "linears": linears, "num_classes": num_classes}


# ------------------------------- forward ------------------------------------

def vgg_forward(params, x_nchw, cfg):
    # Layout: input NCHW (PyTorch) -> NHWC bf16 for the kernels.
    x = jnp.transpose(x_nchw, (0, 2, 3, 1)).astype(jnp.bfloat16)
    ci = 0
    i = 0
    while i < len(cfg):
        v = cfg[i]
        if v == 'M':
            x = maxpool2(x)
            i += 1
        else:
            w, b = params["convs"][ci]
            ci += 1
            fuse = (i + 1 < len(cfg) and cfg[i + 1] == 'M'
                    and x.shape[1] % 2 == 0 and x.shape[2] % 2 == 0)
            x = conv3x3_relu(x, w, b, pool=fuse)
            i += 2 if fuse else 1
    x = adaptive_avgpool(x, 7, 7)
    # NHWC flatten; FC1's rows were permuted at init to match torch.flatten(NCHW).
    x = x.reshape(x.shape[0], -1)
    n_lin = len(params["linears"])
    for li, (w, b) in enumerate(params["linears"]):
        last = (li == n_lin - 1)
        x = linear(x, w, b, relu=not last,
                   out_dtype=jnp.float32 if last else jnp.bfloat16)
        # TODO(synk): Dropout after the first two Linear+ReLU is identity (eval mode).
    return x[:, :params["num_classes"]]   # strip the lane-padding of the last layer


if __name__ == "__main__":
    key = jax.random.PRNGKey(0)
    kp, kx = jax.random.split(key)

    cfg = CFGS[16]          # depth=16 (module default)
    num_classes = 10

    params = init_params(kp, cfg, num_classes)
    x = jax.random.normal(kx, (2, 3, 32, 32), jnp.float32)  # NCHW, small spatial

    out = vgg_forward(params, x, cfg)
    out = jax.block_until_ready(out)
    assert out.shape == (2, num_classes), out.shape
    assert bool(jnp.all(jnp.isfinite(out)))
    print("KERNEL_OK")
</pallas_src>

<mosaic_0001>
module attributes {stable_mosaic.version = 11 : i64} {
  func.func @conv3x3_relu_kernel(%arg0: i32, %arg1: i32, %arg2: i32, %arg3: memref<1x32x32x3xbf16, #tpu.memory_space<vmem>>, %arg4: memref<3x3x3x64xbf16, #tpu.memory_space<vmem>>, %arg5: memref<1x64xf32, #tpu.memory_space<vmem>>, %arg6: memref<1x32x32x64xbf16, #tpu.memory_space<vmem>>) attributes {dimension_semantics = [#tpu.dimension_semantics<parallel>, #tpu.dimension_semantics<parallel>, #tpu.dimension_semantics<parallel>], iteration_bounds = array<i64: 1, 2, 1>, scalar_prefetch = 0 : i64, scratch_operands = 0 : i64, tpu.core_type = #tpu.core_type<tc>, window_params = [{transform_indices = @transform_0, window_bounds = array<i64: 1, 32, 32, 3>}, {transform_indices = @transform_1, window_bounds = array<i64: 3, 3, 3, 64>}, {transform_indices = @transform_2, window_bounds = array<i64: 1, 64>}, {transform_indices = @transform_3, window_bounds = array<i64: 1, 32, 32, 64>}]} {
    %c32_i32 = arith.constant 32 : i32
    %0 = arith.muli %arg2, %c32_i32 : i32
    %c0 = arith.constant 0 : index
    %1 = arith.index_cast %0 : i32 to index
    %c0_0 = arith.constant 0 : index
    %c0_1 = arith.constant 0 : index
    %2 = vector.load %arg3[%c0, %1, %c0_0, %c0_1] : memref<1x32x32x3xbf16, #tpu.memory_space<vmem>>, vector<1x32x32x3xbf16>
    %3 = vector.shape_cast %2 : vector<1x32x32x3xbf16> to vector<32x32x3xbf16>
    %c1_i32 = arith.constant 1 : i32
    %4 = arith.subi %0, %c1_i32 : i32
    %c0_i32 = arith.constant 0 : i32
    %5 = arith.maxsi %4, %c0_i32 : i32
    %c0_2 = arith.constant 0 : index
    %6 = arith.index_cast %5 : i32 to index
    %c0_3 = arith.constant 0 : index
    %c0_4 = arith.constant 0 : index
    %7 = vector.load %arg3[%c0_2, %6, %c0_3, %c0_4] : memref<1x32x32x3xbf16, #tpu.memory_space<vmem>>, vector<1x1x32x3xbf16>
    %8 = vector.shape_cast %7 : vector<1x1x32x3xbf16> to vector<1x32x3xbf16>
    %c32_i32_5 = arith.constant 32 : i32
    %9 = arith.addi %0, %c32_i32_5 : i32
    %c31_i32 = arith.constant 31 : i32
    %10 = arith.minsi %9, %c31_i32 : i32
    %c0_6 = arith.constant 0 : index
    %11 = arith.index_cast %10 : i32 to index
    %c0_7 = arith.constant 0 : index
    %c0_8 = arith.constant 0 : index
    %12 = vector.load %arg3[%c0_6, %11, %c0_7, %c0_8] : memref<1x32x32x3xbf16, #tpu.memory_space<vmem>>, vector<1x1x32x3xbf16>
    %13 = vector.shape_cast %12 : vector<1x1x32x3xbf16> to vector<1x32x3xbf16>
    %c0_i32_9 = arith.constant 0 : i32
    %14 = arith.cmpi sgt, %0, %c0_i32_9 : i32
    %15 = arith.extui %14 : i1 to i32
    %16 = arith.sitofp %15 : i32 to f32
    %17 = arith.truncf %16 : f32 to bf16
    %18 = vector.broadcast %17 : bf16 to vector<1x32x3xbf16>
    %19 = arith.mulf %8, %18 : vector<1x32x3xbf16>
    %c32_i32_10 = arith.constant 32 : i32
    %20 = arith.addi %0, %c32_i32_10 : i32
    %c32_i32_11 = arith.constant 32 : i32
    %21 = arith.cmpi slt, %20, %c32_i32_11 : i32
    %22 = arith.extui %21 : i1 to i32
    %23 = arith.sitofp %22 : i32 to f32
    %24 = arith.truncf %23 : f32 to bf16
    %25 = vector.broadcast %24 : bf16 to vector<1x32x3xbf16>
    %26 = arith.mulf %13, %25 : vector<1x32x3xbf16>
    %27 = tpu.concatenate %19, %3, %26 in 0 : vector<1x32x3xbf16>, vector<32x32x3xbf16>, vector<1x32x3xbf16> -> vector<34x32x3xbf16>
    %cst = arith.constant 0.000000e+00 : bf16
    %28 = vector.broadcast %cst : bf16 to vector<34x1x3xbf16>
    %29 = vector.extract_strided_slice %27 {offsets = [0, 0, 0], sizes = [34, 31, 3], strides = [1, 1, 1]} : vector<34x32x3xbf16> to vector<34x31x3xbf16>
    %30 = tpu.concatenate %28, %29 in 1 : vector<34x1x3xbf16>, vector<34x31x3xbf16> -> vector<34x32x3xbf16>
    %31 = vector.extract_strided_slice %27 {offsets = [0, 1, 0], sizes = [34, 31, 3], strides = [1, 1, 1]} : vector<34x32x3xbf16> to vector<34x31x3xbf16>
    %32 = tpu.concatenate %31, %28 in 1 : vector<34x31x3xbf16>, vector<34x1x3xbf16> -> vector<34x32x3xbf16>
    %cst_12 = arith.constant 0.000000e+00 : f32
    %33 = vector.broadcast %cst_12 : f32 to vector<1024x64xf32>
    %34 = vector.extract_strided_slice %30 {offsets = [0, 0, 0], sizes = [32, 32, 3], strides = [1, 1, 1]} : vector<34x32x3xbf16> to vector<32x32x3xbf16>
    %35 = vector.shape_cast %34 : vector<32x32x3xbf16> to vector<1024x3xbf16>
    %c0_13 = arith.constant 0 : index
    %c0_14 = arith.constant 0 : index
    %c0_15 = arith.constant 0 : index
    %c0_16 = arith.constant 0 : index
    %36 = vector.load %arg4[%c0_13, %c0_14, %c0_15, %c0_16] : memref<3x3x3x64xbf16, #tpu.memory_space<vmem>>, vector<1x1x3x64xbf16>
    %37 = vector.shape_cast %36 : vector<1x1x3x64xbf16> to vector<3x64xbf16>
    %cst_17 = arith.constant dense<0.000000e+00> : vector<1024x64xf32>
    %38 = tpu.matmul %35, %37, %cst_17 {dimension_numbers = #tpu.dot_dimension_numbers<[1], [0], [0], [1], [0, 0, 1, 1], [], []>} : vector<1024x3xbf16>, vector<3x64xbf16>, vector<1024x64xf32> -> vector<1024x64xf32>
    %39 = arith.addf %33, %38 : vector<1024x64xf32>
    %40 = vector.extract_strided_slice %30 {offsets = [1, 0, 0], sizes = [32, 32, 3], strides = [1, 1, 1]} : vector<34x32x3xbf16> to vector<32x32x3xbf16>
    %41 = vector.shape_cast %40 : vector<32x32x3xbf16> to vector<1024x3xbf16>
    %c1 = arith.constant 1 : index
    %c0_18 = arith.constant 0 : index
    %c0_19 = arith.constant 0 : index
    %c0_20 = arith.constant 0 : index
    %42 = vector.load %arg4[%c1, %c0_18, %c0_19, %c0_20] : memref<3x3x3x64xbf16, #tpu.memory_space<vmem>>, vector<1x1x3x64xbf16>
    %43 = vector.shape_cast %42 : vector<1x1x3x64xbf16> to vector<3x64xbf16>
    %cst_21 = arith.constant dense<0.000000e+00> : vector<1024x64xf32>
    %44 = tpu.matmul %41, %43, %cst_21 {dimension_numbers = #tpu.dot_dimension_numbers<[1], [0], [0], [1], [0, 0, 1, 1], [], []>} : vector<1024x3xbf16>, vector<3x64xbf16>, vector<1024x64xf32> -> vector<1024x64xf32>
    %45 = arith.addf %39, %44 : vector<1024x64xf32>
    %46 = vector.extract_strided_slice %30 {offsets = [2, 0, 0], sizes = [32, 32, 3], strides = [1, 1, 1]} : vector<34x32x3xbf16> to vector<32x32x3xbf16>
    %47 = vector.shape_cast %46 : vector<32x32x3xbf16> to vector<1024x3xbf16>
    %c2 = arith.constant 2 : index
    %c0_22 = arith.constant 0 : index
    %c0_23 = arith.constant 0 : index
    %c0_24 = arith.constant 0 : index
    %48 = vector.load %arg4[%c2, %c0_22, %c0_23, %c0_24] : memref<3x3x3x64xbf16, #tpu.memory_space<vmem>>, vector<1x1x3x64xbf16>
    %49 = vector.shape_cast %48 : vector<1x1x3x64xbf16> to vector<3x64xbf16>
    %cst_25 = arith.constant dense<0.000000e+00> : vector<1024x64xf32>
    %50 = tpu.matmul %47, %49, %cst_25 {dimension_numbers = #tpu.dot_dimension_numbers<[1], [0], [0], [1], [0, 0, 1, 1], [], []>} : vector<1024x3xbf16>, vector<3x64xbf16>, vector<1024x64xf32> -> vector<1024x64xf32>
    %51 = arith.addf %45, %50 : vector<1024x64xf32>
    %52 = vector.extract_strided_slice %27 {offsets = [0, 0, 0], sizes = [32, 32, 3], strides = [1, 1, 1]} : vector<34x32x3xbf16> to vector<32x32x3xbf16>
    %53 = vector.shape_cast %52 : vector<32x32x3xbf16> to vector<1024x3xbf16>
    %c0_26 = arith.constant 0 : index
    %c1_27 = arith.constant 1 : index
    %c0_28 = arith.constant 0 : index
    %c0_29 = arith.constant 0 : index
    %54 = vector.load %arg4[%c0_26, %c1_27, %c0_28, %c0_29] : memref<3x3x3x64xbf16, #tpu.memory_space<vmem>>, vector<1x1x3x64xbf16>
    %55 = vector.shape_cast %54 : vector<1x1x3x64xbf16> to vector<3x64xbf16>
    %cst_30 = arith.constant dense<0.000000e+00> : vector<1024x64xf32>
    %56 = tpu.matmul %53, %55, %cst_30 {dimension_numbers = #tpu.dot_dimension_numbers<[1], [0], [0], [1], [0, 0, 1, 1], [], []>} : vector<1024x3xbf16>, vector<3x64xbf16>, vector<1024x64xf32> -> vector<1024x64xf32>
    %57 = arith.addf %51, %56 : vector<1024x64xf32>
    %58 = vector.extract_strided_slice %27 {offsets = [1, 0, 0], sizes = [32, 32, 3], strides = [1, 1, 1]} : vector<34x32x3xbf16> to vector<32x32x3xbf16>
    %59 = vector.shape_cast %58 : vector<32x32x3xbf16> to vector<1024x3xbf16>
    %c1_31 = arith.constant 1 : index
    %c1_32 = arith.constant 1 : index
    %c0_33 = arith.constant 0 : index
    %c0_34 = arith.constant 0 : index
    %60 = vector.load %arg4[%c1_31, %c1_32, %c0_33, %c0_34] : memref<3x3x3x64xbf16, #tpu.memory_space<vmem>>, vector<1x1x3x64xbf16>
    %61 = vector.shape_cast %60 : vector<1x1x3x64xbf16> to vector<3x64xbf16>
    %cst_35 = arith.constant dense<0.000000e+00> : vector<1024x64xf32>
    %62 = tpu.matmul %59, %61, %cst_35 {dimension_numbers = #tpu.dot_dimension_numbers<[1], [0], [0], [1], [0, 0, 1, 1], [], []>} : vector<1024x3xbf16>, vector<3x64xbf16>, vector<1024x64xf32> -> vector<1024x64xf32>
    %63 = arith.addf %57, %62 : vector<1024x64xf32>
    %64 = vector.extract_strided_slice %27 {offsets = [2, 0, 0], sizes = [32, 32, 3], strides = [1, 1, 1]} : vector<34x32x3xbf16> to vector<32x32x3xbf16>
    %65 = vector.shape_cast %64 : vector<32x32x3xbf16> to vector<1024x3xbf16>
    %c2_36 = arith.constant 2 : index
    %c1_37 = arith.constant 1 : index
    %c0_38 = arith.constant 0 : index
    %c0_39 = arith.constant 0 : index
    %66 = vector.load %arg4[%c2_36, %c1_37, %c0_38, %c0_39] : memref<3x3x3x64xbf16, #tpu.memory_space<vmem>>, vector<1x1x3x64xbf16>
    %67 = vector.shape_cast %66 : vector<1x1x3x64xbf16> to vector<3x64xbf16>
    %cst_40 = arith.constant dense<0.000000e+00> : vector<1024x64xf32>
    %68 = tpu.matmul %65, %67, %cst_40 {dimension_numbers = #tpu.dot_dimension_numbers<[1], [0], [0], [1], [0, 0, 1, 1], [], []>} : vector<1024x3xbf16>, vector<3x64xbf16>, vector<1024x64xf32> -> vector<1024x64xf32>
    %69 = arith.addf %63, %68 : vector<1024x64xf32>
    %70 = vector.extract_strided_slice %32 {offsets = [0, 0, 0], sizes = [32, 32, 3], strides = [1, 1, 1]} : vector<34x32x3xbf16> to vector<32x32x3xbf16>
    %71 = vector.shape_cast %70 : vector<32x32x3xbf16> to vector<1024x3xbf16>
    %c0_41 = arith.constant 0 : index
    %c2_42 = arith.constant 2 : index
    %c0_43 = arith.constant 0 : index
    %c0_44 = arith.constant 0 : index
    %72 = vector.load %arg4[%c0_41, %c2_42, %c0_43, %c0_44] : memref<3x3x3x64xbf16, #tpu.memory_space<vmem>>, vector<1x1x3x64xbf16>
    %73 = vector.shape_cast %72 : vector<1x1x3x64xbf16> to vector<3x64xbf16>
    %cst_45 = arith.constant dense<0.000000e+00> : vector<1024x64xf32>
    %74 = tpu.matmul %71, %73, %cst_45 {dimension_numbers = #tpu.dot_dimension_numbers<[1], [0], [0], [1], [0, 0, 1, 1], [], []>} : vector<1024x3xbf16>, vector<3x64xbf16>, vector<1024x64xf32> -> vector<1024x64xf32>
    %75 = arith.addf %69, %74 : vector<1024x64xf32>
    %76 = vector.extract_strided_slice %32 {offsets = [1, 0, 0], sizes = [32, 32, 3], strides = [1, 1, 1]} : vector<34x32x3xbf16> to vector<32x32x3xbf16>
    %77 = vector.shape_cast %76 : vector<32x32x3xbf16> to vector<1024x3xbf16>
    %c1_46 = arith.constant 1 : index
    %c2_47 = arith.constant 2 : index
    %c0_48 = arith.constant 0 : index
    %c0_49 = arith.constant 0 : index
    %78 = vector.load %arg4[%c1_46, %c2_47, %c0_48, %c0_49] : memref<3x3x3x64xbf16, #tpu.memory_space<vmem>>, vector<1x1x3x64xbf16>
    %79 = vector.shape_cast %78 : vector<1x1x3x64xbf16> to vector<3x64xbf16>
    %cst_50 = arith.constant dense<0.000000e+00> : vector<1024x64xf32>
    %80 = tpu.matmul %77, %79, %cst_50 {dimension_numbers = #tpu.dot_dimension_numbers<[1], [0], [0], [1], [0, 0, 1, 1], [], []>} : vector<1024x3xbf16>, vector<3x64xbf16>, vector<1024x64xf32> -> vector<1024x64xf32>
    %81 = arith.addf %75, %80 : vector<1024x64xf32>
    %82 = vector.extract_strided_slice %32 {offsets = [2, 0, 0], sizes = [32, 32, 3], strides = [1, 1, 1]} : vector<34x32x3xbf16> to vector<32x32x3xbf16>
    %83 = vector.shape_cast %82 : vector<32x32x3xbf16> to vector<1024x3xbf16>
    %c2_51 = arith.constant 2 : index
    %c2_52 = arith.constant 2 : index
    %c0_53 = arith.constant 0 : index
    %c0_54 = arith.constant 0 : index
    %84 = vector.load %arg4[%c2_51, %c2_52, %c0_53, %c0_54] : memref<3x3x3x64xbf16, #tpu.memory_space<vmem>>, vector<1x1x3x64xbf16>
    %85 = vector.shape_cast %84 : vector<1x1x3x64xbf16> to vector<3x64xbf16>
    %cst_55 = arith.constant dense<0.000000e+00> : vector<1024x64xf32>
    %86 = tpu.matmul %83, %85, %cst_55 {dimension_numbers = #tpu.dot_dimension_numbers<[1], [0], [0], [1], [0, 0, 1, 1], [], []>} : vector<1024x3xbf16>, vector<3x64xbf16>, vector<1024x64xf32> -> vector<1024x64xf32>
    %87 = arith.addf %81, %86 : vector<1024x64xf32>
    %c0_56 = arith.constant 0 : index
    %c0_57 = arith.constant 0 : index
    %88 = vector.load %arg5[%c0_56, %c0_57] : memref<1x64xf32, #tpu.memory_space<vmem>>, vector<1x64xf32>
    %89 = vector.broadcast %88 : vector<1x64xf32> to vector<1024x64xf32>
    %90 = arith.addf %87, %89 : vector<1024x64xf32>
    %cst_58 = arith.constant 0.000000e+00 : f32
    %91 = vector.broadcast %cst_58 : f32 to vector<1024x64xf32>
    %92 = arith.maximumf %90, %91 : vector<1024x64xf32>
    %93 = vector.shape_cast %92 : vector<1024x64xf32> to vector<32x32x64xf32>
    %94 = arith.truncf %93 : vector<32x32x64xf32> to vector<32x32x64xbf16>
    %c0_59 = arith.constant 0 : index
    %c0_60 = arith.constant 0 : index
    %c0_61 = arith.constant 0 : index
    %c0_62 = arith.constant 0 : index
    %95 = vector.load %arg6[%c0_59, %c0_60, %c0_61, %c0_62] : memref<1x32x32x64xbf16, #tpu.memory_space<vmem>>, vector<1x32x32x64xbf16>
    %96 = vector.shape_cast %95 : vector<1x32x32x64xbf16> to vector<32x32x64xbf16>
    %97 = vector.shape_cast %94 : vector<32x32x64xbf16> to vector<1x32x32x64xbf16>
    tpu.vector_store %arg6[%c0_59, %c0_60, %c0_61, %c0_62], %97 {strides = array<i32>} : memref<1x32x32x64xbf16, #tpu.memory_space<vmem>>, vector<1x32x32x64xbf16>,
    return
  }
  func.func @transform_0(%arg0: i32, %arg1: i32, %arg2: i32) -> (i32, i32, i32, i32) {
    %c0_i32 = arith.constant 0 : i32
    %c0_i32_0 = arith.constant 0 : i32
    %c0_i32_1 = arith.constant 0 : i32
    %c0_i32_2 = arith.constant 0 : i32
    return %arg1, %c0_i32, %c0_i32_0, %c0_i32_1 : i32, i32, i32, i32
  }
  func.func @transform_1(%arg0: i32, %arg1: i32, %arg2: i32) -> (i32, i32, i32, i32) {
    %c0_i32 = arith.constant 0 : i32
    %c0_i32_0 = arith.constant 0 : i32
    %c0_i32_1 = arith.constant 0 : i32
    %c0_i32_2 = arith.constant 0 : i32
    return %c0_i32, %c0_i32_0, %c0_i32_1, %arg0 : i32, i32, i32, i32
  }
  func.func @transform_2(%arg0: i32, %arg1: i32, %arg2: i32) -> (i32, i32) {
    %c0_i32 = arith.constant 0 : i32
    %c0_i32_0 = arith.constant 0 : i32
    return %c0_i32, %arg0 : i32, i32
  }
  func.func @transform_3(%arg0: i32, %arg1: i32, %arg2: i32) -> (i32, i32, i32, i32) {
    %c0_i32 = arith.constant 0 : i32
    %c0_i32_0 = arith.constant 0 : i32
    return %arg1, %arg2, %c0_i32, %arg0 : i32, i32, i32, i32
  }
}

</mosaic_0001>

<llo_original>
// kernel: tpu_custom_call.1
$region0: #{tpu_custom_call.1}
  #allocation0 [shape = 'u32[]', space=smem, size = 0x4, offset = 0x4, fixed_abs, tag = 'smem constant byte address 0x4 - core index']
  #allocation1 [shape = 'u32[72,128]{1,0:T(1,128)}', space=vmem, size = 0x9000, scoped, tag = 'internal scratch']
  %s0 = inlined_call_operand.vmem [shape: bf16[2,32,32,3], index: 0, kind: input, shape index: {}]
  %s1 = inlined_call_operand.vmem [shape: bf16[3,3,3,64], index: 1, kind: input, shape index: {}]
  %s2 = inlined_call_operand.vmem [shape: f32[1,64], index: 2, kind: input, shape index: {}]
  %s3 = inlined_call_operand.hbm [shape: bf16[2,32,32,64], index: 3, kind: output, shape index: {}]
  %s4 = sld [smem:[#allocation0]]
  $region45: #{tpu_custom_call.1} parent=0
    _
  %s6 = ssub.s32 1, %s4
  %s7 = scalar_select 0, %s6, %s4
  $region1: #{tpu_custom_call.1} parent=0
    #allocation2 [shape = 'u8[524288]{0}', space=vmem, size = 0x80000, scoped, tag = 'output window, operand 0']
    #allocation3 [shape = 's32[2]{0}', space=sflag, size = 0x8, scoped, tag = 'scoped memory for tpu_custom_call.1']
    %8 = vsyncpa [#allocation3], 0
    %s9 = scalar_lea.sflag [#allocation3], 1
    %10 = vsyncpa %s9, 0
    loop: start=0, step=1, limit=4
    $region2: #{tpu_custom_call.1} parent=1 // loop_pre_header
      _
    $region3: #{tpu_custom_call.1} parent=1 // loop_header
      %s12 = sphi 0, %s16
      %p13 = scmp.ge.s32.totalorder %s12, 4
      %s19 = sphi 0, %s38
      %s20 = sphi 0, %s34
      %s21 = sphi 0, %s30
      %s22 = sphi 0, %s19
      %s23 = sphi 0, %s20
      %s24 = sphi 0, %s21
      %s25 = sphi 0, %s22
      %s26 = sphi 0, %s23
      %s27 = sphi 0, %s24
      %s41 = sphi 0, %s43
      %s44 = sphi 0, %s41
      %s45 = sphi 0, %s44
      %s61 = sphi 0, %s45
      %s67 = sphi 0, %s69
      %s70 = sphi 0, %s67
      %s71 = sphi 0, %s70
      %s87 = sphi 0, %s71
      %s93 = sphi 0, %s95
      %s96 = sphi 0, %s93
      %s97 = sphi 0, %s96
      %s113 = sphi 0, %s97
      %s123 = sphi 0, %s125
      %s126 = sphi 0, %s123
      %s127 = sphi 0, %s126
      %s143 = sphi 0, %s127
    $region4: #{tpu_custom_call.1} parent=1 // loop_header_branch
      %15 = sbr.rel (%p13) target = $region8
    $region5: #{tpu_custom_call.1} parent=1 // loop_body
      %s17 = ssub.s32 %s12, 1
      %s18 = ssub.s32 %s12, 2
      %s28 = sadd.s32 1, %s21
      %p29 = scmp.ge.s32.totalorder %s28, 1
      %s30 = scalar_select %p29, 0, %s28
      %s31 = sadd.s32 1, %s20
      %s32 = scalar_select %p29, %s31, %s20
      %p33 = scmp.ge.s32.totalorder %s32, 2
      %s34 = scalar_select %p33, 0, %s32
      %s35 = sadd.s32 1, %s19
      %s36 = scalar_select %p33, %s35, %s19
      %p37 = scmp.ge.s32.totalorder %s36, 1
      %s38 = scalar_select %p37, 0, %s36
      %s39 = ssub.s32 %s20, %s34
      %p40 = scmp.eq.s32.totalorder %s39, 0
      %s42 = sadd.s32 %s41, 1
      %s43 = scalar_select %p40, %s41, %s42
      %p46 = pneg %p40
      %p47 = scmp.eq.s32.totalorder %s12, 1
      %p48 = por %p46, %p47
      %p49 = scmp.ne.s32.totalorder %s41, %s44
      %p50 = scmp.eq.s32.totalorder %s12, 0
      %p51 = por %p49, %p50
      %p52 = scmp.ne.s32.totalorder %s41, %s44
      %p53 = scmp.eq.s32.totalorder %s17, 1
      %p54 = por %p52, %p53
      %p55 = scmp.ne.s32.totalorder %s44, %s45
      %p56 = scmp.eq.s32.totalorder %s17, 0
      %p57 = por %p55, %p56
      %p58 = scmp.ne.s32.totalorder %s44, %s45
      %p59 = scmp.eq.s32.totalorder %s18, 1
      %p60 = por %p58, %p59
      %p62 = scmp.ne.s32.totalorder %s45, %s61
      %p63 = scmp.eq.s32.totalorder %s18, 0
      %p64 = por %p62, %p63
      %s65 = ssub.s32 %s19, %s38
      %p66 = scmp.eq.s32.totalorder %s65, 0
      %s68 = sadd.s32 %s67, 1
      %s69 = scalar_select %p66, %s67, %s68
      %p72 = pneg %p66
      %p73 = scmp.eq.s32.totalorder %s12, 1
      %p74 = por %p72, %p73
      %p75 = scmp.ne.s32.totalorder %s67, %s70
      %p76 = scmp.eq.s32.totalorder %s12, 0
      %p77 = por %p75, %p76
      %p78 = scmp.ne.s32.totalorder %s67, %s70
      %p79 = scmp.eq.s32.totalorder %s17, 1
      %p80 = por %p78, %p79
      %p81 = scmp.ne.s32.totalorder %s70, %s71
      %p82 = scmp.eq.s32.totalorder %s17, 0
      %p83 = por %p81, %p82
      %p84 = scmp.ne.s32.totalorder %s70, %s71
      %p85 = scmp.eq.s32.totalorder %s18, 1
      %p86 = por %p84, %p85
      %p88 = scmp.ne.s32.totalorder %s71, %s87
      %p89 = scmp.eq.s32.totalorder %s18, 0
      %p90 = por %p88, %p89
      %s91 = ssub.s32 %s19, %s38
      %p92 = scmp.eq.s32.totalorder %s91, 0
      %s94 = sadd.s32 %s93, 1
      %s95 = scalar_select %p92, %s93, %s94
      %p98 = pneg %p92
      %p99 = scmp.eq.s32.totalorder %s12, 1
      %p100 = por %p98, %p99
      %p101 = scmp.ne.s32.totalorder %s93, %s96
      %p102 = scmp.eq.s32.totalorder %s12, 0
      %p103 = por %p101, %p102
      %p104 = scmp.ne.s32.totalorder %s93, %s96
      %p105 = scmp.eq.s32.totalorder %s17, 1
      %p106 = por %p104, %p105
      %p107 = scmp.ne.s32.totalorder %s96, %s97
      %p108 = scmp.eq.s32.totalorder %s17, 0
      %p109 = por %p107, %p108
      %p110 = scmp.ne.s32.totalorder %s96, %s97
      %p111 = scmp.eq.s32.totalorder %s18, 1
      %p112 = por %p110, %p111
      %p114 = scmp.ne.s32.totalorder %s97, %s113
      %p115 = scmp.eq.s32.totalorder %s18, 0
      %p116 = por %p114, %p115
      %s117 = ssub.s32 %s20, %s34
      %s118 = ssub.s32 %s21, %s30
      %s119 = sor.u32 %s117, %s118
      %s120 = ssub.s32 %s19, %s38
      %s121 = sor.u32 %s119, %s120
      %p122 = scmp.eq.s32.totalorder %s121, 0
      %s124 = sadd.s32 %s123, 1
      %s125 = scalar_select %p122, %s123, %s124
      %p128 = pneg %p122
      %p129 = scmp.eq.s32.totalorder %s12, 1
      %p130 = por %p128, %p129
      %p131 = scmp.ne.s32.totalorder %s123, %s126
      %p132 = scmp.eq.s32.totalorder %s12, 0
      %p133 = por %p131, %p132
      %p134 = scmp.ne.s32.totalorder %s123, %s126
      %p135 = scmp.eq.s32.totalorder %s17, 1
      %p136 = por %p134, %p135
      %p137 = scmp.ne.s32.totalorder %s126, %s127
      %p138 = scmp.eq.s32.totalorder %s17, 0
      %p139 = por %p137, %p138
      %p140 = scmp.ne.s32.totalorder %s126, %s127
      %p141 = scmp.eq.s32.totalorder %s18, 1
      %p142 = por %p140, %p141
      %p144 = scmp.ne.s32.totalorder %s127, %s143
      %p145 = scmp.eq.s32.totalorder %s18, 0
      %p146 = por %p144, %p145
      %p147 = scmp.le.s32.totalorder 1, %s12
      %p148 = scmp.lt.s32.totalorder %s12, 3
      %p149 = pnand %p147, %p148
      %p150 = pneg %p149
      // Predicated region
      $region9: #{tpu_custom_call.1} parent=5 // pred_check
        _
      $region10: #{tpu_custom_call.1} parent=5 // pred_check_branch
        %152 = sbr.rel (%p149) target = $region12
      $region11: #{tpu_custom_call.1} parent=5 // pred_region
        %s153 = ssub.s32 %s12, 1
        // Predicated region
        $region13: #{tpu_custom_call.1} parent=11 // pred_check
          %p154 = pneg %p83
        $region14: #{tpu_custom_call.1} parent=11 // pred_check_branch
          %156 = sbr.rel (%p154) target = $region16
        $region15: #{tpu_custom_call.1} parent=11 // pred_region
          %p157 = scmp.lt.s32.totalorder %s22, 0
          %s158 = scalar_select %p157, %s22, 0
          %s159 = smul.addr %s158, 2
          %s160 = scalar_lea.vmem %s1, %s159
        $region16: #{tpu_custom_call.1} parent=11 // pred_fallthru
          _
        // Predicated region
        $region17: #{tpu_custom_call.1} parent=11 // pred_check
          %p161 = pneg %p109
        $region18: #{tpu_custom_call.1} parent=11 // pred_check_branch
          %163 = sbr.rel (%p161) target = $region20
        $region19: #{tpu_custom_call.1} parent=11 // pred_region
          %p164 = scmp.lt.s32.totalorder %s22, 0
          %s165 = scalar_select %p164, %s22, 0
          %s166 = scalar_lea.vmem %s2, %s165
        $region20: #{tpu_custom_call.1} parent=11 // pred_fallthru
          _
      $region12: #{tpu_custom_call.1} parent=5 // pred_fallthru
        _
      %p167 = scmp.lt.s32.totalorder %s12, 2
      // Predicated region
      $region21: #{tpu_custom_call.1} parent=5 // pred_check
        %p168 = pneg %p167
      $region22: #{tpu_custom_call.1} parent=5 // pred_check_branch
        %170 = sbr.rel (%p168) target = $region24
      $region23: #{tpu_custom_call.1} parent=5 // pred_region
        // Predicated region
        $region25: #{tpu_custom_call.1} parent=23 // pred_check
          %p171 = pneg %p51
        $region26: #{tpu_custom_call.1} parent=23 // pred_check_branch
          %173 = sbr.rel (%p171) target = $region28
        $region27: #{tpu_custom_call.1} parent=23 // pred_region
          %p174 = scmp.lt.s32.totalorder %s20, 1
          %s175 = scalar_select %p174, %s20, 1
          %s176 = smul.addr %s175, 128
          %s177 = smul.addr %s176, 4
          %s178 = scalar_lea.vmem %s0, %s177
        $region28: #{tpu_custom_call.1} parent=23 // pred_fallthru
          _
      $region24: #{tpu_custom_call.1} parent=5 // pred_fallthru
        _
      %p179 = scmp.le.s32.totalorder 1, %s12
      %p180 = scmp.lt.s32.totalorder %s12, 3
      %p181 = pnand %p179, %p180
      %p182 = pneg %p181
      // Predicated region
      $region29: #{tpu_custom_call.1} parent=5 // pred_check
        _
      $region30: #{tpu_custom_call.1} parent=5 // pred_check_branch
        %184 = sbr.rel (%p181) target = $region32
      $region31: #{tpu_custom_call.1} parent=5 // pred_region
        %s185 = ssub.s32 %s12, 1
        %p186 = scmp.lt.s32.totalorder %s23, 1
        %s187 = scalar_select %p186, %s23, 1
        %s188 = smul.addr %s187, 128
        %s189 = smul.addr %s188, 4
        %s190 = scalar_lea.vmem %s0, %s189
        %p191 = pneg %p57
        %p192 = pneg %p54
        %p193 = scmp.lt.s32.totalorder %s22, 0
        %s194 = scalar_select %p193, %s22, 0
        %s195 = smul.addr %s194, 2
        %s196 = scalar_lea.vmem %s1, %s195
        %p197 = pneg %p83
        %p198 = pneg %p80
        %p199 = scmp.lt.s32.totalorder %s22, 0
        %s200 = scalar_select %p199, %s22, 0
        %s201 = scalar_lea.vmem %s2, %s200
        %p202 = pneg %p109
        %p203 = pneg %p106
        %p204 = pneg %p139
        %p205 = pneg %p136
        %s206 = sand.u32 %s126, 1
        %s207 = scalar_lea.sflag [#allocation3], %s206
        %s208 = sand.u32 %s126, 1
        %s209 = smul.addr %s208, 512
        %s210 = scalar_lea.vmem [#allocation2], %s209
        %p211 = scmp.lt.s32.totalorder %s23, 1
        %s212 = scalar_select %p211, %s23, 1
        %s213 = smul.addr %s212, 128
        %s214 = smul.addr %s213, 4
        %s215 = scalar_lea.vmem %s0, %s214
        %p216 = scmp.lt.s32.totalorder %s22, 0
        %s217 = scalar_select %p216, %s22, 0
        %s218 = smul.addr %s217, 2
        %s219 = scalar_lea.vmem %s1, %s218
        %p220 = scmp.lt.s32.totalorder %s22, 0
        %s221 = scalar_select %p220, %s22, 0
        %s222 = scalar_lea.vmem %s2, %s221
        %s223 = smul.u32 32, %s24
        %s225 = smul.u32 %s24, 32
        %s226 = smul.u32 %s225, 4
        %s227 = smul.addr %s226, 4
        %s228 = scalar_lea.vmem %s215, %s227
        %v229 = vld [vmem:[%s228] sm:$0xf]
        %v230 = vld [vmem:[%s228 + $0x4] sm:$0xf]
        %v231 = vld [vmem:[%s228 + $0x8] sm:$0xf]
        %v232 = vld [vmem:[%s228 + $0xc] sm:$0xf]
        %v233 = vld [vmem:[%s228 + $0x10] sm:$0xf]
        %v234 = vld [vmem:[%s228 + $0x14] sm:$0xf]
        %v235 = vld [vmem:[%s228 + $0x18] sm:$0xf]
        %v236 = vld [vmem:[%s228 + $0x1c] sm:$0xf]
        %v237 = vld [vmem:[%s228 + $0x20] sm:$0xf]
        %v238 = vld [vmem:[%s228 + $0x24] sm:$0xf]
        %v239 = vld [vmem:[%s228 + $0x28] sm:$0xf]
        %v240 = vld [vmem:[%s228 + $0x2c] sm:$0xf]
        %v241 = vld [vmem:[%s228 + $0x30] sm:$0xf]
        %v242 = vld [vmem:[%s228 + $0x34] sm:$0xf]
        %v243 = vld [vmem:[%s228 + $0x38] sm:$0xf]
        %v244 = vld [vmem:[%s228 + $0x3c] sm:$0xf]
        %v245 = vld [vmem:[%s228 + $0x40] sm:$0xf]
        %v246 = vld [vmem:[%s228 + $0x44] sm:$0xf]
        %v247 = vld [vmem:[%s228 + $0x48] sm:$0xf]
        %v248 = vld [vmem:[%s228 + $0x4c] sm:$0xf]
        %v249 = vld [vmem:[%s228 + $0x50] sm:$0xf]
        %v250 = vld [vmem:[%s228 + $0x54] sm:$0xf]
        %v251 = vld [vmem:[%s228 + $0x58] sm:$0xf]
        %v252 = vld [vmem:[%s228 + $0x5c] sm:$0xf]
        %v253 = vld [vmem:[%s228 + $0x60] sm:$0xf]
        %v254 = vld [vmem:[%s228 + $0x64] sm:$0xf]
        %v255 = vld [vmem:[%s228 + $0x68] sm:$0xf]
        %v256 = vld [vmem:[%s228 + $0x6c] sm:$0xf]
        %v257 = vld [vmem:[%s228 + $0x70] sm:$0xf]
        %v258 = vld [vmem:[%s228 + $0x74] sm:$0xf]
        %v259 = vld [vmem:[%s228 + $0x78] sm:$0xf]
        %v260 = vld [vmem:[%s228 + $0x7c] sm:$0xf]
        %v261 = vld [vmem:[%s228 + $0x80] sm:$0xf]
        %v262 = vld [vmem:[%s228 + $0x84] sm:$0xf]
        %v263 = vld [vmem:[%s228 + $0x88] sm:$0xf]
        %v264 = vld [vmem:[%s228 + $0x8c] sm:$0xf]
        %v265 = vld [vmem:[%s228 + $0x90] sm:$0xf]
        %v266 = vld [vmem:[%s228 + $0x94] sm:$0xf]
        %v267 = vld [vmem:[%s228 + $0x98] sm:$0xf]
        %v268 = vld [vmem:[%s228 + $0x9c] sm:$0xf]
        %v269 = vld [vmem:[%s228 + $0xa0] sm:$0xf]
        %v270 = vld [vmem:[%s228 + $0xa4] sm:$0xf]
        %v271 = vld [vmem:[%s228 + $0xa8] sm:$0xf]
        %v272 = vld [vmem:[%s228 + $0xac] sm:$0xf]
        %v273 = vld [vmem:[%s228 + $0xb0] sm:$0xf]
        %v274 = vld [vmem:[%s228 + $0xb4] sm:$0xf]
        %v275 = vld [vmem:[%s228 + $0xb8] sm:$0xf]
        %v276 = vld [vmem:[%s228 + $0xbc] sm:$0xf]
        %v277 = vld [vmem:[%s228 + $0xc0] sm:$0xf]
        %v278 = vld [vmem:[%s228 + $0xc4] sm:$0xf]
        %v279 = vld [vmem:[%s228 + $0xc8] sm:$0xf]
        %v280 = vld [vmem:[%s228 + $0xcc] sm:$0xf]
        %v281 = vld [vmem:[%s228 + $0xd0] sm:$0xf]
        %v282 = vld [vmem:[%s228 + $0xd4] sm:$0xf]
        %v283 = vld [vmem:[%s228 + $0xd8] sm:$0xf]
        %v284 = vld [vmem:[%s228 + $0xdc] sm:$0xf]
        %v285 = vld [vmem:[%s228 + $0xe0] sm:$0xf]
        %v286 = vld [vmem:[%s228 + $0xe4] sm:$0xf]
        %v287 = vld [vmem:[%s228 + $0xe8] sm:$0xf]
        %v288 = vld [vmem:[%s228 + $0xec] sm:$0xf]
        %v289 = vld [vmem:[%s228 + $0xf0] sm:$0xf]
        %v290 = vld [vmem:[%s228 + $0xf4] sm:$0xf]
        %v291 = vld [vmem:[%s228 + $0xf8] sm:$0xf]
        %v292 = vld [vmem:[%s228 + $0xfc] sm:$0xf]
        %v293 = vld [vmem:[%s228 + $0x100] sm:$0xf]
        %v294 = vld [vmem:[%s228 + $0x104] sm:$0xf]
        %v295 = vld [vmem:[%s228 + $0x108] sm:$0xf]
        %v296 = vld [vmem:[%s228 + $0x10c] sm:$0xf]
        %v297 = vld [vmem:[%s228 + $0x110] sm:$0xf]
        %v298 = vld [vmem:[%s228 + $0x114] sm:$0xf]
        %v299 = vld [vmem:[%s228 + $0x118] sm:$0xf]
        %v300 = vld [vmem:[%s228 + $0x11c] sm:$0xf]
        %v301 = vld [vmem:[%s228 + $0x120] sm:$0xf]
        %v302 = vld [vmem:[%s228 + $0x124] sm:$0xf]
        %v303 = vld [vmem:[%s228 + $0x128] sm:$0xf]
        %v304 = vld [vmem:[%s228 + $0x12c] sm:$0xf]
        %v305 = vld [vmem:[%s228 + $0x130] sm:$0xf]
        %v306 = vld [vmem:[%s228 + $0x134] sm:$0xf]
        %v307 = vld [vmem:[%s228 + $0x138] sm:$0xf]
        %v308 = vld [vmem:[%s228 + $0x13c] sm:$0xf]
        %v309 = vld [vmem:[%s228 + $0x140] sm:$0xf]
        %v310 = vld [vmem:[%s228 + $0x144] sm:$0xf]
        %v311 = vld [vmem:[%s228 + $0x148] sm:$0xf]
        %v312 = vld [vmem:[%s228 + $0x14c] sm:$0xf]
        %v313 = vld [vmem:[%s228 + $0x150] sm:$0xf]
        %v314 = vld [vmem:[%s228 + $0x154] sm:$0xf]
        %v315 = vld [vmem:[%s228 + $0x158] sm:$0xf]
        %v316 = vld [vmem:[%s228 + $0x15c] sm:$0xf]
        %v317 = vld [vmem:[%s228 + $0x160] sm:$0xf]
        %v318 = vld [vmem:[%s228 + $0x164] sm:$0xf]
        %v319 = vld [vmem:[%s228 + $0x168] sm:$0xf]
        %v320 = vld [vmem:[%s228 + $0x16c] sm:$0xf]
        %v321 = vld [vmem:[%s228 + $0x170] sm:$0xf]
        %v322 = vld [vmem:[%s228 + $0x174] sm:$0xf]
        %v323 = vld [vmem:[%s228 + $0x178] sm:$0xf]
        %v324 = vld [vmem:[%s228 + $0x17c] sm:$0xf]
        %v325 = vld [vmem:[%s228 + $0x180] sm:$0xf]
        %v326 = vld [vmem:[%s228 + $0x184] sm:$0xf]
        %v327 = vld [vmem:[%s228 + $0x188] sm:$0xf]
        %v328 = vld [vmem:[%s228 + $0x18c] sm:$0xf]
        %v329 = vld [vmem:[%s228 + $0x190] sm:$0xf]
        %v330 = vld [vmem:[%s228 + $0x194] sm:$0xf]
        %v331 = vld [vmem:[%s228 + $0x198] sm:$0xf]
        %v332 = vld [vmem:[%s228 + $0x19c] sm:$0xf]
        %v333 = vld [vmem:[%s228 + $0x1a0] sm:$0xf]
        %v334 = vld [vmem:[%s228 + $0x1a4] sm:$0xf]
        %v335 = vld [vmem:[%s228 + $0x1a8] sm:$0xf]
        %v336 = vld [vmem:[%s228 + $0x1ac] sm:$0xf]
        %v337 = vld [vmem:[%s228 + $0x1b0] sm:$0xf]
        %v338 = vld [vmem:[%s228 + $0x1b4] sm:$0xf]
        %v339 = vld [vmem:[%s228 + $0x1b8] sm:$0xf]
        %v340 = vld [vmem:[%s228 + $0x1bc] sm:$0xf]
        %v341 = vld [vmem:[%s228 + $0x1c0] sm:$0xf]
        %v342 = vld [vmem:[%s228 + $0x1c4] sm:$0xf]
        %v343 = vld [vmem:[%s228 + $0x1c8] sm:$0xf]
        %v344 = vld [vmem:[%s228 + $0x1cc] sm:$0xf]
        %v345 = vld [vmem:[%s228 + $0x1d0] sm:$0xf]
        %v346 = vld [vmem:[%s228 + $0x1d4] sm:$0xf]
        %v347 = vld [vmem:[%s228 + $0x1d8] sm:$0xf]
        %v348 = vld [vmem:[%s228 + $0x1dc] sm:$0xf]
        %v349 = vld [vmem:[%s228 + $0x1e0] sm:$0xf]
        %v350 = vld [vmem:[%s228 + $0x1e4] sm:$0xf]
        %v351 = vld [vmem:[%s228 + $0x1e8] sm:$0xf]
        %v352 = vld [vmem:[%s228 + $0x1ec] sm:$0xf]
        %v353 = vld [vmem:[%s228 + $0x1f0] sm:$0xf]
        %v354 = vld [vmem:[%s228 + $0x1f4] sm:$0xf]
        %v355 = vld [vmem:[%s228 + $0x1f8] sm:$0xf]
        %v356 = vld [vmem:[%s228 + $0x1fc] sm:$0xf]
        %s357 = ssub.s32 %s225, 1
        %p358 = scmp.gt.s32.totalorder %s357, 0
        %s359 = scalar_select %p358, %s357, 0
        %s360 = smul.u32 %s359, 4
        %s361 = smul.addr %s360, 4
        %s362 = scalar_lea.vmem %s215, %s361
        %v363 = vld [vmem:[%s362] sm:$0xf]
        %v364 = vld [vmem:[%s362 + $0x4] sm:$0xf]
        %v365 = vld [vmem:[%s362 + $0x8] sm:$0xf]
        %v366 = vld [vmem:[%s362 + $0xc] sm:$0xf]
        %s367 = sadd.s32 %s225, 32
        %p368 = scmp.lt.s32.totalorder %s367, 31
        %s369 = scalar_select %p368, %s367, 31
        %s370 = smul.u32 %s369, 4
        %s371 = smul.addr %s370, 4
        %s372 = scalar_lea.vmem %s215, %s371
        %v373 = vld [vmem:[%s372] sm:$0xf]
        %v374 = vld [vmem:[%s372 + $0x4] sm:$0xf]
        %v375 = vld [vmem:[%s372 + $0x8] sm:$0xf]
        %v376 = vld [vmem:[%s372 + $0xc] sm:$0xf]
        %p377 = scmp.gt.s32.totalorder %s225, 0
        %s378 = scalar_select %p377, 1, 0
        %s379 = scvt.s32.f32 %s378
        %p381 = scmp.ne.f32.partialorder %s379, %s379
        %s382 = sshrl.u32 %s379, 16
        %s383 = sand.u32 %s382, 1
        %s384 = sadd.s32 32767, %s383
        %s385 = sadd.s32 %s379, %s384
        %s386 = sand.u32 %s385, 4294901760
        %s387 = scalar_select %p381, 2143289344, %s386
        %s389 = sshrl.u32 %s387, 16
        %s390 = sshll.u32 %s389, 16
        %s391 = sor.u32 %s389, %s390
        %v392 = vstv %s391
        %v394 = vunpack.c.l.bf16 %v363
        %v395 = vunpack.c.l.bf16 %v364
        %v396 = vunpack.c.l.bf16 %v365
        %v397 = vunpack.c.l.bf16 %v366
        %v398 = vunpack.c.l.bf16 %v392
        %v399 = vmul.f32 %v394, %v398
        %v400 = vmul.f32 %v395, %v398
        %v401 = vmul.f32 %v396, %v398
        %v402 = vmul.f32 %v397, %v398
        %v403 = vpack.c.bf16 %v399, %v399
        %v404 = vpack.c.bf16 %v400, %v400
        %v405 = vpack.c.bf16 %v401, %v401
        %v406 = vpack.c.bf16 %v402, %v402
        %p407 = scmp.lt.s32.totalorder %s367, 32
        %s408 = scalar_select %p407, 1, 0
        %s409 = scvt.s32.f32 %s408
        %p411 = scmp.ne.f32.partialorder %s409, %s409
        %s412 = sshrl.u32 %s409, 16
        %s413 = sand.u32 %s412, 1
        %s414 = sadd.s32 32767, %s413
        %s415 = sadd.s32 %s409, %s414
        %s416 = sand.u32 %s415, 4294901760
        %s417 = scalar_select %p411, 2143289344, %s416
        %s419 = sshrl.u32 %s417, 16
        %s420 = sshll.u32 %s419, 16
        %s421 = sor.u32 %s419, %s420
        %v422 = vstv %s421
        %v424 = vunpack.c.l.bf16 %v373
        %v425 = vunpack.c.l.bf16 %v374
        %v426 = vunpack.c.l.bf16 %v375
        %v427 = vunpack.c.l.bf16 %v376
        %v428 = vunpack.c.l.bf16 %v422
        %v429 = vmul.f32 %v424, %v428
        %v430 = vmul.f32 %v425, %v428
        %v431 = vmul.f32 %v426, %v428
        %v432 = vmul.f32 %v427, %v428
        %v433 = vpack.c.bf16 %v429, %v429
        %v434 = vpack.c.bf16 %v430, %v430
        %v435 = vpack.c.bf16 %v431, %v431
        %v436 = vpack.c.bf16 %v432, %v432
        %v573 = vunpack.c.l.b16 %v403
        %v574 = vunpack.c.l.b16 %v404
        %v575 = vunpack.c.l.b16 %v405
        %v576 = vunpack.c.l.b16 %v406
        %v577 = vunpack.c.l.b16 %v229
        %v578 = vunpack.c.l.b16 %v230
        %v579 = vunpack.c.l.b16 %v231
        %v580 = vunpack.c.l.b16 %v232
        %v581 = vunpack.c.l.b16 %v233
        %v582 = vunpack.c.l.b16 %v234
        %v583 = vunpack.c.l.b16 %v235
        %v584 = vunpack.c.l.b16 %v236
        %v585 = vunpack.c.l.b16 %v237
        %v586 = vunpack.c.l.b16 %v238
        %v587 = vunpack.c.l.b16 %v239
        %v588 = vunpack.c.l.b16 %v240
        %v589 = vunpack.c.l.b16 %v241
        %v590 = vunpack.c.l.b16 %v242
        %v591 = vunpack.c.l.b16 %v243
        %v592 = vunpack.c.l.b16 %v244
        %v593 = vunpack.c.l.b16 %v245
        %v594 = vunpack.c.l.b16 %v246
        %v595 = vunpack.c.l.b16 %v247
        %v596 = vunpack.c.l.b16 %v248
        %v597 = vunpack.c.l.b16 %v249
        %v598 = vunpack.c.l.b16 %v250
        %v599 = vunpack.c.l.b16 %v251
        %v600 = vunpack.c.l.b16 %v252
        %v601 = vunpack.c.l.b16 %v253
        %v602 = vunpack.c.l.b16 %v254
        %v603 = vunpack.c.l.b16 %v255
        %v604 = vunpack.c.l.b16 %v256
        %v605 = vunpack.c.l.b16 %v257
        %v606 = vunpack.c.l.b16 %v258
        %v607 = vunpack.c.l.b16 %v259
        %v608 = vunpack.c.l.b16 %v260
        %v609 = vunpack.c.l.b16 %v261
        %v610 = vunpack.c.l.b16 %v262
        %v611 = vunpack.c.l.b16 %v263
        %v612 = vunpack.c.l.b16 %v264
        %v613 = vunpack.c.l.b16 %v265
        %v614 = vunpack.c.l.b16 %v266
        %v615 = vunpack.c.l.b16 %v267
        %v616 = vunpack.c.l.b16 %v268
        %v617 = vunpack.c.l.b16 %v269
        %v618 = vunpack.c.l.b16 %v270
        %v619 = vunpack.c.l.b16 %v271
        %v620 = vunpack.c.l.b16 %v272
        %v621 = vunpack.c.l.b16 %v273
        %v622 = vunpack.c.l.b16 %v274
        %v623 = vunpack.c.l.b16 %v275
        %v624 = vunpack.c.l.b16 %v276
        %v625 = vunpack.c.l.b16 %v277
        %v626 = vunpack.c.l.b16 %v278
        %v627 = vunpack.c.l.b16 %v279
        %v628 = vunpack.c.l.b16 %v280
        %v629 = vunpack.c.l.b16 %v281
        %v630 = vunpack.c.l.b16 %v282
        %v631 = vunpack.c.l.b16 %v283
        %v632 = vunpack.c.l.b16 %v284
        %v633 = vunpack.c.l.b16 %v285
        %v634 = vunpack.c.l.b16 %v286
        %v635 = vunpack.c.l.b16 %v287
        %v636 = vunpack.c.l.b16 %v288
        %v637 = vunpack.c.l.b16 %v289
        %v638 = vunpack.c.l.b16 %v290
        %v639 = vunpack.c.l.b16 %v291
        %v640 = vunpack.c.l.b16 %v292
        %v641 = vunpack.c.l.b16 %v293
        %v642 = vunpack.c.l.b16 %v294
        %v643 = vunpack.c.l.b16 %v295
        %v644 = vunpack.c.l.b16 %v296
        %v645 = vunpack.c.l.b16 %v297
        %v646 = vunpack.c.l.b16 %v298
        %v647 = vunpack.c.l.b16 %v299
        %v648 = vunpack.c.l.b16 %v300
        %v649 = vunpack.c.l.b16 %v301
        %v650 = vunpack.c.l.b16 %v302
        %v651 = vunpack.c.l.b16 %v303
        %v652 = vunpack.c.l.b16 %v304
        %v653 = vunpack.c.l.b16 %v305
        %v654 = vunpack.c.l.b16 %v306
        %v655 = vunpack.c.l.b16 %v307
        %v656 = vunpack.c.l.b16 %v308
        %v657 = vunpack.c.l.b16 %v309
        %v658 = vunpack.c.l.b16 %v310
        %v659 = vunpack.c.l.b16 %v311
        %v660 = vunpack.c.l.b16 %v312
        %v661 = vunpack.c.l.b16 %v313
        %v662 = vunpack.c.l.b16 %v314
        %v663 = vunpack.c.l.b16 %v315
        %v664 = vunpack.c.l.b16 %v316
        %v665 = vunpack.c.l.b16 %v317
        %v666 = vunpack.c.l.b16 %v318
        %v667 = vunpack.c.l.b16 %v319
        %v668 = vunpack.c.l.b16 %v320
        %v669 = vunpack.c.l.b16 %v321
        %v670 = vunpack.c.l.b16 %v322
        %v671 = vunpack.c.l.b16 %v323
        %v672 = vunpack.c.l.b16 %v324
        %v673 = vunpack.c.l.b16 %v325
        %v674 = vunpack.c.l.b16 %v326
        %v675 = vunpack.c.l.b16 %v327
        %v676 = vunpack.c.l.b16 %v328
        %v677 = vunpack.c.l.b16 %v329
        %v678 = vunpack.c.l.b16 %v330
        %v679 = vunpack.c.l.b16 %v331
        %v680 = vunpack.c.l.b16 %v332
        %v681 = vunpack.c.l.b16 %v333
        %v682 = vunpack.c.l.b16 %v334
        %v683 = vunpack.c.l.b16 %v335
        %v684 = vunpack.c.l.b16 %v336
        %v685 = vunpack.c.l.b16 %v337
        %v686 = vunpack.c.l.b16 %v338
        %v687 = vunpack.c.l.b16 %v339
        %v688 = vunpack.c.l.b16 %v340
        %v689 = vunpack.c.l.b16 %v341
        %v690 = vunpack.c.l.b16 %v342
        %v691 = vunpack.c.l.b16 %v343
        %v692 = vunpack.c.l.b16 %v344
        %v693 = vunpack.c.l.b16 %v345
        %v694 = vunpack.c.l.b16 %v346
        %v695 = vunpack.c.l.b16 %v347
        %v696 = vunpack.c.l.b16 %v348
        %v697 = vunpack.c.l.b16 %v349
        %v698 = vunpack.c.l.b16 %v350
        %v699 = vunpack.c.l.b16 %v351
        %v700 = vunpack.c.l.b16 %v352
        %v701 = vunpack.c.l.b16 %v353
        %v702 = vunpack.c.l.b16 %v354
        %v703 = vunpack.c.l.b16 %v355
        %v704 = vunpack.c.l.b16 %v356
        %v705 = vunpack.c.l.b16 %v433
        %v706 = vunpack.c.l.b16 %v434
        %v707 = vunpack.c.l.b16 %v435
        %v708 = vunpack.c.l.b16 %v436
        %v709 = vpack.c.b16 %v574, %v573
        %v710 = vpack.c.b16 %v576, %v575
        %v711 = vpack.c.b16 %v578, %v577
        %v712 = vpack.c.b16 %v580, %v579
        %v713 = vpack.c.b16 %v582, %v581
        %v714 = vpack.c.b16 %v584, %v583
        %v715 = vpack.c.b16 %v586, %v585
        %v716 = vpack.c.b16 %v588, %v587
        %v717 = vpack.c.b16 %v590, %v589
        %v718 = vpack.c.b16 %v592, %v591
        %v719 = vpack.c.b16 %v594, %v593
        %v720 = vpack.c.b16 %v596, %v595
        %v721 = vpack.c.b16 %v598, %v597
        %v722 = vpack.c.b16 %v600, %v599
        %v723 = vpack.c.b16 %v602, %v601
        %v724 = vpack.c.b16 %v604, %v603
        %v725 = vpack.c.b16 %v606, %v605
        %v726 = vpack.c.b16 %v608, %v607
        %v727 = vpack.c.b16 %v610, %v609
        %v728 = vpack.c.b16 %v612, %v611
        %v729 = vpack.c.b16 %v614, %v613
        %v730 = vpack.c.b16 %v616, %v615
        %v731 = vpack.c.b16 %v618, %v617
        %v732 = vpack.c.b16 %v620, %v619
        %v733 = vpack.c.b16 %v622, %v621
        %v734 = vpack.c.b16 %v624, %v623
        %v735 = vpack.c.b16 %v626, %v625
        %v736 = vpack.c.b16 %v628, %v627
        %v737 = vpack.c.b16 %v630, %v629
        %v738 = vpack.c.b16 %v632, %v631
        %v739 = vpack.c.b16 %v634, %v633
        %v740 = vpack.c.b16 %v636, %v635
        %v741 = vpack.c.b16 %v638, %v637
        %v742 = vpack.c.b16 %v640, %v639
        %v743 = vpack.c.b16 %v642, %v641
        %v744 = vpack.c.b16 %v644, %v643
        %v745 = vpack.c.b16 %v646, %v645
        %v746 = vpack.c.b16 %v648, %v647
        %v747 = vpack.c.b16 %v650, %v649
        %v748 = vpack.c.b16 %v652, %v651
        %v749 = vpack.c.b16 %v654, %v653
        %v750 = vpack.c.b16 %v656, %v655
        %v751 = vpack.c.b16 %v658, %v657
        %v752 = vpack.c.b16 %v660, %v659
        %v753 = vpack.c.b16 %v662, %v661
        %v754 = vpack.c.b16 %v664, %v663
        %v755 = vpack.c.b16 %v666, %v665
        %v756 = vpack.c.b16 %v668, %v667
        %v757 = vpack.c.b16 %v670, %v669
        %v758 = vpack.c.b16 %v672, %v671
        %v759 = vpack.c.b16 %v674, %v673
        %v760 = vpack.c.b16 %v676, %v675
        %v761 = vpack.c.b16 %v678, %v677
        %v762 = vpack.c.b16 %v680, %v679
        %v763 = vpack.c.b16 %v682, %v681
        %v764 = vpack.c.b16 %v684, %v683
        %v765 = vpack.c.b16 %v686, %v685
        %v766 = vpack.c.b16 %v688, %v687
        %v767 = vpack.c.b16 %v690, %v689
        %v768 = vpack.c.b16 %v692, %v691
        %v769 = vpack.c.b16 %v694, %v693
        %v770 = vpack.c.b16 %v696, %v695
        %v771 = vpack.c.b16 %v698, %v697
        %v772 = vpack.c.b16 %v700, %v699
        %v773 = vpack.c.b16 %v702, %v701
        %v774 = vpack.c.b16 %v704, %v703
        %v775 = vpack.c.b16 %v706, %v705
        %v776 = vpack.c.b16 %v708, %v707
        %vm777 = vsmask.f32 256
        %v779 = vshrl.u32 %v709, 16
        %v781 = vrot.slane %v779, 7
        %v782 = vshll.u32 %v709, 16
        %v784 = vor.u32 %v781, %v782
        %v786 = vshrl.u32 %v710, 16
        %v788 = vrot.slane %v786, 7
        %v789 = vshll.u32 %v710, 16
        %v791 = vor.u32 %v788, %v789
        %v792 = vsel %vm777, %v781, %v791
        %v794 = vshrl.u32 %v711, 16
        %v796 = vrot.slane %v794, 7
        %v797 = vshll.u32 %v711, 16
        %v799 = vor.u32 %v796, %v797
        %v801 = vshrl.u32 %v712, 16
        %v803 = vrot.slane %v801, 7
        %v804 = vshll.u32 %v712, 16
        %v806 = vor.u32 %v803, %v804
        %v807 = vsel %vm777, %v796, %v806
        %v809 = vshrl.u32 %v713, 16
        %v811 = vrot.slane %v809, 7
        %v812 = vshll.u32 %v713, 16
        %v814 = vor.u32 %v811, %v812
        %v816 = vshrl.u32 %v714, 16
        %v818 = vrot.slane %v816, 7
        %v819 = vshll.u32 %v714, 16
        %v821 = vor.u32 %v818, %v819
        %v822 = vsel %vm777, %v811, %v821
        %v824 = vshrl.u32 %v715, 16
        %v826 = vrot.slane %v824, 7
        %v827 = vshll.u32 %v715, 16
        %v829 = vor.u32 %v826, %v827
        %v831 = vshrl.u32 %v716, 16
        %v833 = vrot.slane %v831, 7
        %v834 = vshll.u32 %v716, 16
        %v836 = vor.u32 %v833, %v834
        %v837 = vsel %vm777, %v826, %v836
        %v839 = vshrl.u32 %v717, 16
        %v841 = vrot.slane %v839, 7
        %v842 = vshll.u32 %v717, 16
        %v844 = vor.u32 %v841, %v842
        %v846 = vshrl.u32 %v718, 16
        %v848 = vrot.slane %v846, 7
        %v849 = vshll.u32 %v718, 16
        %v851 = vor.u32 %v848, %v849
        %v852 = vsel %vm777, %v841, %v851
        %v854 = vshrl.u32 %v719, 16
        %v856 = vrot.slane %v854, 7
        %v857 = vshll.u32 %v719, 16
        %v859 = vor.u32 %v856, %v857
        %v861 = vshrl.u32 %v720, 16
        %v863 = vrot.slane %v861, 7
        %v864 = vshll.u32 %v720, 16
        %v866 = vor.u32 %v863, %v864
        %v867 = vsel %vm777, %v856, %v866
        %v869 = vshrl.u32 %v721, 16
        %v871 = vrot.slane %v869, 7
        %v872 = vshll.u32 %v721, 16
        %v874 = vor.u32 %v871, %v872
        %v876 = vshrl.u32 %v722, 16
        %v878 = vrot.slane %v876, 7
        %v879 = vshll.u32 %v722, 16
        %v881 = vor.u32 %v878, %v879
        %v882 = vsel %vm777, %v871, %v881
        %v884 = vshrl.u32 %v723, 16
        %v886 = vrot.slane %v884, 7
        %v887 = vshll.u32 %v723, 16
        %v889 = vor.u32 %v886, %v887
        %v891 = vshrl.u32 %v724, 16
        %v893 = vrot.slane %v891, 7
        %v894 = vshll.u32 %v724, 16
        %v896 = vor.u32 %v893, %v894
        %v897 = vsel %vm777, %v886, %v896
        %v899 = vshrl.u32 %v725, 16
        %v901 = vrot.slane %v899, 7
        %v902 = vshll.u32 %v725, 16
        %v904 = vor.u32 %v901, %v902
        %v906 = vshrl.u32 %v726, 16
        %v908 = vrot.slane %v906, 7
        %v909 = vshll.u32 %v726, 16
        %v911 = vor.u32 %v908, %v909
        %v912 = vsel %vm777, %v901, %v911
        %v914 = vshrl.u32 %v727, 16
        %v916 = vrot.slane %v914, 7
        %v917 = vshll.u32 %v727, 16
        %v919 = vor.u32 %v916, %v917
        %v921 = vshrl.u32 %v728, 16
        %v923 = vrot.slane %v921, 7
        %v924 = vshll.u32 %v728, 16
        %v926 = vor.u32 %v923, %v924
        %v927 = vsel %vm777, %v916, %v926
        %v929 = vshrl.u32 %v729, 16
        %v931 = vrot.slane %v929, 7
        %v932 = vshll.u32 %v729, 16
        %v934 = vor.u32 %v931, %v932
        %v936 = vshrl.u32 %v730, 16
        %v938 = vrot.slane %v936, 7
        %v939 = vshll.u32 %v730, 16
        %v941 = vor.u32 %v938, %v939
        %v942 = vsel %vm777, %v931, %v941
        %v944 = vshrl.u32 %v731, 16
        %v946 = vrot.slane %v944, 7
        %v947 = vshll.u32 %v731, 16
        %v949 = vor.u32 %v946, %v947
        %v951 = vshrl.u32 %v732, 16
        %v953 = vrot.slane %v951, 7
        %v954 = vshll.u32 %v732, 16
        %v956 = vor.u32 %v953, %v954
        %v957 = vsel %vm777, %v946, %v956
        %v959 = vshrl.u32 %v733, 16
        %v961 = vrot.slane %v959, 7
        %v962 = vshll.u32 %v733, 16
        %v964 = vor.u32 %v961, %v962
        %v966 = vshrl.u32 %v734, 16
        %v968 = vrot.slane %v966, 7
        %v969 = vshll.u32 %v734, 16
        %v971 = vor.u32 %v968, %v969
        %v972 = vsel %vm777, %v961, %v971
        %v974 = vshrl.u32 %v735, 16
        %v976 = vrot.slane %v974, 7
        %v977 = vshll.u32 %v735, 16
        %v979 = vor.u32 %v976, %v977
        %v981 = vshrl.u32 %v736, 16
        %v983 = vrot.slane %v981, 7
        %v984 = vshll.u32 %v736, 16
        %v986 = vor.u32 %v983, %v984
        %v987 = vsel %vm777, %v976, %v986
        %v989 = vshrl.u32 %v737, 16
        %v991 = vrot.slane %v989, 7
        %v992 = vshll.u32 %v737, 16
        %v994 = vor.u32 %v991, %v992
        %v996 = vshrl.u32 %v738, 16
        %v998 = vrot.slane %v996, 7
        %v999 = vshll.u32 %v738, 16
        %v1001 = vor.u32 %v998, %v999
        %v1002 = vsel %vm777, %v991, %v1001
        %v1004 = vshrl.u32 %v739, 16
        %v1006 = vrot.slane %v1004, 7
        %v1007 = vshll.u32 %v739, 16
        %v1009 = vor.u32 %v1006, %v1007
        %v1011 = vshrl.u32 %v740, 16
        %v1013 = vrot.slane %v1011, 7
        %v1014 = vshll.u32 %v740, 16
        %v1016 = vor.u32 %v1013, %v1014
        %v1017 = vsel %vm777, %v1006, %v1016
        %v1019 = vshrl.u32 %v741, 16
        %v1021 = vrot.slane %v1019, 7
        %v1022 = vshll.u32 %v741, 16
        %v1024 = vor.u32 %v1021, %v1022
        %v1026 = vshrl.u32 %v742, 16
        %v1028 = vrot.slane %v1026, 7
        %v1029 = vshll.u32 %v742, 16
        %v1031 = vor.u32 %v1028, %v1029
        %v1032 = vsel %vm777, %v1021, %v1031
        %v1034 = vshrl.u32 %v743, 16
        %v1036 = vrot.slane %v1034, 7
        %v1037 = vshll.u32 %v743, 16
        %v1039 = vor.u32 %v1036, %v1037
        %v1041 = vshrl.u32 %v744, 16
        %v1043 = vrot.slane %v1041, 7
        %v1044 = vshll.u32 %v744, 16
        %v1046 = vor.u32 %v1043, %v1044
        %v1047 = vsel %vm777, %v1036, %v1046
        %v1049 = vshrl.u32 %v745, 16
        %v1051 = vrot.slane %v1049, 7
        %v1052 = vshll.u32 %v745, 16
        %v1054 = vor.u32 %v1051, %v1052
        %v1056 = vshrl.u32 %v746, 16
        %v1058 = vrot.slane %v1056, 7
        %v1059 = vshll.u32 %v746, 16
        %v1061 = vor.u32 %v1058, %v1059
        %v1062 = vsel %vm777, %v1051, %v1061
        %v1064 = vshrl.u32 %v747, 16
        %v1066 = vrot.slane %v1064, 7
        %v1067 = vshll.u32 %v747, 16
        %v1069 = vor.u32 %v1066, %v1067
        %v1071 = vshrl.u32 %v748, 16
        %v1073 = vrot.slane %v1071, 7
        %v1074 = vshll.u32 %v748, 16
        %v1076 = vor.u32 %v1073, %v1074
        %v1077 = vsel %vm777, %v1066, %v1076
        %v1079 = vshrl.u32 %v749, 16
        %v1081 = vrot.slane %v1079, 7
        %v1082 = vshll.u32 %v749, 16
        %v1084 = vor.u32 %v1081, %v1082
        %v1086 = vshrl.u32 %v750, 16
        %v1088 = vrot.slane %v1086, 7
        %v1089 = vshll.u32 %v750, 16
        %v1091 = vor.u32 %v1088, %v1089
        %v1092 = vsel %vm777, %v1081, %v1091
        %v1094 = vshrl.u32 %v751, 16
        %v1096 = vrot.slane %v1094, 7
        %v1097 = vshll.u32 %v751, 16
        %v1099 = vor.u32 %v1096, %v1097
        %v1101 = vshrl.u32 %v752, 16
        %v1103 = vrot.slane %v1101, 7
        %v1104 = vshll.u32 %v752, 16
        %v1106 = vor.u32 %v1103, %v1104
        %v1107 = vsel %vm777, %v1096, %v1106
        %v1109 = vshrl.u32 %v753, 16
        %v1111 = vrot.slane %v1109, 7
        %v1112 = vshll.u32 %v753, 16
        %v1114 = vor.u32 %v1111, %v1112
        %v1116 = vshrl.u32 %v754, 16
        %v1118 = vrot.slane %v1116, 7
        %v1119 = vshll.u32 %v754, 16
        %v1121 = vor.u32 %v1118, %v1119
        %v1122 = vsel %vm777, %v1111, %v1121
        %v1124 = vshrl.u32 %v755, 16
        %v1126 = vrot.slane %v1124, 7
        %v1127 = vshll.u32 %v755, 16
        %v1129 = vor.u32 %v1126, %v1127
        %v1131 = vshrl.u32 %v756, 16
        %v1133 = vrot.slane %v1131, 7
        %v1134 = vshll.u32 %v756, 16
        %v1136 = vor.u32 %v1133, %v1134
        %v1137 = vsel %vm777, %v1126, %v1136
        %v1139 = vshrl.u32 %v757, 16
        %v1141 = vrot.slane %v1139, 7
        %v1142 = vshll.u32 %v757, 16
        %v1144 = vor.u32 %v1141, %v1142
        %v1146 = vshrl.u32 %v758, 16
        %v1148 = vrot.slane %v1146, 7
        %v1149 = vshll.u32 %v758, 16
        %v1151 = vor.u32 %v1148, %v1149
        %v1152 = vsel %vm777, %v1141, %v1151
        %v1154 = vshrl.u32 %v759, 16
        %v1156 = vrot.slane %v1154, 7
        %v1157 = vshll.u32 %v759, 16
        %v1159 = vor.u32 %v1156, %v1157
        %v1161 = vshrl.u32 %v760, 16
        %v1163 = vrot.slane %v1161, 7
        %v1164 = vshll.u32 %v760, 16
        %v1166 = vor.u32 %v1163, %v1164
        %v1167 = vsel %vm777, %v1156, %v1166
        %v1169 = vshrl.u32 %v761, 16
        %v1171 = vrot.slane %v1169, 7
        %v1172 = vshll.u32 %v761, 16
        %v1174 = vor.u32 %v1171, %v1172
        %v1176 = vshrl.u32 %v762, 16
        %v1178 = vrot.slane %v1176, 7
        %v1179 = vshll.u32 %v762, 16
        %v1181 = vor.u32 %v1178, %v1179
        %v1182 = vsel %vm777, %v1171, %v1181
        %v1184 = vshrl.u32 %v763, 16
        %v1186 = vrot.slane %v1184, 7
        %v1187 = vshll.u32 %v763, 16
        %v1189 = vor.u32 %v1186, %v1187
        %v1191 = vshrl.u32 %v764, 16
        %v1193 = vrot.slane %v1191, 7
        %v1194 = vshll.u32 %v764, 16
        %v1196 = vor.u32 %v1193, %v1194
        %v1197 = vsel %vm777, %v1186, %v1196
        %v1199 = vshrl.u32 %v765, 16
        %v1201 = vrot.slane %v1199, 7
        %v1202 = vshll.u32 %v765, 16
        %v1204 = vor.u32 %v1201, %v1202
        %v1206 = vshrl.u32 %v766, 16
        %v1208 = vrot.slane %v1206, 7
        %v1209 = vshll.u32 %v766, 16
        %v1211 = vor.u32 %v1208, %v1209
        %v1212 = vsel %vm777, %v1201, %v1211
        %v1214 = vshrl.u32 %v767, 16
        %v1216 = vrot.slane %v1214, 7
        %v1217 = vshll.u32 %v767, 16
        %v1219 = vor.u32 %v1216, %v1217
        %v1221 = vshrl.u32 %v768, 16
        %v1223 = vrot.slane %v1221, 7
        %v1224 = vshll.u32 %v768, 16
        %v1226 = vor.u32 %v1223, %v1224
        %v1227 = vsel %vm777, %v1216, %v1226
        %v1229 = vshrl.u32 %v769, 16
        %v1231 = vrot.slane %v1229, 7
        %v1232 = vshll.u32 %v769, 16
        %v1234 = vor.u32 %v1231, %v1232
        %v1236 = vshrl.u32 %v770, 16
        %v1238 = vrot.slane %v1236, 7
        %v1239 = vshll.u32 %v770, 16
        %v1241 = vor.u32 %v1238, %v1239
        %v1242 = vsel %vm777, %v1231, %v1241
        %v1244 = vshrl.u32 %v771, 16
        %v1246 = vrot.slane %v1244, 7
        %v1247 = vshll.u32 %v771, 16
        %v1249 = vor.u32 %v1246, %v1247
        %v1251 = vshrl.u32 %v772, 16
        %v1253 = vrot.slane %v1251, 7
        %v1254 = vshll.u32 %v772, 16
        %v1256 = vor.u32 %v1253, %v1254
        %v1257 = vsel %vm777, %v1246, %v1256
        %v1259 = vshrl.u32 %v773, 16
        %v1261 = vrot.slane %v1259, 7
        %v1262 = vshll.u32 %v773, 16
        %v1264 = vor.u32 %v1261, %v1262
        %v1266 = vshrl.u32 %v774, 16
        %v1268 = vrot.slane %v1266, 7
        %v1269 = vshll.u32 %v774, 16
        %v1271 = vor.u32 %v1268, %v1269
        %v1272 = vsel %vm777, %v1261, %v1271
        %v1274 = vshrl.u32 %v775, 16
        %v1276 = vrot.slane %v1274, 7
        %v1277 = vshll.u32 %v775, 16
        %v1279 = vor.u32 %v1276, %v1277
        %v1281 = vshrl.u32 %v776, 16
        %v1283 = vrot.slane %v1281, 7
        %v1284 = vshll.u32 %v776, 16
        %v1286 = vor.u32 %v1283, %v1284
        %v1287 = vsel %vm777, %v1276, %v1286
        %vm1322 = vcmask 1040384
        %vm1323 = vmand %vm1322, %vm777
        %v1324 = vsel %vm1323, 0, %v784
        %v1325 = vsel %vm1323, 0, %v799
        %v1326 = vsel %vm1323, 0, %v814
        %v1327 = vsel %vm1323, 0, %v829
        %v1328 = vsel %vm1323, 0, %v844
        %v1329 = vsel %vm1323, 0, %v859
        %v1330 = vsel %vm1323, 0, %v874
        %v1331 = vsel %vm1323, 0, %v889
        %v1332 = vsel %vm1323, 0, %v904
        %v1333 = vsel %vm1323, 0, %v919
        %v1334 = vsel %vm1323, 0, %v934
        %v1335 = vsel %vm1323, 0, %v949
        %v1336 = vsel %vm1323, 0, %v964
        %v1337 = vsel %vm1323, 0, %v979
        %v1338 = vsel %vm1323, 0, %v994
        %v1339 = vsel %vm1323, 0, %v1009
        %v1340 = vsel %vm1323, 0, %v1024
        %v1341 = vsel %vm1323, 0, %v1039
        %v1342 = vsel %vm1323, 0, %v1054
        %v1343 = vsel %vm1323, 0, %v1069
        %v1344 = vsel %vm1323, 0, %v1084
        %v1345 = vsel %vm1323, 0, %v1099
        %v1346 = vsel %vm1323, 0, %v1114
        %v1347 = vsel %vm1323, 0, %v1129
        %v1348 = vsel %vm1323, 0, %v1144
        %v1349 = vsel %vm1323, 0, %v1159
        %v1350 = vsel %vm1323, 0, %v1174
        %v1351 = vsel %vm1323, 0, %v1189
        %v1352 = vsel %vm1323, 0, %v1204
        %v1353 = vsel %vm1323, 0, %v1219
        %v1354 = vsel %vm1323, 0, %v1234
        %v1355 = vsel %vm1323, 0, %v1249
        %v1356 = vsel %vm1323, 0, %v1264
        %v1357 = vsel %vm1323, 0, %v1279
        %vm1358 = vsmask.f32 7424
        %v1359 = vrot.slane %v782, 1
        %v1360 = vor.u32 %v779, %v1359
        %v1361 = vrot.slane %v789, 1
        %v1362 = vsel %vm1358, %v1360, %v1361
        %v1363 = vor.u32 %v786, %v1361
        %v1364 = vrot.slane %v797, 1
        %v1365 = vor.u32 %v794, %v1364
        %v1366 = vrot.slane %v804, 1
        %v1367 = vsel %vm1358, %v1365, %v1366
        %v1368 = vor.u32 %v801, %v1366
        %v1369 = vrot.slane %v812, 1
        %v1370 = vor.u32 %v809, %v1369
        %v1371 = vrot.slane %v819, 1
        %v1372 = vsel %vm1358, %v1370, %v1371
        %v1373 = vor.u32 %v816, %v1371
        %v1374 = vrot.slane %v827, 1
        %v1375 = vor.u32 %v824, %v1374
        %v1376 = vrot.slane %v834, 1
        %v1377 = vsel %vm1358, %v1375, %v1376
        %v1378 = vor.u32 %v831, %v1376
        %v1379 = vrot.slane %v842, 1
        %v1380 = vor.u32 %v839, %v1379
        %v1381 = vrot.slane %v849, 1
        %v1382 = vsel %vm1358, %v1380, %v1381
        %v1383 = vor.u32 %v846, %v1381
        %v1384 = vrot.slane %v857, 1
        %v1385 = vor.u32 %v854, %v1384
        %v1386 = vrot.slane %v864, 1
        %v1387 = vsel %vm1358, %v1385, %v1386
        %v1388 = vor.u32 %v861, %v1386
        %v1389 = vrot.slane %v872, 1
        %v1390 = vor.u32 %v869, %v1389
        %v1391 = vrot.slane %v879, 1
        %v1392 = vsel %vm1358, %v1390, %v1391
        %v1393 = vor.u32 %v876, %v1391
        %v1394 = vrot.slane %v887, 1
        %v1395 = vor.u32 %v884, %v1394
        %v1396 = vrot.slane %v894, 1
        %v1397 = vsel %vm1358, %v1395, %v1396
        %v1398 = vor.u32 %v891, %v1396
        %v1399 = vrot.slane %v902, 1
        %v1400 = vor.u32 %v899, %v1399
        %v1401 = vrot.slane %v909, 1
        %v1402 = vsel %vm1358, %v1400, %v1401
        %v1403 = vor.u32 %v906, %v1401
        %v1404 = vrot.slane %v917, 1
        %v1405 = vor.u32 %v914, %v1404
        %v1406 = vrot.slane %v924, 1
        %v1407 = vsel %vm1358, %v1405, %v1406
        %v1408 = vor.u32 %v921, %v1406
        %v1409 = vrot.slane %v932, 1
        %v1410 = vor.u32 %v929, %v1409
        %v1411 = vrot.slane %v939, 1
        %v1412 = vsel %vm1358, %v1410, %v1411
        %v1413 = vor.u32 %v936, %v1411
        %v1414 = vrot.slane %v947, 1
        %v1415 = vor.u32 %v944, %v1414
        %v1416 = vrot.slane %v954, 1
        %v1417 = vsel %vm1358, %v1415, %v1416
        %v1418 = vor.u32 %v951, %v1416
        %v1419 = vrot.slane %v962, 1
        %v1420 = vor.u32 %v959, %v1419
        %v1421 = vrot.slane %v969, 1
        %v1422 = vsel %vm1358, %v1420, %v1421
        %v1423 = vor.u32 %v966, %v1421
        %v1424 = vrot.slane %v977, 1
        %v1425 = vor.u32 %v974, %v1424
        %v1426 = vrot.slane %v984, 1
        %v1427 = vsel %vm1358, %v1425, %v1426
        %v1428 = vor.u32 %v981, %v1426
        %v1429 = vrot.slane %v992, 1
        %v1430 = vor.u32 %v989, %v1429
        %v1431 = vrot.slane %v999, 1
        %v1432 = vsel %vm1358, %v1430, %v1431
        %v1433 = vor.u32 %v996, %v1431
        %v1434 = vrot.slane %v1007, 1
        %v1435 = vor.u32 %v1004, %v1434
        %v1436 = vrot.slane %v1014, 1
        %v1437 = vsel %vm1358, %v1435, %v1436
        %v1438 = vor.u32 %v1011, %v1436
        %v1439 = vrot.slane %v1022, 1
        %v1440 = vor.u32 %v1019, %v1439
        %v1441 = vrot.slane %v1029, 1
        %v1442 = vsel %vm1358, %v1440, %v1441
        %v1443 = vor.u32 %v1026, %v1441
        %v1444 = vrot.slane %v1037, 1
        %v1445 = vor.u32 %v1034, %v1444
        %v1446 = vrot.slane %v1044, 1
        %v1447 = vsel %vm1358, %v1445, %v1446
        %v1448 = vor.u32 %v1041, %v1446
        %v1449 = vrot.slane %v1052, 1
        %v1450 = vor.u32 %v1049, %v1449
        %v1451 = vrot.slane %v1059, 1
        %v1452 = vsel %vm1358, %v1450, %v1451
        %v1453 = vor.u32 %v1056, %v1451
        %v1454 = vrot.slane %v1067, 1
        %v1455 = vor.u32 %v1064, %v1454
        %v1456 = vrot.slane %v1074, 1
        %v1457 = vsel %vm1358, %v1455, %v1456
        %v1458 = vor.u32 %v1071, %v1456
        %v1459 = vrot.slane %v1082, 1
        %v1460 = vor.u32 %v1079, %v1459
        %v1461 = vrot.slane %v1089, 1
        %v1462 = vsel %vm1358, %v1460, %v1461
        %v1463 = vor.u32 %v1086, %v1461
        %v1464 = vrot.slane %v1097, 1
        %v1465 = vor.u32 %v1094, %v1464
        %v1466 = vrot.slane %v1104, 1
        %v1467 = vsel %vm1358, %v1465, %v1466
        %v1468 = vor.u32 %v1101, %v1466
        %v1469 = vrot.slane %v1112, 1
        %v1470 = vor.u32 %v1109, %v1469
        %v1471 = vrot.slane %v1119, 1
        %v1472 = vsel %vm1358, %v1470, %v1471
        %v1473 = vor.u32 %v1116, %v1471
        %v1474 = vrot.slane %v1127, 1
        %v1475 = vor.u32 %v1124, %v1474
        %v1476 = vrot.slane %v1134, 1
        %v1477 = vsel %vm1358, %v1475, %v1476
        %v1478 = vor.u32 %v1131, %v1476
        %v1479 = vrot.slane %v1142, 1
        %v1480 = vor.u32 %v1139, %v1479
        %v1481 = vrot.slane %v1149, 1
        %v1482 = vsel %vm1358, %v1480, %v1481
        %v1483 = vor.u32 %v1146, %v1481
        %v1484 = vrot.slane %v1157, 1
        %v1485 = vor.u32 %v1154, %v1484
        %v1486 = vrot.slane %v1164, 1
        %v1487 = vsel %vm1358, %v1485, %v1486
        %v1488 = vor.u32 %v1161, %v1486
        %v1489 = vrot.slane %v1172, 1
        %v1490 = vor.u32 %v1169, %v1489
        %v1491 = vrot.slane %v1179, 1
        %v1492 = vsel %vm1358, %v1490, %v1491
        %v1493 = vor.u32 %v1176, %v1491
        %v1494 = vrot.slane %v1187, 1
        %v1495 = vor.u32 %v1184, %v1494
        %v1496 = vrot.slane %v1194, 1
        %v1497 = vsel %vm1358, %v1495, %v1496
        %v1498 = vor.u32 %v1191, %v1496
        %v1499 = vrot.slane %v1202, 1
        %v1500 = vor.u32 %v1199, %v1499
        %v1501 = vrot.slane %v1209, 1
        %v1502 = vsel %vm1358, %v1500, %v1501
        %v1503 = vor.u32 %v1206, %v1501
        %v1504 = vrot.slane %v1217, 1
        %v1505 = vor.u32 %v1214, %v1504
        %v1506 = vrot.slane %v1224, 1
        %v1507 = vsel %vm1358, %v1505, %v1506
        %v1508 = vor.u32 %v1221, %v1506
        %v1509 = vrot.slane %v1232, 1
        %v1510 = vor.u32 %v1229, %v1509
        %v1511 = vrot.slane %v1239, 1
        %v1512 = vsel %vm1358, %v1510, %v1511
        %v1513 = vor.u32 %v1236, %v1511
        %v1514 = vrot.slane %v1247, 1
        %v1515 = vor.u32 %v1244, %v1514
        %v1516 = vrot.slane %v1254, 1
        %v1517 = vsel %vm1358, %v1515, %v1516
        %v1518 = vor.u32 %v1251, %v1516
        %v1519 = vrot.slane %v1262, 1
        %v1520 = vor.u32 %v1259, %v1519
        %v1521 = vrot.slane %v1269, 1
        %v1522 = vsel %vm1358, %v1520, %v1521
        %v1523 = vor.u32 %v1266, %v1521
        %v1524 = vrot.slane %v1277, 1
        %v1525 = vor.u32 %v1274, %v1524
        %v1526 = vrot.slane %v1284, 1
        %v1527 = vsel %vm1358, %v1525, %v1526
        %v1528 = vor.u32 %v1281, %v1526
        %vm1563 = vcmask 1047552
        %vm1564 = vmand %vm1563, %vm1358
        %v1565 = vsel %vm1564, %v1363, 0
        %v1566 = vsel %vm1564, %v1368, 0
        %v1567 = vsel %vm1564, %v1373, 0
        %v1568 = vsel %vm1564, %v1378, 0
        %v1569 = vsel %vm1564, %v1383, 0
        %v1570 = vsel %vm1564, %v1388, 0
        %v1571 = vsel %vm1564, %v1393, 0
        %v1572 = vsel %vm1564, %v1398, 0
        %v1573 = vsel %vm1564, %v1403, 0
        %v1574 = vsel %vm1564, %v1408, 0
        %v1575 = vsel %vm1564, %v1413, 0
        %v1576 = vsel %vm1564, %v1418, 0
        %v1577 = vsel %vm1564, %v1423, 0
        %v1578 = vsel %vm1564, %v1428, 0
        %v1579 = vsel %vm1564, %v1433, 0
        %v1580 = vsel %vm1564, %v1438, 0
        %v1581 = vsel %vm1564, %v1443, 0
        %v1582 = vsel %vm1564, %v1448, 0
        %v1583 = vsel %vm1564, %v1453, 0
        %v1584 = vsel %vm1564, %v1458, 0
        %v1585 = vsel %vm1564, %v1463, 0
        %v1586 = vsel %vm1564, %v1468, 0
        %v1587 = vsel %vm1564, %v1473, 0
        %v1588 = vsel %vm1564, %v1478, 0
        %v1589 = vsel %vm1564, %v1483, 0
        %v1590 = vsel %vm1564, %v1488, 0
        %v1591 = vsel %vm1564, %v1493, 0
        %v1592 = vsel %vm1564, %v1498, 0
        %v1593 = vsel %vm1564, %v1503, 0
        %v1594 = vsel %vm1564, %v1508, 0
        %v1595 = vsel %vm1564, %v1513, 0
        %v1596 = vsel %vm1564, %v1518, 0
        %v1597 = vsel %vm1564, %v1523, 0
        %v1598 = vsel %vm1564, %v1528, 0
        %v1599 = vld [vmem:[%s219] sm:$0x3]
        %s1600 = scalar_lea.vmem %s219, 6
        %v1601 = vld [vmem:[%s1600] sm:$0x3]
        %vm1602 = vcmask 23552
        %v1604 = vsel %vm1602, %v1325, 0
        %v1607 = vsel %vm1602, %v807, 0
        %v1610 = vsel %vm1602, %v1326, 0
        %v1613 = vsel %vm1602, %v822, 0
        %v1616 = vsel %vm1602, %v1327, 0
        %v1619 = vsel %vm1602, %v837, 0
        %v1622 = vsel %vm1602, %v1328, 0
        %v1625 = vsel %vm1602, %v852, 0
        %v1628 = vsel %vm1602, %v1329, 0
        %v1631 = vsel %vm1602, %v867, 0
        %v1634 = vsel %vm1602, %v1330, 0
        %v1637 = vsel %vm1602, %v882, 0
        %v1640 = vsel %vm1602, %v1331, 0
        %v1643 = vsel %vm1602, %v897, 0
        %v1646 = vsel %vm1602, %v1332, 0
        %v1649 = vsel %vm1602, %v912, 0
        %v1652 = vsel %vm1602, %v1333, 0
        %v1655 = vsel %vm1602, %v927, 0
        %v1658 = vsel %vm1602, %v1334, 0
        %v1661 = vsel %vm1602, %v942, 0
        %v1664 = vsel %vm1602, %v1335, 0
        %v1667 = vsel %vm1602, %v957, 0
        %v1670 = vsel %vm1602, %v1336, 0
        %v1673 = vsel %vm1602, %v972, 0
        %v1676 = vsel %vm1602, %v1337, 0
        %v1679 = vsel %vm1602, %v987, 0
        %v1682 = vsel %vm1602, %v1338, 0
        %v1685 = vsel %vm1602, %v1002, 0
        %v1688 = vsel %vm1602, %v1339, 0
        %v1691 = vsel %vm1602, %v1017, 0
        %v1694 = vsel %vm1602, %v1340, 0
        %v1697 = vsel %vm1602, %v1032, 0
        %v1700 = vsel %vm1602, %v1341, 0
        %v1703 = vsel %vm1602, %v1047, 0
        %v1706 = vsel %vm1602, %v1342, 0
        %v1709 = vsel %vm1602, %v1062, 0
        %v1712 = vsel %vm1602, %v1343, 0
        %v1715 = vsel %vm1602, %v1077, 0
        %v1718 = vsel %vm1602, %v1344, 0
        %v1721 = vsel %vm1602, %v1092, 0
        %v1724 = vsel %vm1602, %v1345, 0
        %v1727 = vsel %vm1602, %v1107, 0
        %v1730 = vsel %vm1602, %v1346, 0
        %v1733 = vsel %vm1602, %v1122, 0
        %v1736 = vsel %vm1602, %v1347, 0
        %v1739 = vsel %vm1602, %v1137, 0
        %v1742 = vsel %vm1602, %v1348, 0
        %v1745 = vsel %vm1602, %v1152, 0
        %v1748 = vsel %vm1602, %v1349, 0
        %v1751 = vsel %vm1602, %v1167, 0
        %v1754 = vsel %vm1602, %v1350, 0
        %v1757 = vsel %vm1602, %v1182, 0
        %v1760 = vsel %vm1602, %v1351, 0
        %v1763 = vsel %vm1602, %v1197, 0
        %v1766 = vsel %vm1602, %v1352, 0
        %v1769 = vsel %vm1602, %v1212, 0
        %v1772 = vsel %vm1602, %v1353, 0
        %v1775 = vsel %vm1602, %v1227, 0
        %v1778 = vsel %vm1602, %v1354, 0
        %v1781 = vsel %vm1602, %v1242, 0
        %v1784 = vsel %vm1602, %v1355, 0
        %v1787 = vsel %vm1602, %v1257, 0
        %v1790 = vsel %vm1602, %v1356, 0
        %v1793 = vsel %vm1602, %v1272, 0
        %vm1795 = vcmask 1040384
        %vm1796 = vcmask 1041408
        %v1797 = vsel %vm1795, 4294967295, 65535
        %v1798 = vsel %vm1796, %v1797, 0
        %v1800 = vand.u32 %v1601, %v1798
        %1802 = vmatpush.bf16.msra.mxu0 0
        %1803 = vmatpush.bf16.msra.mxu0 0
        %1804 = vmatpush.bf16.msra.mxu0 0
        %1805 = vmatpush.bf16.msra.mxu0 0
        %1806 = vmatpush.bf16.msra.mxu0 0
        %1807 = vmatpush.bf16.msra.mxu0 0
        %1808 = vmatpush.bf16.msra.mxu0 0
        %1809 = vmatpush.bf16.msra.mxu0 %v1800
        %1810 = vmatmul.bf16.gmra.mxu0 %v1604
        %v1811 = vpop.f32.mrf.mxu0
        %v1812 = vadd.f32 0.0, %v1811
        %v1813 = vpop.f32.mrf.mxu0
        %v1814 = vadd.f32 0.0, %v1813
        %1815 = vmatmul.bf16.gmra.mxu0 %v1607
        %v1816 = vpop.f32.mrf.mxu0
        %v1817 = vadd.f32 0.0, %v1816
        %v1818 = vpop.f32.mrf.mxu0
        %v1819 = vadd.f32 0.0, %v1818
        %1820 = vmatmul.bf16.gmra.mxu0 %v1610
        %v1821 = vpop.f32.mrf.mxu0
        %v1822 = vadd.f32 0.0, %v1821
        %v1823 = vpop.f32.mrf.mxu0
        %v1824 = vadd.f32 0.0, %v1823
        %1825 = vmatmul.bf16.gmra.mxu0 %v1613
        %v1826 = vpop.f32.mrf.mxu0
        %v1827 = vadd.f32 0.0, %v1826
        %v1828 = vpop.f32.mrf.mxu0
        %v1829 = vadd.f32 0.0, %v1828
        %1830 = vmatmul.bf16.gmra.mxu0 %v1616
        %v1831 = vpop.f32.mrf.mxu0
        %v1832 = vadd.f32 0.0, %v1831
        %v1833 = vpop.f32.mrf.mxu0
        %v1834 = vadd.f32 0.0, %v1833
        %1835 = vmatmul.bf16.gmra.mxu0 %v1619
        %v1836 = vpop.f32.mrf.mxu0
        %v1837 = vadd.f32 0.0, %v1836
        %v1838 = vpop.f32.mrf.mxu0
        %v1839 = vadd.f32 0.0, %v1838
        %1840 = vmatmul.bf16.gmra.mxu0 %v1622
        %v1841 = vpop.f32.mrf.mxu0
        %v1842 = vadd.f32 0.0, %v1841
        %v1843 = vpop.f32.mrf.mxu0
        %v1844 = vadd.f32 0.0, %v1843
        %1845 = vmatmul.bf16.gmra.mxu0 %v1625
        %v1846 = vpop.f32.mrf.mxu0
        %v1847 = vadd.f32 0.0, %v1846
        %v1848 = vpop.f32.mrf.mxu0
        %v1849 = vadd.f32 0.0, %v1848
        %1850 = vmatmul.bf16.gmra.mxu0 %v1628
        %v1851 = vpop.f32.mrf.mxu0
        %v1852 = vadd.f32 0.0, %v1851
        %v1853 = vpop.f32.mrf.mxu0
        %v1854 = vadd.f32 0.0, %v1853
        %1855 = vmatmul.bf16.gmra.mxu0 %v1631
        %v1856 = vpop.f32.mrf.mxu0
        %v1857 = vadd.f32 0.0, %v1856
        %v1858 = vpop.f32.mrf.mxu0
        %v1859 = vadd.f32 0.0, %v1858
        %1860 = vmatmul.bf16.gmra.mxu0 %v1634
        %v1861 = vpop.f32.mrf.mxu0
        %v1862 = vadd.f32 0.0, %v1861
        %v1863 = vpop.f32.mrf.mxu0
        %v1864 = vadd.f32 0.0, %v1863
        %1865 = vmatmul.bf16.gmra.mxu0 %v1637
        %v1866 = vpop.f32.mrf.mxu0
        %v1867 = vadd.f32 0.0, %v1866
        %v1868 = vpop.f32.mrf.mxu0
        %v1869 = vadd.f32 0.0, %v1868
        %1870 = vmatmul.bf16.gmra.mxu0 %v1640
        %v1871 = vpop.f32.mrf.mxu0
        %v1872 = vadd.f32 0.0, %v1871
        %v1873 = vpop.f32.mrf.mxu0
        %v1874 = vadd.f32 0.0, %v1873
        %1875 = vmatmul.bf16.gmra.mxu0 %v1643
        %v1876 = vpop.f32.mrf.mxu0
        %v1877 = vadd.f32 0.0, %v1876
        %v1878 = vpop.f32.mrf.mxu0
        %v1879 = vadd.f32 0.0, %v1878
        %1880 = vmatmul.bf16.gmra.mxu0 %v1646
        %v1881 = vpop.f32.mrf.mxu0
        %v1882 = vadd.f32 0.0, %v1881
        %v1883 = vpop.f32.mrf.mxu0
        %v1884 = vadd.f32 0.0, %v1883
        %1885 = vmatmul.bf16.gmra.mxu0 %v1649
        %v1886 = vpop.f32.mrf.mxu0
        %v1887 = vadd.f32 0.0, %v1886
        %v1888 = vpop.f32.mrf.mxu0
        %v1889 = vadd.f32 0.0, %v1888
        %1890 = vmatmul.bf16.gmra.mxu0 %v1652
        %v1891 = vpop.f32.mrf.mxu0
        %v1892 = vadd.f32 0.0, %v1891
        %v1893 = vpop.f32.mrf.mxu0
        %v1894 = vadd.f32 0.0, %v1893
        %1895 = vmatmul.bf16.gmra.mxu0 %v1655
        %v1896 = vpop.f32.mrf.mxu0
        %v1897 = vadd.f32 0.0, %v1896
        %v1898 = vpop.f32.mrf.mxu0
        %v1899 = vadd.f32 0.0, %v1898
        %1900 = vmatmul.bf16.gmra.mxu0 %v1658
        %v1901 = vpop.f32.mrf.mxu0
        %v1902 = vadd.f32 0.0, %v1901
        %v1903 = vpop.f32.mrf.mxu0
        %v1904 = vadd.f32 0.0, %v1903
        %1905 = vmatmul.bf16.gmra.mxu0 %v1661
        %v1906 = vpop.f32.mrf.mxu0
        %v1907 = vadd.f32 0.0, %v1906
        %v1908 = vpop.f32.mrf.mxu0
        %v1909 = vadd.f32 0.0, %v1908
        %1910 = vmatmul.bf16.gmra.mxu0 %v1664
        %v1911 = vpop.f32.mrf.mxu0
        %v1912 = vadd.f32 0.0, %v1911
        %v1913 = vpop.f32.mrf.mxu0
        %v1914 = vadd.f32 0.0, %v1913
        %1915 = vmatmul.bf16.gmra.mxu0 %v1667
        %v1916 = vpop.f32.mrf.mxu0
        %v1917 = vadd.f32 0.0, %v1916
        %v1918 = vpop.f32.mrf.mxu0
        %v1919 = vadd.f32 0.0, %v1918
        %1920 = vmatmul.bf16.gmra.mxu0 %v1670
        %v1921 = vpop.f32.mrf.mxu0
        %v1922 = vadd.f32 0.0, %v1921
        %v1923 = vpop.f32.mrf.mxu0
        %v1924 = vadd.f32 0.0, %v1923
        %1925 = vmatmul.bf16.gmra.mxu0 %v1673
        %v1926 = vpop.f32.mrf.mxu0
        %v1927 = vadd.f32 0.0, %v1926
        %v1928 = vpop.f32.mrf.mxu0
        %v1929 = vadd.f32 0.0, %v1928
        %1930 = vmatmul.bf16.gmra.mxu0 %v1676
        %v1931 = vpop.f32.mrf.mxu0
        %v1932 = vadd.f32 0.0, %v1931
        %v1933 = vpop.f32.mrf.mxu0
        %v1934 = vadd.f32 0.0, %v1933
        %1935 = vmatmul.bf16.gmra.mxu0 %v1679
        %v1936 = vpop.f32.mrf.mxu0
        %v1937 = vadd.f32 0.0, %v1936
        %v1938 = vpop.f32.mrf.mxu0
        %v1939 = vadd.f32 0.0, %v1938
        %1940 = vmatmul.bf16.gmra.mxu0 %v1682
        %v1941 = vpop.f32.mrf.mxu0
        %v1942 = vadd.f32 0.0, %v1941
        %v1943 = vpop.f32.mrf.mxu0
        %v1944 = vadd.f32 0.0, %v1943
        %1945 = vmatmul.bf16.gmra.mxu0 %v1685
        %v1946 = vpop.f32.mrf.mxu0
        %v1947 = vadd.f32 0.0, %v1946
        %v1948 = vpop.f32.mrf.mxu0
        %v1949 = vadd.f32 0.0, %v1948
        %1950 = vmatmul.bf16.gmra.mxu0 %v1688
        %v1951 = vpop.f32.mrf.mxu0
        %v1952 = vadd.f32 0.0, %v1951
        %v1953 = vpop.f32.mrf.mxu0
        %v1954 = vadd.f32 0.0, %v1953
        %1955 = vmatmul.bf16.gmra.mxu0 %v1691
        %v1956 = vpop.f32.mrf.mxu0
        %v1957 = vadd.f32 0.0, %v1956
        %v1958 = vpop.f32.mrf.mxu0
        %v1959 = vadd.f32 0.0, %v1958
        %1960 = vmatmul.bf16.gmra.mxu0 %v1694
        %v1961 = vpop.f32.mrf.mxu0
        %v1962 = vadd.f32 0.0, %v1961
        %v1963 = vpop.f32.mrf.mxu0
        %v1964 = vadd.f32 0.0, %v1963
        %1965 = vmatmul.bf16.gmra.mxu0 %v1697
        %v1966 = vpop.f32.mrf.mxu0
        %v1967 = vadd.f32 0.0, %v1966
        %v1968 = vpop.f32.mrf.mxu0
        %v1969 = vadd.f32 0.0, %v1968
        %1970 = vmatmul.bf16.gmra.mxu0 %v1700
        %v1971 = vpop.f32.mrf.mxu0
        %v1972 = vadd.f32 0.0, %v1971
        %v1973 = vpop.f32.mrf.mxu0
        %v1974 = vadd.f32 0.0, %v1973
        %1975 = vmatmul.bf16.gmra.mxu0 %v1703
        %v1976 = vpop.f32.mrf.mxu0
        %v1977 = vadd.f32 0.0, %v1976
        %v1978 = vpop.f32.mrf.mxu0
        %v1979 = vadd.f32 0.0, %v1978
        %1980 = vmatmul.bf16.gmra.mxu0 %v1706
        %v1981 = vpop.f32.mrf.mxu0
        %v1982 = vadd.f32 0.0, %v1981
        %v1983 = vpop.f32.mrf.mxu0
        %v1984 = vadd.f32 0.0, %v1983
        %1985 = vmatmul.bf16.gmra.mxu0 %v1709
        %v1986 = vpop.f32.mrf.mxu0
        %v1987 = vadd.f32 0.0, %v1986
        %v1988 = vpop.f32.mrf.mxu0
        %v1989 = vadd.f32 0.0, %v1988
        %1990 = vmatmul.bf16.gmra.mxu0 %v1712
        %v1991 = vpop.f32.mrf.mxu0
        %v1992 = vadd.f32 0.0, %v1991
        %v1993 = vpop.f32.mrf.mxu0
        %v1994 = vadd.f32 0.0, %v1993
        %1995 = vmatmul.bf16.gmra.mxu0 %v1715
        %v1996 = vpop.f32.mrf.mxu0
        %v1997 = vadd.f32 0.0, %v1996
        %v1998 = vpop.f32.mrf.mxu0
        %v1999 = vadd.f32 0.0, %v1998
        %2000 = vmatmul.bf16.gmra.mxu0 %v1718
        %v2001 = vpop.f32.mrf.mxu0
        %v2002 = vadd.f32 0.0, %v2001
        %v2003 = vpop.f32.mrf.mxu0
        %v2004 = vadd.f32 0.0, %v2003
        %2005 = vmatmul.bf16.gmra.mxu0 %v1721
        %v2006 = vpop.f32.mrf.mxu0
        %v2007 = vadd.f32 0.0, %v2006
        %v2008 = vpop.f32.mrf.mxu0
        %v2009 = vadd.f32 0.0, %v2008
        %2010 = vmatmul.bf16.gmra.mxu0 %v1724
        %v2011 = vpop.f32.mrf.mxu0
        %v2012 = vadd.f32 0.0, %v2011
        %v2013 = vpop.f32.mrf.mxu0
        %v2014 = vadd.f32 0.0, %v2013
        %2015 = vmatmul.bf16.gmra.mxu0 %v1727
        %v2016 = vpop.f32.mrf.mxu0
        %v2017 = vadd.f32 0.0, %v2016
        %v2018 = vpop.f32.mrf.mxu0
        %v2019 = vadd.f32 0.0, %v2018
        %2020 = vmatmul.bf16.gmra.mxu0 %v1730
        %v2021 = vpop.f32.mrf.mxu0
        %v2022 = vadd.f32 0.0, %v2021
        %v2023 = vpop.f32.mrf.mxu0
        %v2024 = vadd.f32 0.0, %v2023
        %2025 = vmatmul.bf16.gmra.mxu0 %v1733
        %v2026 = vpop.f32.mrf.mxu0
        %v2027 = vadd.f32 0.0, %v2026
        %v2028 = vpop.f32.mrf.mxu0
        %v2029 = vadd.f32 0.0, %v2028
        %2030 = vmatmul.bf16.gmra.mxu0 %v1736
        %v2031 = vpop.f32.mrf.mxu0
        %v2032 = vadd.f32 0.0, %v2031
        %v2033 = vpop.f32.mrf.mxu0
        %v2034 = vadd.f32 0.0, %v2033
        %2035 = vmatmul.bf16.gmra.mxu0 %v1739
        %v2036 = vpop.f32.mrf.mxu0
        %v2037 = vadd.f32 0.0, %v2036
        %v2038 = vpop.f32.mrf.mxu0
        %v2039 = vadd.f32 0.0, %v2038
        %2040 = vmatmul.bf16.gmra.mxu0 %v1742
        %v2041 = vpop.f32.mrf.mxu0
        %v2042 = vadd.f32 0.0, %v2041
        %v2043 = vpop.f32.mrf.mxu0
        %v2044 = vadd.f32 0.0, %v2043
        %2045 = vmatmul.bf16.gmra.mxu0 %v1745
        %v2046 = vpop.f32.mrf.mxu0
        %v2047 = vadd.f32 0.0, %v2046
        %v2048 = vpop.f32.mrf.mxu0
        %v2049 = vadd.f32 0.0, %v2048
        %2050 = vmatmul.bf16.gmra.mxu0 %v1748
        %v2051 = vpop.f32.mrf.mxu0
        %v2052 = vadd.f32 0.0, %v2051
        %v2053 = vpop.f32.mrf.mxu0
        %v2054 = vadd.f32 0.0, %v2053
        %2055 = vmatmul.bf16.gmra.mxu0 %v1751
        %v2056 = vpop.f32.mrf.mxu0
        %v2057 = vadd.f32 0.0, %v2056
        %v2058 = vpop.f32.mrf.mxu0
        %v2059 = vadd.f32 0.0, %v2058
        %2060 = vmatmul.bf16.gmra.mxu0 %v1754
        %v2061 = vpop.f32.mrf.mxu0
        %v2062 = vadd.f32 0.0, %v2061
        %v2063 = vpop.f32.mrf.mxu0
        %v2064 = vadd.f32 0.0, %v2063
        %2065 = vmatmul.bf16.gmra.mxu0 %v1757
        %v2066 = vpop.f32.mrf.mxu0
        %v2067 = vadd.f32 0.0, %v2066
        %v2068 = vpop.f32.mrf.mxu0
        %v2069 = vadd.f32 0.0, %v2068
        %2070 = vmatmul.bf16.gmra.mxu0 %v1760
        %v2071 = vpop.f32.mrf.mxu0
        %v2072 = vadd.f32 0.0, %v2071
        %v2073 = vpop.f32.mrf.mxu0
        %v2074 = vadd.f32 0.0, %v2073
        %2075 = vmatmul.bf16.gmra.mxu0 %v1763
        %v2076 = vpop.f32.mrf.mxu0
        %v2077 = vadd.f32 0.0, %v2076
        %v2078 = vpop.f32.mrf.mxu0
        %v2079 = vadd.f32 0.0, %v2078
        %2080 = vmatmul.bf16.gmra.mxu0 %v1766
        %v2081 = vpop.f32.mrf.mxu0
        %v2082 = vadd.f32 0.0, %v2081
        %v2083 = vpop.f32.mrf.mxu0
        %v2084 = vadd.f32 0.0, %v2083
        %2085 = vmatmul.bf16.gmra.mxu0 %v1769
        %v2086 = vpop.f32.mrf.mxu0
        %v2087 = vadd.f32 0.0, %v2086
        %v2088 = vpop.f32.mrf.mxu0
        %v2089 = vadd.f32 0.0, %v2088
        %2090 = vmatmul.bf16.gmra.mxu0 %v1772
        %v2091 = vpop.f32.mrf.mxu0
        %v2092 = vadd.f32 0.0, %v2091
        %v2093 = vpop.f32.mrf.mxu0
        %v2094 = vadd.f32 0.0, %v2093
        %2095 = vmatmul.bf16.gmra.mxu0 %v1775
        %v2096 = vpop.f32.mrf.mxu0
        %v2097 = vadd.f32 0.0, %v2096
        %v2098 = vpop.f32.mrf.mxu0
        %v2099 = vadd.f32 0.0, %v2098
        %2100 = vmatmul.bf16.gmra.mxu0 %v1778
        %v2101 = vpop.f32.mrf.mxu0
        %v2102 = vadd.f32 0.0, %v2101
        %v2103 = vpop.f32.mrf.mxu0
        %v2104 = vadd.f32 0.0, %v2103
        %2105 = vmatmul.bf16.gmra.mxu0 %v1781
        %v2106 = vpop.f32.mrf.mxu0
        %v2107 = vadd.f32 0.0, %v2106
        %v2108 = vpop.f32.mrf.mxu0
        %v2109 = vadd.f32 0.0, %v2108
        %2110 = vmatmul.bf16.gmra.mxu0 %v1784
        %v2111 = vpop.f32.mrf.mxu0
        %v2112 = vadd.f32 0.0, %v2111
        %v2113 = vpop.f32.mrf.mxu0
        %v2114 = vadd.f32 0.0, %v2113
        %2115 = vmatmul.bf16.gmra.mxu0 %v1787
        %v2116 = vpop.f32.mrf.mxu0
        %v2117 = vadd.f32 0.0, %v2116
        %v2118 = vpop.f32.mrf.mxu0
        %v2119 = vadd.f32 0.0, %v2118
        %2120 = vmatmul.bf16.gmra.mxu0 %v1790
        %v2121 = vpop.f32.mrf.mxu0
        %v2122 = vadd.f32 0.0, %v2121
        %v2123 = vpop.f32.mrf.mxu0
        %v2124 = vadd.f32 0.0, %v2123
        %2125 = vmatmul.bf16.gmra.mxu0 %v1793
        %v2126 = vpop.f32.mrf.mxu0
        %v2127 = vadd.f32 0.0, %v2126
        %v2128 = vpop.f32.mrf.mxu0
        %v2129 = vadd.f32 0.0, %v2128
        %2130 = vdwg.mxu0
        %v2132 = vsel %vm1602, %v1324, 0
        %v2135 = vsel %vm1602, %v792, 0
        %v2138 = vand.u32 %v1599, %v1798
        %2140 = vmatpush.bf16.msra.mxu0 0
        %2141 = vmatpush.bf16.msra.mxu0 0
        %2142 = vmatpush.bf16.msra.mxu0 0
        %2143 = vmatpush.bf16.msra.mxu0 0
        %2144 = vmatpush.bf16.msra.mxu0 0
        %2145 = vmatpush.bf16.msra.mxu0 0
        %2146 = vmatpush.bf16.msra.mxu0 0
        %2147 = vmatpush.bf16.msra.mxu0 %v2138
        %2148 = vmatmul.bf16.gmra.mxu0 %v2132
        %v2149 = vpop.f32.mrf.mxu0
        %v2150 = vadd.f32 %v1812, %v2149
        %v2151 = vpop.f32.mrf.mxu0
        %v2152 = vadd.f32 %v1814, %v2151
        %2153 = vmatmul.bf16.gmra.mxu0 %v2135
        %v2154 = vpop.f32.mrf.mxu0
        %v2155 = vadd.f32 %v1817, %v2154
        %v2156 = vpop.f32.mrf.mxu0
        %v2157 = vadd.f32 %v1819, %v2156
        %2158 = vmatmul.bf16.gmra.mxu0 %v1604
        %v2159 = vpop.f32.mrf.mxu0
        %v2160 = vadd.f32 %v1822, %v2159
        %v2161 = vpop.f32.mrf.mxu0
        %v2162 = vadd.f32 %v1824, %v2161
        %2163 = vmatmul.bf16.gmra.mxu0 %v1607
        %v2164 = vpop.f32.mrf.mxu0
        %v2165 = vadd.f32 %v1827, %v2164
        %v2166 = vpop.f32.mrf.mxu0
        %v2167 = vadd.f32 %v1829, %v2166
        %2168 = vmatmul.bf16.gmra.mxu0 %v1610
        %v2169 = vpop.f32.mrf.mxu0
        %v2170 = vadd.f32 %v1832, %v2169
        %v2171 = vpop.f32.mrf.mxu0
        %v2172 = vadd.f32 %v1834, %v2171
        %2173 = vmatmul.bf16.gmra.mxu0 %v1613
        %v2174 = vpop.f32.mrf.mxu0
        %v2175 = vadd.f32 %v1837, %v2174
        %v2176 = vpop.f32.mrf.mxu0
        %v2177 = vadd.f32 %v1839, %v2176
        %2178 = vmatmul.bf16.gmra.mxu0 %v1616
        %v2179 = vpop.f32.mrf.mxu0
        %v2180 = vadd.f32 %v1842, %v2179
        %v2181 = vpop.f32.mrf.mxu0
        %v2182 = vadd.f32 %v1844, %v2181
        %2183 = vmatmul.bf16.gmra.mxu0 %v1619
        %v2184 = vpop.f32.mrf.mxu0
        %v2185 = vadd.f32 %v1847, %v2184
        %v2186 = vpop.f32.mrf.mxu0
        %v2187 = vadd.f32 %v1849, %v2186
        %2188 = vmatmul.bf16.gmra.mxu0 %v1622
        %v2189 = vpop.f32.mrf.mxu0
        %v2190 = vadd.f32 %v1852, %v2189
        %v2191 = vpop.f32.mrf.mxu0
        %v2192 = vadd.f32 %v1854, %v2191
        %2193 = vmatmul.bf16.gmra.mxu0 %v1625
        %v2194 = vpop.f32.mrf.mxu0
        %v2195 = vadd.f32 %v1857, %v2194
        %v2196 = vpop.f32.mrf.mxu0
        %v2197 = vadd.f32 %v1859, %v2196
        %2198 = vmatmul.bf16.gmra.mxu0 %v1628
        %v2199 = vpop.f32.mrf.mxu0
        %v2200 = vadd.f32 %v1862, %v2199
        %v2201 = vpop.f32.mrf.mxu0
        %v2202 = vadd.f32 %v1864, %v2201
        %2203 = vmatmul.bf16.gmra.mxu0 %v1631
        %v2204 = vpop.f32.mrf.mxu0
        %v2205 = vadd.f32 %v1867, %v2204
        %v2206 = vpop.f32.mrf.mxu0
        %v2207 = vadd.f32 %v1869, %v2206
        %2208 = vmatmul.bf16.gmra.mxu0 %v1634
        %v2209 = vpop.f32.mrf.mxu0
        %v2210 = vadd.f32 %v1872, %v2209
        %v2211 = vpop.f32.mrf.mxu0
        %v2212 = vadd.f32 %v1874, %v2211
        %2213 = vmatmul.bf16.gmra.mxu0 %v1637
        %v2214 = vpop.f32.mrf.mxu0
        %v2215 = vadd.f32 %v1877, %v2214
        %v2216 = vpop.f32.mrf.mxu0
        %v2217 = vadd.f32 %v1879, %v2216
        %2218 = vmatmul.bf16.gmra.mxu0 %v1640
        %v2219 = vpop.f32.mrf.mxu0
        %v2220 = vadd.f32 %v1882, %v2219
        %v2221 = vpop.f32.mrf.mxu0
        %v2222 = vadd.f32 %v1884, %v2221
        %2223 = vmatmul.bf16.gmra.mxu0 %v1643
        %v2224 = vpop.f32.mrf.mxu0
        %v2225 = vadd.f32 %v1887, %v2224
        %v2226 = vpop.f32.mrf.mxu0
        %v2227 = vadd.f32 %v1889, %v2226
        %2228 = vmatmul.bf16.gmra.mxu0 %v1646
        %v2229 = vpop.f32.mrf.mxu0
        %v2230 = vadd.f32 %v1892, %v2229
        %v2231 = vpop.f32.mrf.mxu0
        %v2232 = vadd.f32 %v1894, %v2231
        %2233 = vmatmul.bf16.gmra.mxu0 %v1649
        %v2234 = vpop.f32.mrf.mxu0
        %v2235 = vadd.f32 %v1897, %v2234
        %v2236 = vpop.f32.mrf.mxu0
        %v2237 = vadd.f32 %v1899, %v2236
        %2238 = vmatmul.bf16.gmra.mxu0 %v1652
        %v2239 = vpop.f32.mrf.mxu0
        %v2240 = vadd.f32 %v1902, %v2239
        %v2241 = vpop.f32.mrf.mxu0
        %v2242 = vadd.f32 %v1904, %v2241
        %2243 = vmatmul.bf16.gmra.mxu0 %v1655
        %v2244 = vpop.f32.mrf.mxu0
        %v2245 = vadd.f32 %v1907, %v2244
        %v2246 = vpop.f32.mrf.mxu0
        %v2247 = vadd.f32 %v1909, %v2246
        %2248 = vmatmul.bf16.gmra.mxu0 %v1658
        %v2249 = vpop.f32.mrf.mxu0
        %v2250 = vadd.f32 %v1912, %v2249
        %v2251 = vpop.f32.mrf.mxu0
        %v2252 = vadd.f32 %v1914, %v2251
        %2253 = vmatmul.bf16.gmra.mxu0 %v1661
        %v2254 = vpop.f32.mrf.mxu0
        %v2255 = vadd.f32 %v1917, %v2254
        %v2256 = vpop.f32.mrf.mxu0
        %v2257 = vadd.f32 %v1919, %v2256
        %2258 = vmatmul.bf16.gmra.mxu0 %v1664
        %v2259 = vpop.f32.mrf.mxu0
        %v2260 = vadd.f32 %v1922, %v2259
        %v2261 = vpop.f32.mrf.mxu0
        %v2262 = vadd.f32 %v1924, %v2261
        %2263 = vmatmul.bf16.gmra.mxu0 %v1667
        %v2264 = vpop.f32.mrf.mxu0
        %v2265 = vadd.f32 %v1927, %v2264
        %v2266 = vpop.f32.mrf.mxu0
        %v2267 = vadd.f32 %v1929, %v2266
        %2268 = vmatmul.bf16.gmra.mxu0 %v1670
        %v2269 = vpop.f32.mrf.mxu0
        %v2270 = vadd.f32 %v1932, %v2269
        %v2271 = vpop.f32.mrf.mxu0
        %v2272 = vadd.f32 %v1934, %v2271
        %2273 = vmatmul.bf16.gmra.mxu0 %v1673
        %v2274 = vpop.f32.mrf.mxu0
        %v2275 = vadd.f32 %v1937, %v2274
        %v2276 = vpop.f32.mrf.mxu0
        %v2277 = vadd.f32 %v1939, %v2276
        %2278 = vmatmul.bf16.gmra.mxu0 %v1676
        %v2279 = vpop.f32.mrf.mxu0
        %v2280 = vadd.f32 %v1942, %v2279
        %v2281 = vpop.f32.mrf.mxu0
        %v2282 = vadd.f32 %v1944, %v2281
        %2283 = vmatmul.bf16.gmra.mxu0 %v1679
        %v2284 = vpop.f32.mrf.mxu0
        %v2285 = vadd.f32 %v1947, %v2284
        %v2286 = vpop.f32.mrf.mxu0
        %v2287 = vadd.f32 %v1949, %v2286
        %2288 = vmatmul.bf16.gmra.mxu0 %v1682
        %v2289 = vpop.f32.mrf.mxu0
        %v2290 = vadd.f32 %v1952, %v2289
        %v2291 = vpop.f32.mrf.mxu0
        %v2292 = vadd.f32 %v1954, %v2291
        %2293 = vmatmul.bf16.gmra.mxu0 %v1685
        %v2294 = vpop.f32.mrf.mxu0
        %v2295 = vadd.f32 %v1957, %v2294
        %v2296 = vpop.f32.mrf.mxu0
        %v2297 = vadd.f32 %v1959, %v2296
        %2298 = vmatmul.bf16.gmra.mxu0 %v1688
        %v2299 = vpop.f32.mrf.mxu0
        %v2300 = vadd.f32 %v1962, %v2299
        %v2301 = vpop.f32.mrf.mxu0
        %v2302 = vadd.f32 %v1964, %v2301
        %2303 = vmatmul.bf16.gmra.mxu0 %v1691
        %v2304 = vpop.f32.mrf.mxu0
        %v2305 = vadd.f32 %v1967, %v2304
        %v2306 = vpop.f32.mrf.mxu0
        %v2307 = vadd.f32 %v1969, %v2306
        %2308 = vmatmul.bf16.gmra.mxu0 %v1694
        %v2309 = vpop.f32.mrf.mxu0
        %v2310 = vadd.f32 %v1972, %v2309
        %v2311 = vpop.f32.mrf.mxu0
        %v2312 = vadd.f32 %v1974, %v2311
        %2313 = vmatmul.bf16.gmra.mxu0 %v1697
        %v2314 = vpop.f32.mrf.mxu0
        %v2315 = vadd.f32 %v1977, %v2314
        %v2316 = vpop.f32.mrf.mxu0
        %v2317 = vadd.f32 %v1979, %v2316
        %2318 = vmatmul.bf16.gmra.mxu0 %v1700
        %v2319 = vpop.f32.mrf.mxu0
        %v2320 = vadd.f32 %v1982, %v2319
        %v2321 = vpop.f32.mrf.mxu0
        %v2322 = vadd.f32 %v1984, %v2321
        %2323 = vmatmul.bf16.gmra.mxu0 %v1703
        %v2324 = vpop.f32.mrf.mxu0
        %v2325 = vadd.f32 %v1987, %v2324
        %v2326 = vpop.f32.mrf.mxu0
        %v2327 = vadd.f32 %v1989, %v2326
        %2328 = vmatmul.bf16.gmra.mxu0 %v1706
        %v2329 = vpop.f32.mrf.mxu0
        %v2330 = vadd.f32 %v1992, %v2329
        %v2331 = vpop.f32.mrf.mxu0
        %v2332 = vadd.f32 %v1994, %v2331
        %2333 = vmatmul.bf16.gmra.mxu0 %v1709
        %v2334 = vpop.f32.mrf.mxu0
        %v2335 = vadd.f32 %v1997, %v2334
        %v2336 = vpop.f32.mrf.mxu0
        %v2337 = vadd.f32 %v1999, %v2336
        %2338 = vmatmul.bf16.gmra.mxu0 %v1712
        %v2339 = vpop.f32.mrf.mxu0
        %v2340 = vadd.f32 %v2002, %v2339
        %v2341 = vpop.f32.mrf.mxu0
        %v2342 = vadd.f32 %v2004, %v2341
        %2343 = vmatmul.bf16.gmra.mxu0 %v1715
        %v2344 = vpop.f32.mrf.mxu0
        %v2345 = vadd.f32 %v2007, %v2344
        %v2346 = vpop.f32.mrf.mxu0
        %v2347 = vadd.f32 %v2009, %v2346
        %2348 = vmatmul.bf16.gmra.mxu0 %v1718
        %v2349 = vpop.f32.mrf.mxu0
        %v2350 = vadd.f32 %v2012, %v2349
        %v2351 = vpop.f32.mrf.mxu0
        %v2352 = vadd.f32 %v2014, %v2351
        %2353 = vmatmul.bf16.gmra.mxu0 %v1721
        %v2354 = vpop.f32.mrf.mxu0
        %v2355 = vadd.f32 %v2017, %v2354
        %v2356 = vpop.f32.mrf.mxu0
        %v2357 = vadd.f32 %v2019, %v2356
        %2358 = vmatmul.bf16.gmra.mxu0 %v1724
        %v2359 = vpop.f32.mrf.mxu0
        %v2360 = vadd.f32 %v2022, %v2359
        %v2361 = vpop.f32.mrf.mxu0
        %v2362 = vadd.f32 %v2024, %v2361
        %2363 = vmatmul.bf16.gmra.mxu0 %v1727
        %v2364 = vpop.f32.mrf.mxu0
        %v2365 = vadd.f32 %v2027, %v2364
        %v2366 = vpop.f32.mrf.mxu0
        %v2367 = vadd.f32 %v2029, %v2366
        %2368 = vmatmul.bf16.gmra.mxu0 %v1730
        %v2369 = vpop.f32.mrf.mxu0
        %v2370 = vadd.f32 %v2032, %v2369
        %v2371 = vpop.f32.mrf.mxu0
        %v2372 = vadd.f32 %v2034, %v2371
        %2373 = vmatmul.bf16.gmra.mxu0 %v1733
        %v2374 = vpop.f32.mrf.mxu0
        %v2375 = vadd.f32 %v2037, %v2374
        %v2376 = vpop.f32.mrf.mxu0
        %v2377 = vadd.f32 %v2039, %v2376
        %2378 = vmatmul.bf16.gmra.mxu0 %v1736
        %v2379 = vpop.f32.mrf.mxu0
        %v2380 = vadd.f32 %v2042, %v2379
        %v2381 = vpop.f32.mrf.mxu0
        %v2382 = vadd.f32 %v2044, %v2381
        %2383 = vmatmul.bf16.gmra.mxu0 %v1739
        %v2384 = vpop.f32.mrf.mxu0
        %v2385 = vadd.f32 %v2047, %v2384
        %v2386 = vpop.f32.mrf.mxu0
        %v2387 = vadd.f32 %v2049, %v2386
        %2388 = vmatmul.bf16.gmra.mxu0 %v1742
        %v2389 = vpop.f32.mrf.mxu0
        %v2390 = vadd.f32 %v2052, %v2389
        %v2391 = vpop.f32.mrf.mxu0
        %v2392 = vadd.f32 %v2054, %v2391
        %2393 = vmatmul.bf16.gmra.mxu0 %v1745
        %v2394 = vpop.f32.mrf.mxu0
        %v2395 = vadd.f32 %v2057, %v2394
        %v2396 = vpop.f32.mrf.mxu0
        %v2397 = vadd.f32 %v2059, %v2396
        %2398 = vmatmul.bf16.gmra.mxu0 %v1748
        %v2399 = vpop.f32.mrf.mxu0
        %v2400 = vadd.f32 %v2062, %v2399
        %v2401 = vpop.f32.mrf.mxu0
        %v2402 = vadd.f32 %v2064, %v2401
        %2403 = vmatmul.bf16.gmra.mxu0 %v1751
        %v2404 = vpop.f32.mrf.mxu0
        %v2405 = vadd.f32 %v2067, %v2404
        %v2406 = vpop.f32.mrf.mxu0
        %v2407 = vadd.f32 %v2069, %v2406
        %2408 = vmatmul.bf16.gmra.mxu0 %v1754
        %v2409 = vpop.f32.mrf.mxu0
        %v2410 = vadd.f32 %v2072, %v2409
        %v2411 = vpop.f32.mrf.mxu0
        %v2412 = vadd.f32 %v2074, %v2411
        %2413 = vmatmul.bf16.gmra.mxu0 %v1757
        %v2414 = vpop.f32.mrf.mxu0
        %v2415 = vadd.f32 %v2077, %v2414
        %v2416 = vpop.f32.mrf.mxu0
        %v2417 = vadd.f32 %v2079, %v2416
        %2418 = vmatmul.bf16.gmra.mxu0 %v1760
        %v2419 = vpop.f32.mrf.mxu0
        %v2420 = vadd.f32 %v2082, %v2419
        %v2421 = vpop.f32.mrf.mxu0
        %v2422 = vadd.f32 %v2084, %v2421
        %2423 = vmatmul.bf16.gmra.mxu0 %v1763
        %v2424 = vpop.f32.mrf.mxu0
        %v2425 = vadd.f32 %v2087, %v2424
        %v2426 = vpop.f32.mrf.mxu0
        %v2427 = vadd.f32 %v2089, %v2426
        %2428 = vmatmul.bf16.gmra.mxu0 %v1766
        %v2429 = vpop.f32.mrf.mxu0
        %v2430 = vadd.f32 %v2092, %v2429
        %v2431 = vpop.f32.mrf.mxu0
        %v2432 = vadd.f32 %v2094, %v2431
        %2433 = vmatmul.bf16.gmra.mxu0 %v1769
        %v2434 = vpop.f32.mrf.mxu0
        %v2435 = vadd.f32 %v2097, %v2434
        %v2436 = vpop.f32.mrf.mxu0
        %v2437 = vadd.f32 %v2099, %v2436
        %2438 = vmatmul.bf16.gmra.mxu0 %v1772
        %v2439 = vpop.f32.mrf.mxu0
        %v2440 = vadd.f32 %v2102, %v2439
        %v2441 = vpop.f32.mrf.mxu0
        %v2442 = vadd.f32 %v2104, %v2441
        %2443 = vmatmul.bf16.gmra.mxu0 %v1775
        %v2444 = vpop.f32.mrf.mxu0
        %v2445 = vadd.f32 %v2107, %v2444
        %v2446 = vpop.f32.mrf.mxu0
        %v2447 = vadd.f32 %v2109, %v2446
        %2448 = vmatmul.bf16.gmra.mxu0 %v1778
        %v2449 = vpop.f32.mrf.mxu0
        %v2450 = vadd.f32 %v2112, %v2449
        %v2451 = vpop.f32.mrf.mxu0
        %v2452 = vadd.f32 %v2114, %v2451
        %2453 = vmatmul.bf16.gmra.mxu0 %v1781
        %v2454 = vpop.f32.mrf.mxu0
        %v2455 = vadd.f32 %v2117, %v2454
        %v2456 = vpop.f32.mrf.mxu0
        %v2457 = vadd.f32 %v2119, %v2456
        %2458 = vmatmul.bf16.gmra.mxu0 %v1784
        %v2459 = vpop.f32.mrf.mxu0
        %v2460 = vadd.f32 %v2122, %v2459
        %v2461 = vpop.f32.mrf.mxu0
        %v2462 = vadd.f32 %v2124, %v2461
        %2463 = vmatmul.bf16.gmra.mxu0 %v1787
        %v2464 = vpop.f32.mrf.mxu0
        %v2465 = vadd.f32 %v2127, %v2464
        %v2466 = vpop.f32.mrf.mxu0
        %v2467 = vadd.f32 %v2129, %v2466
        %2468 = vdwg.mxu0
        %s2469 = scalar_lea.vmem %s219, 12
        %v2470 = vld [vmem:[%s2469] sm:$0x3]
        %v2472 = vsel %vm1602, %v1357, 0
        %v2475 = vsel %vm1602, %v1287, 0
        %v2478 = vand.u32 %v2470, %v1798
        %2480 = vmatpush.bf16.msra.mxu0 0
        %2481 = vmatpush.bf16.msra.mxu0 0
        %2482 = vmatpush.bf16.msra.mxu0 0
        %2483 = vmatpush.bf16.msra.mxu0 0
        %2484 = vmatpush.bf16.msra.mxu0 0
        %2485 = vmatpush.bf16.msra.mxu0 0
        %2486 = vmatpush.bf16.msra.mxu0 0
        %2487 = vmatpush.bf16.msra.mxu0 %v2478
        %2488 = vmatmul.bf16.gmra.mxu0 %v1610
        %v2489 = vpop.f32.mrf.mxu0
        %v2490 = vadd.f32 0.0, %v2489
        %v2491 = vpop.f32.mrf.mxu0
        %v2492 = vadd.f32 0.0, %v2491
        %2493 = vmatmul.bf16.gmra.mxu0 %v1613
        %v2494 = vpop.f32.mrf.mxu0
        %v2495 = vadd.f32 0.0, %v2494
        %v2496 = vpop.f32.mrf.mxu0
        %v2497 = vadd.f32 0.0, %v2496
        %2498 = vmatmul.bf16.gmra.mxu0 %v1616
        %v2499 = vpop.f32.mrf.mxu0
        %v2500 = vadd.f32 0.0, %v2499
        %v2501 = vpop.f32.mrf.mxu0
        %v2502 = vadd.f32 0.0, %v2501
        %2503 = vmatmul.bf16.gmra.mxu0 %v1619
        %v2504 = vpop.f32.mrf.mxu0
        %v2505 = vadd.f32 0.0, %v2504
        %v2506 = vpop.f32.mrf.mxu0
        %v2507 = vadd.f32 0.0, %v2506
        %2508 = vmatmul.bf16.gmra.mxu0 %v1622
        %v2509 = vpop.f32.mrf.mxu0
        %v2510 = vadd.f32 0.0, %v2509
        %v2511 = vpop.f32.mrf.mxu0
        %v2512 = vadd.f32 0.0, %v2511
        %2513 = vmatmul.bf16.gmra.mxu0 %v1625
        %v2514 = vpop.f32.mrf.mxu0
        %v2515 = vadd.f32 0.0, %v2514
        %v2516 = vpop.f32.mrf.mxu0
        %v2517 = vadd.f32 0.0, %v2516
        %2518 = vmatmul.bf16.gmra.mxu0 %v1628
        %v2519 = vpop.f32.mrf.mxu0
        %v2520 = vadd.f32 0.0, %v2519
        %v2521 = vpop.f32.mrf.mxu0
        %v2522 = vadd.f32 0.0, %v2521
        %2523 = vmatmul.bf16.gmra.mxu0 %v1631
        %v2524 = vpop.f32.mrf.mxu0
        %v2525 = vadd.f32 0.0, %v2524
        %v2526 = vpop.f32.mrf.mxu0
        %v2527 = vadd.f32 0.0, %v2526
        %2528 = vmatmul.bf16.gmra.mxu0 %v1634
        %v2529 = vpop.f32.mrf.mxu0
        %v2530 = vadd.f32 0.0, %v2529
        %v2531 = vpop.f32.mrf.mxu0
        %v2532 = vadd.f32 0.0, %v2531
        %2533 = vmatmul.bf16.gmra.mxu0 %v1637
        %v2534 = vpop.f32.mrf.mxu0
        %v2535 = vadd.f32 0.0, %v2534
        %v2536 = vpop.f32.mrf.mxu0
        %v2537 = vadd.f32 0.0, %v2536
        %2538 = vmatmul.bf16.gmra.mxu0 %v1640
        %v2539 = vpop.f32.mrf.mxu0
        %v2540 = vadd.f32 0.0, %v2539
        %v2541 = vpop.f32.mrf.mxu0
        %v2542 = vadd.f32 0.0, %v2541
        %2543 = vmatmul.bf16.gmra.mxu0 %v1643
        %v2544 = vpop.f32.mrf.mxu0
        %v2545 = vadd.f32 0.0, %v2544
        %v2546 = vpop.f32.mrf.mxu0
        %v2547 = vadd.f32 0.0, %v2546
        %2548 = vmatmul.bf16.gmra.mxu0 %v1646
        %v2549 = vpop.f32.mrf.mxu0
        %v2550 = vadd.f32 0.0, %v2549
        %v2551 = vpop.f32.mrf.mxu0
        %v2552 = vadd.f32 0.0, %v2551
        %2553 = vmatmul.bf16.gmra.mxu0 %v1649
        %v2554 = vpop.f32.mrf.mxu0
        %v2555 = vadd.f32 0.0, %v2554
        %v2556 = vpop.f32.mrf.mxu0
        %v2557 = vadd.f32 0.0, %v2556
        %2558 = vmatmul.bf16.gmra.mxu0 %v1652
        %v2559 = vpop.f32.mrf.mxu0
        %v2560 = vadd.f32 0.0, %v2559
        %v2561 = vpop.f32.mrf.mxu0
        %v2562 = vadd.f32 0.0, %v2561
        %2563 = vmatmul.bf16.gmra.mxu0 %v1655
        %v2564 = vpop.f32.mrf.mxu0
        %v2565 = vadd.f32 0.0, %v2564
        %v2566 = vpop.f32.mrf.mxu0
        %v2567 = vadd.f32 0.0, %v2566
        %2568 = vmatmul.bf16.gmra.mxu0 %v1658
        %v2569 = vpop.f32.mrf.mxu0
        %v2570 = vadd.f32 0.0, %v2569
        %v2571 = vpop.f32.mrf.mxu0
        %v2572 = vadd.f32 0.0, %v2571
        %2573 = vmatmul.bf16.gmra.mxu0 %v1661
        %v2574 = vpop.f32.mrf.mxu0
        %v2575 = vadd.f32 0.0, %v2574
        %v2576 = vpop.f32.mrf.mxu0
        %v2577 = vadd.f32 0.0, %v2576
        %2578 = vmatmul.bf16.gmra.mxu0 %v1664
        %v2579 = vpop.f32.mrf.mxu0
        %v2580 = vadd.f32 0.0, %v2579
        %v2581 = vpop.f32.mrf.mxu0
        %v2582 = vadd.f32 0.0, %v2581
        %2583 = vmatmul.bf16.gmra.mxu0 %v1667
        %v2584 = vpop.f32.mrf.mxu0
        %v2585 = vadd.f32 0.0, %v2584
        %v2586 = vpop.f32.mrf.mxu0
        %v2587 = vadd.f32 0.0, %v2586
        %2588 = vmatmul.bf16.gmra.mxu0 %v1670
        %v2589 = vpop.f32.mrf.mxu0
        %v2590 = vadd.f32 0.0, %v2589
        %v2591 = vpop.f32.mrf.mxu0
        %v2592 = vadd.f32 0.0, %v2591
        %2593 = vmatmul.bf16.gmra.mxu0 %v1673
        %v2594 = vpop.f32.mrf.mxu0
        %v2595 = vadd.f32 0.0, %v2594
        %v2596 = vpop.f32.mrf.mxu0
        %v2597 = vadd.f32 0.0, %v2596
        %2598 = vmatmul.bf16.gmra.mxu0 %v1676
        %v2599 = vpop.f32.mrf.mxu0
        %v2600 = vadd.f32 0.0, %v2599
        %v2601 = vpop.f32.mrf.mxu0
        %v2602 = vadd.f32 0.0, %v2601
        %2603 = vmatmul.bf16.gmra.mxu0 %v1679
        %v2604 = vpop.f32.mrf.mxu0
        %v2605 = vadd.f32 0.0, %v2604
        %v2606 = vpop.f32.mrf.mxu0
        %v2607 = vadd.f32 0.0, %v2606
        %2608 = vmatmul.bf16.gmra.mxu0 %v1682
        %v2609 = vpop.f32.mrf.mxu0
        %v2610 = vadd.f32 0.0, %v2609
        %v2611 = vpop.f32.mrf.mxu0
        %v2612 = vadd.f32 0.0, %v2611
        %2613 = vmatmul.bf16.gmra.mxu0 %v1685
        %v2614 = vpop.f32.mrf.mxu0
        %v2615 = vadd.f32 0.0, %v2614
        %v2616 = vpop.f32.mrf.mxu0
        %v2617 = vadd.f32 0.0, %v2616
        %2618 = vmatmul.bf16.gmra.mxu0 %v1688
        %v2619 = vpop.f32.mrf.mxu0
        %v2620 = vadd.f32 0.0, %v2619
        %v2621 = vpop.f32.mrf.mxu0
        %v2622 = vadd.f32 0.0, %v2621
        %2623 = vmatmul.bf16.gmra.mxu0 %v1691
        %v2624 = vpop.f32.mrf.mxu0
        %v2625 = vadd.f32 0.0, %v2624
        %v2626 = vpop.f32.mrf.mxu0
        %v2627 = vadd.f32 0.0, %v2626
        %2628 = vmatmul.bf16.gmra.mxu0 %v1694
        %v2629 = vpop.f32.mrf.mxu0
        %v2630 = vadd.f32 0.0, %v2629
        %v2631 = vpop.f32.mrf.mxu0
        %v2632 = vadd.f32 0.0, %v2631
        %2633 = vmatmul.bf16.gmra.mxu0 %v1697
        %v2634 = vpop.f32.mrf.mxu0
        %v2635 = vadd.f32 0.0, %v2634
        %v2636 = vpop.f32.mrf.mxu0
        %v2637 = vadd.f32 0.0, %v2636
        %2638 = vmatmul.bf16.gmra.mxu0 %v1700
        %v2639 = vpop.f32.mrf.mxu0
        %v2640 = vadd.f32 0.0, %v2639
        %v2641 = vpop.f32.mrf.mxu0
        %v2642 = vadd.f32 0.0, %v2641
        %2643 = vmatmul.bf16.gmra.mxu0 %v1703
        %v2644 = vpop.f32.mrf.mxu0
        %v2645 = vadd.f32 0.0, %v2644
        %v2646 = vpop.f32.mrf.mxu0
        %v2647 = vadd.f32 0.0, %v2646
        %2648 = vmatmul.bf16.gmra.mxu0 %v1706
        %v2649 = vpop.f32.mrf.mxu0
        %v2650 = vadd.f32 0.0, %v2649
        %v2651 = vpop.f32.mrf.mxu0
        %v2652 = vadd.f32 0.0, %v2651
        %2653 = vmatmul.bf16.gmra.mxu0 %v1709
        %v2654 = vpop.f32.mrf.mxu0
        %v2655 = vadd.f32 0.0, %v2654
        %v2656 = vpop.f32.mrf.mxu0
        %v2657 = vadd.f32 0.0, %v2656
        %2658 = vmatmul.bf16.gmra.mxu0 %v1712
        %v2659 = vpop.f32.mrf.mxu0
        %v2660 = vadd.f32 0.0, %v2659
        %v2661 = vpop.f32.mrf.mxu0
        %v2662 = vadd.f32 0.0, %v2661
        %2663 = vmatmul.bf16.gmra.mxu0 %v1715
        %v2664 = vpop.f32.mrf.mxu0
        %v2665 = vadd.f32 0.0, %v2664
        %v2666 = vpop.f32.mrf.mxu0
        %v2667 = vadd.f32 0.0, %v2666
        %2668 = vmatmul.bf16.gmra.mxu0 %v1718
        %v2669 = vpop.f32.mrf.mxu0
        %v2670 = vadd.f32 0.0, %v2669
        %v2671 = vpop.f32.mrf.mxu0
        %v2672 = vadd.f32 0.0, %v2671
        %2673 = vmatmul.bf16.gmra.mxu0 %v1721
        %v2674 = vpop.f32.mrf.mxu0
        %v2675 = vadd.f32 0.0, %v2674
        %v2676 = vpop.f32.mrf.mxu0
        %v2677 = vadd.f32 0.0, %v2676
        %2678 = vmatmul.bf16.gmra.mxu0 %v1724
        %v2679 = vpop.f32.mrf.mxu0
        %v2680 = vadd.f32 0.0, %v2679
        %v2681 = vpop.f32.mrf.mxu0
        %v2682 = vadd.f32 0.0, %v2681
        %2683 = vmatmul.bf16.gmra.mxu0 %v1727
        %v2684 = vpop.f32.mrf.mxu0
        %v2685 = vadd.f32 0.0, %v2684
        %v2686 = vpop.f32.mrf.mxu0
        %v2687 = vadd.f32 0.0, %v2686
        %2688 = vmatmul.bf16.gmra.mxu0 %v1730
        %v2689 = vpop.f32.mrf.mxu0
        %v2690 = vadd.f32 0.0, %v2689
        %v2691 = vpop.f32.mrf.mxu0
        %v2692 = vadd.f32 0.0, %v2691
        %2693 = vmatmul.bf16.gmra.mxu0 %v1733
        %v2694 = vpop.f32.mrf.mxu0
        %v2695 = vadd.f32 0.0, %v2694
        %v2696 = vpop.f32.mrf.mxu0
        %v2697 = vadd.f32 0.0, %v2696
        %2698 = vmatmul.bf16.gmra.mxu0 %v1736
        %v2699 = vpop.f32.mrf.mxu0
        %v2700 = vadd.f32 0.0, %v2699
        %v2701 = vpop.f32.mrf.mxu0
        %v2702 = vadd.f32 0.0, %v2701
        %2703 = vmatmul.bf16.gmra.mxu0 %v1739
        %v2704 = vpop.f32.mrf.mxu0
        %v2705 = vadd.f32 0.0, %v2704
        %v2706 = vpop.f32.mrf.mxu0
        %v2707 = vadd.f32 0.0, %v2706
        %2708 = vmatmul.bf16.gmra.mxu0 %v1742
        %v2709 = vpop.f32.mrf.mxu0
        %v2710 = vadd.f32 0.0, %v2709
        %v2711 = vpop.f32.mrf.mxu0
        %v2712 = vadd.f32 0.0, %v2711
        %2713 = vmatmul.bf16.gmra.mxu0 %v1745
        %v2714 = vpop.f32.mrf.mxu0
        %v2715 = vadd.f32 0.0, %v2714
        %v2716 = vpop.f32.mrf.mxu0
        %v2717 = vadd.f32 0.0, %v2716
        %2718 = vmatmul.bf16.gmra.mxu0 %v1748
        %v2719 = vpop.f32.mrf.mxu0
        %v2720 = vadd.f32 0.0, %v2719
        %v2721 = vpop.f32.mrf.mxu0
        %v2722 = vadd.f32 0.0, %v2721
        %2723 = vmatmul.bf16.gmra.mxu0 %v1751
        %v2724 = vpop.f32.mrf.mxu0
        %v2725 = vadd.f32 0.0, %v2724
        %v2726 = vpop.f32.mrf.mxu0
        %v2727 = vadd.f32 0.0, %v2726
        %2728 = vmatmul.bf16.gmra.mxu0 %v1754
        %v2729 = vpop.f32.mrf.mxu0
        %v2730 = vadd.f32 0.0, %v2729
        %v2731 = vpop.f32.mrf.mxu0
        %v2732 = vadd.f32 0.0, %v2731
        %2733 = vmatmul.bf16.gmra.mxu0 %v1757
        %v2734 = vpop.f32.mrf.mxu0
        %v2735 = vadd.f32 0.0, %v2734
        %v2736 = vpop.f32.mrf.mxu0
        %v2737 = vadd.f32 0.0, %v2736
        %2738 = vmatmul.bf16.gmra.mxu0 %v1760
        %v2739 = vpop.f32.mrf.mxu0
        %v2740 = vadd.f32 0.0, %v2739
        %v2741 = vpop.f32.mrf.mxu0
        %v2742 = vadd.f32 0.0, %v2741
        %2743 = vmatmul.bf16.gmra.mxu0 %v1763
        %v2744 = vpop.f32.mrf.mxu0
        %v2745 = vadd.f32 0.0, %v2744
        %v2746 = vpop.f32.mrf.mxu0
        %v2747 = vadd.f32 0.0, %v2746
        %2748 = vmatmul.bf16.gmra.mxu0 %v1766
        %v2749 = vpop.f32.mrf.mxu0
        %v2750 = vadd.f32 0.0, %v2749
        %v2751 = vpop.f32.mrf.mxu0
        %v2752 = vadd.f32 0.0, %v2751
        %2753 = vmatmul.bf16.gmra.mxu0 %v1769
        %v2754 = vpop.f32.mrf.mxu0
        %v2755 = vadd.f32 0.0, %v2754
        %v2756 = vpop.f32.mrf.mxu0
        %v2757 = vadd.f32 0.0, %v2756
        %2758 = vmatmul.bf16.gmra.mxu0 %v1772
        %v2759 = vpop.f32.mrf.mxu0
        %v2760 = vadd.f32 0.0, %v2759
        %v2761 = vpop.f32.mrf.mxu0
        %v2762 = vadd.f32 0.0, %v2761
        %2763 = vmatmul.bf16.gmra.mxu0 %v1775
        %v2764 = vpop.f32.mrf.mxu0
        %v2765 = vadd.f32 0.0, %v2764
        %v2766 = vpop.f32.mrf.mxu0
        %v2767 = vadd.f32 0.0, %v2766
        %2768 = vmatmul.bf16.gmra.mxu0 %v1778
        %v2769 = vpop.f32.mrf.mxu0
        %v2770 = vadd.f32 0.0, %v2769
        %v2771 = vpop.f32.mrf.mxu0
        %v2772 = vadd.f32 0.0, %v2771
        %2773 = vmatmul.bf16.gmra.mxu0 %v1781
        %v2774 = vpop.f32.mrf.mxu0
        %v2775 = vadd.f32 0.0, %v2774
        %v2776 = vpop.f32.mrf.mxu0
        %v2777 = vadd.f32 0.0, %v2776
        %2778 = vmatmul.bf16.gmra.mxu0 %v1784
        %v2779 = vpop.f32.mrf.mxu0
        %v2780 = vadd.f32 0.0, %v2779
        %v2781 = vpop.f32.mrf.mxu0
        %v2782 = vadd.f32 0.0, %v2781
        %2783 = vmatmul.bf16.gmra.mxu0 %v1787
        %v2784 = vpop.f32.mrf.mxu0
        %v2785 = vadd.f32 0.0, %v2784
        %v2786 = vpop.f32.mrf.mxu0
        %v2787 = vadd.f32 0.0, %v2786
        %2788 = vmatmul.bf16.gmra.mxu0 %v1790
        %v2789 = vpop.f32.mrf.mxu0
        %v2790 = vadd.f32 0.0, %v2789
        %v2791 = vpop.f32.mrf.mxu0
        %v2792 = vadd.f32 0.0, %v2791
        %2793 = vmatmul.bf16.gmra.mxu0 %v1793
        %v2794 = vpop.f32.mrf.mxu0
        %v2795 = vadd.f32 0.0, %v2794
        %v2796 = vpop.f32.mrf.mxu0
        %v2797 = vadd.f32 0.0, %v2796
        %2798 = vmatmul.bf16.gmra.mxu0 %v2472
        %v2799 = vpop.f32.mrf.mxu0
        %v2800 = vadd.f32 0.0, %v2799
        %v2801 = vpop.f32.mrf.mxu0
        %v2802 = vadd.f32 0.0, %v2801
        %2803 = vmatmul.bf16.gmra.mxu0 %v2475
        %v2804 = vpop.f32.mrf.mxu0
        %v2805 = vadd.f32 0.0, %v2804
        %v2806 = vpop.f32.mrf.mxu0
        %v2807 = vadd.f32 0.0, %v2806
        %2808 = vdwg.mxu0
        %v2809 = vadd.f32 %v2150, %v2490
        %v2810 = vadd.f32 %v2152, %v2492
        %v2811 = vadd.f32 %v2155, %v2495
        %v2812 = vadd.f32 %v2157, %v2497
        %v2813 = vadd.f32 %v2160, %v2500
        %v2814 = vadd.f32 %v2162, %v2502
        %v2815 = vadd.f32 %v2165, %v2505
        %v2816 = vadd.f32 %v2167, %v2507
        %v2817 = vadd.f32 %v2170, %v2510
        %v2818 = vadd.f32 %v2172, %v2512
        %v2819 = vadd.f32 %v2175, %v2515
        %v2820 = vadd.f32 %v2177, %v2517
        %v2821 = vadd.f32 %v2180, %v2520
        %v2822 = vadd.f32 %v2182, %v2522
        %v2823 = vadd.f32 %v2185, %v2525
        %v2824 = vadd.f32 %v2187, %v2527
        %v2825 = vadd.f32 %v2190, %v2530
        %v2826 = vadd.f32 %v2192, %v2532
        %v2827 = vadd.f32 %v2195, %v2535
        %v2828 = vadd.f32 %v2197, %v2537
        %v2829 = vadd.f32 %v2200, %v2540
        %v2830 = vadd.f32 %v2202, %v2542
        %v2831 = vadd.f32 %v2205, %v2545
        %v2832 = vadd.f32 %v2207, %v2547
        %v2833 = vadd.f32 %v2210, %v2550
        %v2834 = vadd.f32 %v2212, %v2552
        %v2835 = vadd.f32 %v2215, %v2555
        %v2836 = vadd.f32 %v2217, %v2557
        %v2837 = vadd.f32 %v2220, %v2560
        %v2838 = vadd.f32 %v2222, %v2562
        %v2839 = vadd.f32 %v2225, %v2565
        %v2840 = vadd.f32 %v2227, %v2567
        %v2841 = vadd.f32 %v2230, %v2570
        %v2842 = vadd.f32 %v2232, %v2572
        %v2843 = vadd.f32 %v2235, %v2575
        %v2844 = vadd.f32 %v2237, %v2577
        %v2845 = vadd.f32 %v2240, %v2580
        %v2846 = vadd.f32 %v2242, %v2582
        %v2847 = vadd.f32 %v2245, %v2585
        %v2848 = vadd.f32 %v2247, %v2587
        %v2849 = vadd.f32 %v2250, %v2590
        %v2850 = vadd.f32 %v2252, %v2592
        %v2851 = vadd.f32 %v2255, %v2595
        %v2852 = vadd.f32 %v2257, %v2597
        %v2853 = vadd.f32 %v2260, %v2600
        %v2854 = vadd.f32 %v2262, %v2602
        %v2855 = vadd.f32 %v2265, %v2605
        %v2856 = vadd.f32 %v2267, %v2607
        %v2857 = vadd.f32 %v2270, %v2610
        %v2858 = vadd.f32 %v2272, %v2612
        %v2859 = vadd.f32 %v2275, %v2615
        %v2860 = vadd.f32 %v2277, %v2617
        %v2861 = vadd.f32 %v2280, %v2620
        %v2862 = vadd.f32 %v2282, %v2622
        %v2863 = vadd.f32 %v2285, %v2625
        %v2864 = vadd.f32 %v2287, %v2627
        %v2865 = vadd.f32 %v2290, %v2630
        %v2866 = vadd.f32 %v2292, %v2632
        %v2867 = vadd.f32 %v2295, %v2635
        %v2868 = vadd.f32 %v2297, %v2637
        %v2869 = vadd.f32 %v2300, %v2640
        %v2870 = vadd.f32 %v2302, %v2642
        %v2871 = vadd.f32 %v2305, %v2645
        %v2872 = vadd.f32 %v2307, %v2647
        %v2873 = vadd.f32 %v2310, %v2650
        %v2874 = vadd.f32 %v2312, %v2652
        %v2875 = vadd.f32 %v2315, %v2655
        %v2876 = vadd.f32 %v2317, %v2657
        %v2877 = vadd.f32 %v2320, %v2660
        %v2878 = vadd.f32 %v2322, %v2662
        %v2879 = vadd.f32 %v2325, %v2665
        %v2880 = vadd.f32 %v2327, %v2667
        %v2881 = vadd.f32 %v2330, %v2670
        %v2882 = vadd.f32 %v2332, %v2672
        %v2883 = vadd.f32 %v2335, %v2675
        %v2884 = vadd.f32 %v2337, %v2677
        %v2885 = vadd.f32 %v2340, %v2680
        %v2886 = vadd.f32 %v2342, %v2682
        %v2887 = vadd.f32 %v2345, %v2685
        %v2888 = vadd.f32 %v2347, %v2687
        %v2889 = vadd.f32 %v2350, %v2690
        %v2890 = vadd.f32 %v2352, %v2692
        %v2891 = vadd.f32 %v2355, %v2695
        %v2892 = vadd.f32 %v2357, %v2697
        %v2893 = vadd.f32 %v2360, %v2700
        %v2894 = vadd.f32 %v2362, %v2702
        %v2895 = vadd.f32 %v2365, %v2705
        %v2896 = vadd.f32 %v2367, %v2707
        %v2897 = vadd.f32 %v2370, %v2710
        %v2898 = vadd.f32 %v2372, %v2712
        %v2899 = vadd.f32 %v2375, %v2715
        %v2900 = vadd.f32 %v2377, %v2717
        %v2901 = vadd.f32 %v2380, %v2720
        %v2902 = vadd.f32 %v2382, %v2722
        %v2903 = vadd.f32 %v2385, %v2725
        %v2904 = vadd.f32 %v2387, %v2727
        %v2905 = vadd.f32 %v2390, %v2730
        %v2906 = vadd.f32 %v2392, %v2732
        %v2907 = vadd.f32 %v2395, %v2735
        %v2908 = vadd.f32 %v2397, %v2737
        %v2909 = vadd.f32 %v2400, %v2740
        %v2910 = vadd.f32 %v2402, %v2742
        %v2911 = vadd.f32 %v2405, %v2745
        %v2912 = vadd.f32 %v2407, %v2747
        %v2913 = vadd.f32 %v2410, %v2750
        %v2914 = vadd.f32 %v2412, %v2752
        %v2915 = vadd.f32 %v2415, %v2755
        %v2916 = vadd.f32 %v2417, %v2757
        %v2917 = vadd.f32 %v2420, %v2760
        %v2918 = vadd.f32 %v2422, %v2762
        %v2919 = vadd.f32 %v2425, %v2765
        %v2920 = vadd.f32 %v2427, %v2767
        %v2921 = vadd.f32 %v2430, %v2770
        %v2922 = vadd.f32 %v2432, %v2772
        %v2923 = vadd.f32 %v2435, %v2775
        %v2924 = vadd.f32 %v2437, %v2777
        %v2925 = vadd.f32 %v2440, %v2780
        %v2926 = vadd.f32 %v2442, %v2782
        %v2927 = vadd.f32 %v2445, %v2785
        %v2928 = vadd.f32 %v2447, %v2787
        %v2929 = vadd.f32 %v2450, %v2790
        %v2930 = vadd.f32 %v2452, %v2792
        %v2931 = vadd.f32 %v2455, %v2795
        %v2932 = vadd.f32 %v2457, %v2797
        %v2933 = vadd.f32 %v2460, %v2800
        %v2934 = vadd.f32 %v2462, %v2802
        %v2935 = vadd.f32 %v2465, %v2805
        %v2936 = vadd.f32 %v2467, %v2807
        %s2937 = scalar_lea.vmem %s219, 2
        %v2938 = vld [vmem:[%s2937] sm:$0x3]
        %v2939 = vsel %vm1602, %v709, 0
        %v2941 = vsel %vm1602, %v710, 0
        %v2943 = vsel %vm1602, %v711, 0
        %v2945 = vsel %vm1602, %v712, 0
        %v2947 = vsel %vm1602, %v713, 0
        %v2949 = vsel %vm1602, %v714, 0
        %v2951 = vsel %vm1602, %v715, 0
        %v2953 = vsel %vm1602, %v716, 0
        %v2955 = vsel %vm1602, %v717, 0
        %v2957 = vsel %vm1602, %v718, 0
        %v2959 = vsel %vm1602, %v719, 0
        %v2961 = vsel %vm1602, %v720, 0
        %v2963 = vsel %vm1602, %v721, 0
        %v2965 = vsel %vm1602, %v722, 0
        %v2967 = vsel %vm1602, %v723, 0
        %v2969 = vsel %vm1602, %v724, 0
        %v2971 = vsel %vm1602, %v725, 0
        %v2973 = vsel %vm1602, %v726, 0
        %v2975 = vsel %vm1602, %v727, 0
        %v2977 = vsel %vm1602, %v728, 0
        %v2979 = vsel %vm1602, %v729, 0
        %v2981 = vsel %vm1602, %v730, 0
        %v2983 = vsel %vm1602, %v731, 0
        %v2985 = vsel %vm1602, %v732, 0
        %v2987 = vsel %vm1602, %v733, 0
        %v2989 = vsel %vm1602, %v734, 0
        %v2991 = vsel %vm1602, %v735, 0
        %v2993 = vsel %vm1602, %v736, 0
        %v2995 = vsel %vm1602, %v737, 0
        %v2997 = vsel %vm1602, %v738, 0
        %v2999 = vsel %vm1602, %v739, 0
        %v3001 = vsel %vm1602, %v740, 0
        %v3003 = vsel %vm1602, %v741, 0
        %v3005 = vsel %vm1602, %v742, 0
        %v3007 = vsel %vm1602, %v743, 0
        %v3009 = vsel %vm1602, %v744, 0
        %v3011 = vsel %vm1602, %v745, 0
        %v3013 = vsel %vm1602, %v746, 0
        %v3015 = vsel %vm1602, %v747, 0
        %v3017 = vsel %vm1602, %v748, 0
        %v3019 = vsel %vm1602, %v749, 0
        %v3021 = vsel %vm1602, %v750, 0
        %v3023 = vsel %vm1602, %v751, 0
        %v3025 = vsel %vm1602, %v752, 0
        %v3027 = vsel %vm1602, %v753, 0
        %v3029 = vsel %vm1602, %v754, 0
        %v3031 = vsel %vm1602, %v755, 0
        %v3033 = vsel %vm1602, %v756, 0
        %v3035 = vsel %vm1602, %v757, 0
        %v3037 = vsel %vm1602, %v758, 0
        %v3039 = vsel %vm1602, %v759, 0
        %v3041 = vsel %vm1602, %v760, 0
        %v3043 = vsel %vm1602, %v761, 0
        %v3045 = vsel %vm1602, %v762, 0
        %v3047 = vsel %vm1602, %v763, 0
        %v3049 = vsel %vm1602, %v764, 0
        %v3051 = vsel %vm1602, %v765, 0
        %v3053 = vsel %vm1602, %v766, 0
        %v3055 = vsel %vm1602, %v767, 0
        %v3057 = vsel %vm1602, %v768, 0
        %v3059 = vsel %vm1602, %v769, 0
        %v3061 = vsel %vm1602, %v770, 0
        %v3063 = vsel %vm1602, %v771, 0
        %v3065 = vsel %vm1602, %v772, 0
        %v3068 = vand.u32 %v2938, %v1798
        %3070 = vmatpush.bf16.msra.mxu0 0
        %3071 = vmatpush.bf16.msra.mxu0 0
        %3072 = vmatpush.bf16.msra.mxu0 0
        %3073 = vmatpush.bf16.msra.mxu0 0
        %3074 = vmatpush.bf16.msra.mxu0 0
        %3075 = vmatpush.bf16.msra.mxu0 0
        %3076 = vmatpush.bf16.msra.mxu0 0
        %3077 = vmatpush.bf16.msra.mxu0 %v3068
        %3078 = vmatmul.bf16.gmra.mxu0 %v2939
        %v3079 = vpop.f32.mrf.mxu0
        %v3080 = vadd.f32 0.0, %v3079
        %v3081 = vpop.f32.mrf.mxu0
        %v3082 = vadd.f32 0.0, %v3081
        %3083 = vmatmul.bf16.gmra.mxu0 %v2941
        %v3084 = vpop.f32.mrf.mxu0
        %v3085 = vadd.f32 0.0, %v3084
        %v3086 = vpop.f32.mrf.mxu0
        %v3087 = vadd.f32 0.0, %v3086
        %3088 = vmatmul.bf16.gmra.mxu0 %v2943
        %v3089 = vpop.f32.mrf.mxu0
        %v3090 = vadd.f32 0.0, %v3089
        %v3091 = vpop.f32.mrf.mxu0
        %v3092 = vadd.f32 0.0, %v3091
        %3093 = vmatmul.bf16.gmra.mxu0 %v2945
        %v3094 = vpop.f32.mrf.mxu0
        %v3095 = vadd.f32 0.0, %v3094
        %v3096 = vpop.f32.mrf.mxu0
        %v3097 = vadd.f32 0.0, %v3096
        %3098 = vmatmul.bf16.gmra.mxu0 %v2947
        %v3099 = vpop.f32.mrf.mxu0
        %v3100 = vadd.f32 0.0, %v3099
        %v3101 = vpop.f32.mrf.mxu0
        %v3102 = vadd.f32 0.0, %v3101
        %3103 = vmatmul.bf16.gmra.mxu0 %v2949
        %v3104 = vpop.f32.mrf.mxu0
        %v3105 = vadd.f32 0.0, %v3104
        %v3106 = vpop.f32.mrf.mxu0
        %v3107 = vadd.f32 0.0, %v3106
        %3108 = vmatmul.bf16.gmra.mxu0 %v2951
        %v3109 = vpop.f32.mrf.mxu0
        %v3110 = vadd.f32 0.0, %v3109
        %v3111 = vpop.f32.mrf.mxu0
        %v3112 = vadd.f32 0.0, %v3111
        %3113 = vmatmul.bf16.gmra.mxu0 %v2953
        %v3114 = vpop.f32.mrf.mxu0
        %v3115 = vadd.f32 0.0, %v3114
        %v3116 = vpop.f32.mrf.mxu0
        %v3117 = vadd.f32 0.0, %v3116
        %3118 = vmatmul.bf16.gmra.mxu0 %v2955
        %v3119 = vpop.f32.mrf.mxu0
        %v3120 = vadd.f32 0.0, %v3119
        %v3121 = vpop.f32.mrf.mxu0
        %v3122 = vadd.f32 0.0, %v3121
        %3123 = vmatmul.bf16.gmra.mxu0 %v2957
        %v3124 = vpop.f32.mrf.mxu0
        %v3125 = vadd.f32 0.0, %v3124
        %v3126 = vpop.f32.mrf.mxu0
        %v3127 = vadd.f32 0.0, %v3126
        %3128 = vmatmul.bf16.gmra.mxu0 %v2959
        %v3129 = vpop.f32.mrf.mxu0
        %v3130 = vadd.f32 0.0, %v3129
        %v3131 = vpop.f32.mrf.mxu0
        %v3132 = vadd.f32 0.0, %v3131
        %3133 = vmatmul.bf16.gmra.mxu0 %v2961
        %v3134 = vpop.f32.mrf.mxu0
        %v3135 = vadd.f32 0.0, %v3134
        %v3136 = vpop.f32.mrf.mxu0
        %v3137 = vadd.f32 0.0, %v3136
        %3138 = vmatmul.bf16.gmra.mxu0 %v2963
        %v3139 = vpop.f32.mrf.mxu0
        %v3140 = vadd.f32 0.0, %v3139
        %v3141 = vpop.f32.mrf.mxu0
        %v3142 = vadd.f32 0.0, %v3141
        %3143 = vmatmul.bf16.gmra.mxu0 %v2965
        %v3144 = vpop.f32.mrf.mxu0
        %v3145 = vadd.f32 0.0, %v3144
        %v3146 = vpop.f32.mrf.mxu0
        %v3147 = vadd.f32 0.0, %v3146
        %3148 = vmatmul.bf16.gmra.mxu0 %v2967
        %v3149 = vpop.f32.mrf.mxu0
        %v3150 = vadd.f32 0.0, %v3149
        %v3151 = vpop.f32.mrf.mxu0
        %v3152 = vadd.f32 0.0, %v3151
        %3153 = vmatmul.bf16.gmra.mxu0 %v2969
        %v3154 = vpop.f32.mrf.mxu0
        %v3155 = vadd.f32 0.0, %v3154
        %v3156 = vpop.f32.mrf.mxu0
        %v3157 = vadd.f32 0.0, %v3156
        %3158 = vmatmul.bf16.gmra.mxu0 %v2971
        %v3159 = vpop.f32.mrf.mxu0
        %v3160 = vadd.f32 0.0, %v3159
        %v3161 = vpop.f32.mrf.mxu0
        %v3162 = vadd.f32 0.0, %v3161
        %3163 = vmatmul.bf16.gmra.mxu0 %v2973
        %v3164 = vpop.f32.mrf.mxu0
        %v3165 = vadd.f32 0.0, %v3164
        %v3166 = vpop.f32.mrf.mxu0
        %v3167 = vadd.f32 0.0, %v3166
        %3168 = vmatmul.bf16.gmra.mxu0 %v2975
        %v3169 = vpop.f32.mrf.mxu0
        %v3170 = vadd.f32 0.0, %v3169
        %v3171 = vpop.f32.mrf.mxu0
        %v3172 = vadd.f32 0.0, %v3171
        %3173 = vmatmul.bf16.gmra.mxu0 %v2977
        %v3174 = vpop.f32.mrf.mxu0
        %v3175 = vadd.f32 0.0, %v3174
        %v3176 = vpop.f32.mrf.mxu0
        %v3177 = vadd.f32 0.0, %v3176
        %3178 = vmatmul.bf16.gmra.mxu0 %v2979
        %v3179 = vpop.f32.mrf.mxu0
        %v3180 = vadd.f32 0.0, %v3179
        %v3181 = vpop.f32.mrf.mxu0
        %v3182 = vadd.f32 0.0, %v3181
        %3183 = vmatmul.bf16.gmra.mxu0 %v2981
        %v3184 = vpop.f32.mrf.mxu0
        %v3185 = vadd.f32 0.0, %v3184
        %v3186 = vpop.f32.mrf.mxu0
        %v3187 = vadd.f32 0.0, %v3186
        %3188 = vmatmul.bf16.gmra.mxu0 %v2983
        %v3189 = vpop.f32.mrf.mxu0
        %v3190 = vadd.f32 0.0, %v3189
        %v3191 = vpop.f32.mrf.mxu0
        %v3192 = vadd.f32 0.0, %v3191
        %3193 = vmatmul.bf16.gmra.mxu0 %v2985
        %v3194 = vpop.f32.mrf.mxu0
        %v3195 = vadd.f32 0.0, %v3194
        %v3196 = vpop.f32.mrf.mxu0
        %v3197 = vadd.f32 0.0, %v3196
        %3198 = vmatmul.bf16.gmra.mxu0 %v2987
        %v3199 = vpop.f32.mrf.mxu0
        %v3200 = vadd.f32 0.0, %v3199
        %v3201 = vpop.f32.mrf.mxu0
        %v3202 = vadd.f32 0.0, %v3201
        %3203 = vmatmul.bf16.gmra.mxu0 %v2989
        %v3204 = vpop.f32.mrf.mxu0
        %v3205 = vadd.f32 0.0, %v3204
        %v3206 = vpop.f32.mrf.mxu0
        %v3207 = vadd.f32 0.0, %v3206
        %3208 = vmatmul.bf16.gmra.mxu0 %v2991
        %v3209 = vpop.f32.mrf.mxu0
        %v3210 = vadd.f32 0.0, %v3209
        %v3211 = vpop.f32.mrf.mxu0
        %v3212 = vadd.f32 0.0, %v3211
        %3213 = vmatmul.bf16.gmra.mxu0 %v2993
        %v3214 = vpop.f32.mrf.mxu0
        %v3215 = vadd.f32 0.0, %v3214
        %v3216 = vpop.f32.mrf.mxu0
        %v3217 = vadd.f32 0.0, %v3216
        %3218 = vmatmul.bf16.gmra.mxu0 %v2995
        %v3219 = vpop.f32.mrf.mxu0
        %v3220 = vadd.f32 0.0, %v3219
        %v3221 = vpop.f32.mrf.mxu0
        %v3222 = vadd.f32 0.0, %v3221
        %3223 = vmatmul.bf16.gmra.mxu0 %v2997
        %v3224 = vpop.f32.mrf.mxu0
        %v3225 = vadd.f32 0.0, %v3224
        %v3226 = vpop.f32.mrf.mxu0
        %v3227 = vadd.f32 0.0, %v3226
        %3228 = vmatmul.bf16.gmra.mxu0 %v2999
        %v3229 = vpop.f32.mrf.mxu0
        %v3230 = vadd.f32 0.0, %v3229
        %v3231 = vpop.f32.mrf.mxu0
        %v3232 = vadd.f32 0.0, %v3231
        %3233 = vmatmul.bf16.gmra.mxu0 %v3001
        %v3234 = vpop.f32.mrf.mxu0
        %v3235 = vadd.f32 0.0, %v3234
        %v3236 = vpop.f32.mrf.mxu0
        %v3237 = vadd.f32 0.0, %v3236
        %3238 = vmatmul.bf16.gmra.mxu0 %v3003
        %v3239 = vpop.f32.mrf.mxu0
        %v3240 = vadd.f32 0.0, %v3239
        %v3241 = vpop.f32.mrf.mxu0
        %v3242 = vadd.f32 0.0, %v3241
        %3243 = vmatmul.bf16.gmra.mxu0 %v3005
        %v3244 = vpop.f32.mrf.mxu0
        %v3245 = vadd.f32 0.0, %v3244
        %v3246 = vpop.f32.mrf.mxu0
        %v3247 = vadd.f32 0.0, %v3246
        %3248 = vmatmul.bf16.gmra.mxu0 %v3007
        %v3249 = vpop.f32.mrf.mxu0
        %v3250 = vadd.f32 0.0, %v3249
        %v3251 = vpop.f32.mrf.mxu0
        %v3252 = vadd.f32 0.0, %v3251
        %3253 = vmatmul.bf16.gmra.mxu0 %v3009
        %v3254 = vpop.f32.mrf.mxu0
        %v3255 = vadd.f32 0.0, %v3254
        %v3256 = vpop.f32.mrf.mxu0
        %v3257 = vadd.f32 0.0, %v3256
        %3258 = vmatmul.bf16.gmra.mxu0 %v3011
        %v3259 = vpop.f32.mrf.mxu0
        %v3260 = vadd.f32 0.0, %v3259
        %v3261 = vpop.f32.mrf.mxu0
        %v3262 = vadd.f32 0.0, %v3261
        %3263 = vmatmul.bf16.gmra.mxu0 %v3013
        %v3264 = vpop.f32.mrf.mxu0
        %v3265 = vadd.f32 0.0, %v3264
        %v3266 = vpop.f32.mrf.mxu0
        %v3267 = vadd.f32 0.0, %v3266
        %3268 = vmatmul.bf16.gmra.mxu0 %v3015
        %v3269 = vpop.f32.mrf.mxu0
        %v3270 = vadd.f32 0.0, %v3269
        %v3271 = vpop.f32.mrf.mxu0
        %v3272 = vadd.f32 0.0, %v3271
        %3273 = vmatmul.bf16.gmra.mxu0 %v3017
        %v3274 = vpop.f32.mrf.mxu0
        %v3275 = vadd.f32 0.0, %v3274
        %v3276 = vpop.f32.mrf.mxu0
        %v3277 = vadd.f32 0.0, %v3276
        %3278 = vmatmul.bf16.gmra.mxu0 %v3019
        %v3279 = vpop.f32.mrf.mxu0
        %v3280 = vadd.f32 0.0, %v3279
        %v3281 = vpop.f32.mrf.mxu0
        %v3282 = vadd.f32 0.0, %v3281
        %3283 = vmatmul.bf16.gmra.mxu0 %v3021
        %v3284 = vpop.f32.mrf.mxu0
        %v3285 = vadd.f32 0.0, %v3284
        %v3286 = vpop.f32.mrf.mxu0
        %v3287 = vadd.f32 0.0, %v3286
        %3288 = vmatmul.bf16.gmra.mxu0 %v3023
        %v3289 = vpop.f32.mrf.mxu0
        %v3290 = vadd.f32 0.0, %v3289
        %v3291 = vpop.f32.mrf.mxu0
        %v3292 = vadd.f32 0.0, %v3291
        %3293 = vmatmul.bf16.gmra.mxu0 %v3025
        %v3294 = vpop.f32.mrf.mxu0
        %v3295 = vadd.f32 0.0, %v3294
        %v3296 = vpop.f32.mrf.mxu0
        %v3297 = vadd.f32 0.0, %v3296
        %3298 = vmatmul.bf16.gmra.mxu0 %v3027
        %v3299 = vpop.f32.mrf.mxu0
        %v3300 = vadd.f32 0.0, %v3299
        %v3301 = vpop.f32.mrf.mxu0
        %v3302 = vadd.f32 0.0, %v3301
        %3303 = vmatmul.bf16.gmra.mxu0 %v3029
        %v3304 = vpop.f32.mrf.mxu0
        %v3305 = vadd.f32 0.0, %v3304
        %v3306 = vpop.f32.mrf.mxu0
        %v3307 = vadd.f32 0.0, %v3306
        %3308 = vmatmul.bf16.gmra.mxu0 %v3031
        %v3309 = vpop.f32.mrf.mxu0
        %v3310 = vadd.f32 0.0, %v3309
        %v3311 = vpop.f32.mrf.mxu0
        %v3312 = vadd.f32 0.0, %v3311
        %3313 = vmatmul.bf16.gmra.mxu0 %v3033
        %v3314 = vpop.f32.mrf.mxu0
        %v3315 = vadd.f32 0.0, %v3314
        %v3316 = vpop.f32.mrf.mxu0
        %v3317 = vadd.f32 0.0, %v3316
        %3318 = vmatmul.bf16.gmra.mxu0 %v3035
        %v3319 = vpop.f32.mrf.mxu0
        %v3320 = vadd.f32 0.0, %v3319
        %v3321 = vpop.f32.mrf.mxu0
        %v3322 = vadd.f32 0.0, %v3321
        %3323 = vmatmul.bf16.gmra.mxu0 %v3037
        %v3324 = vpop.f32.mrf.mxu0
        %v3325 = vadd.f32 0.0, %v3324
        %v3326 = vpop.f32.mrf.mxu0
        %v3327 = vadd.f32 0.0, %v3326
        %3328 = vmatmul.bf16.gmra.mxu0 %v3039
        %v3329 = vpop.f32.mrf.mxu0
        %v3330 = vadd.f32 0.0, %v3329
        %v3331 = vpop.f32.mrf.mxu0
        %v3332 = vadd.f32 0.0, %v3331
        %3333 = vmatmul.bf16.gmra.mxu0 %v3041
        %v3334 = vpop.f32.mrf.mxu0
        %v3335 = vadd.f32 0.0, %v3334
        %v3336 = vpop.f32.mrf.mxu0
        %v3337 = vadd.f32 0.0, %v3336
        %3338 = vmatmul.bf16.gmra.mxu0 %v3043
        %v3339 = vpop.f32.mrf.mxu0
        %v3340 = vadd.f32 0.0, %v3339
        %v3341 = vpop.f32.mrf.mxu0
        %v3342 = vadd.f32 0.0, %v3341
        %3343 = vmatmul.bf16.gmra.mxu0 %v3045
        %v3344 = vpop.f32.mrf.mxu0
        %v3345 = vadd.f32 0.0, %v3344
        %v3346 = vpop.f32.mrf.mxu0
        %v3347 = vadd.f32 0.0, %v3346
        %3348 = vmatmul.bf16.gmra.mxu0 %v3047
        %v3349 = vpop.f32.mrf.mxu0
        %v3350 = vadd.f32 0.0, %v3349
        %v3351 = vpop.f32.mrf.mxu0
        %v3352 = vadd.f32 0.0, %v3351
        %3353 = vmatmul.bf16.gmra.mxu0 %v3049
        %v3354 = vpop.f32.mrf.mxu0
        %v3355 = vadd.f32 0.0, %v3354
        %v3356 = vpop.f32.mrf.mxu0
        %v3357 = vadd.f32 0.0, %v3356
        %3358 = vmatmul.bf16.gmra.mxu0 %v3051
        %v3359 = vpop.f32.mrf.mxu0
        %v3360 = vadd.f32 0.0, %v3359
        %v3361 = vpop.f32.mrf.mxu0
        %v3362 = vadd.f32 0.0, %v3361
        %3363 = vmatmul.bf16.gmra.mxu0 %v3053
        %v3364 = vpop.f32.mrf.mxu0
        %v3365 = vadd.f32 0.0, %v3364
        %v3366 = vpop.f32.mrf.mxu0
        %v3367 = vadd.f32 0.0, %v3366
        %3368 = vmatmul.bf16.gmra.mxu0 %v3055
        %v3369 = vpop.f32.mrf.mxu0
        %v3370 = vadd.f32 0.0, %v3369
        %v3371 = vpop.f32.mrf.mxu0
        %v3372 = vadd.f32 0.0, %v3371
        %3373 = vmatmul.bf16.gmra.mxu0 %v3057
        %v3374 = vpop.f32.mrf.mxu0
        %v3375 = vadd.f32 0.0, %v3374
        %v3376 = vpop.f32.mrf.mxu0
        %v3377 = vadd.f32 0.0, %v3376
        %3378 = vmatmul.bf16.gmra.mxu0 %v3059
        %v3379 = vpop.f32.mrf.mxu0
        %v3380 = vadd.f32 0.0, %v3379
        %v3381 = vpop.f32.mrf.mxu0
        %v3382 = vadd.f32 0.0, %v3381
        %3383 = vmatmul.bf16.gmra.mxu0 %v3061
        %v3384 = vpop.f32.mrf.mxu0
        %v3385 = vadd.f32 0.0, %v3384
        %v3386 = vpop.f32.mrf.mxu0
        %v3387 = vadd.f32 0.0, %v3386
        %3388 = vmatmul.bf16.gmra.mxu0 %v3063
        %v3389 = vpop.f32.mrf.mxu0
        %v3390 = vadd.f32 0.0, %v3389
        %v3391 = vpop.f32.mrf.mxu0
        %v3392 = vadd.f32 0.0, %v3391
        %3393 = vmatmul.bf16.gmra.mxu0 %v3065
        %v3394 = vpop.f32.mrf.mxu0
        %v3395 = vadd.f32 0.0, %v3394
        %v3396 = vpop.f32.mrf.mxu0
        %v3397 = vadd.f32 0.0, %v3396
        %3398 = vdwg.mxu0
        %v3399 = vadd.f32 %v2809, %v3080
        %v3400 = vadd.f32 %v2810, %v3082
        %v3401 = vadd.f32 %v2811, %v3085
        %v3402 = vadd.f32 %v2812, %v3087
        %v3403 = vadd.f32 %v2813, %v3090
        %v3404 = vadd.f32 %v2814, %v3092
        %v3405 = vadd.f32 %v2815, %v3095
        %v3406 = vadd.f32 %v2816, %v3097
        %v3407 = vadd.f32 %v2817, %v3100
        %v3408 = vadd.f32 %v2818, %v3102
        %v3409 = vadd.f32 %v2819, %v3105
        %v3410 = vadd.f32 %v2820, %v3107
        %v3411 = vadd.f32 %v2821, %v3110
        %v3412 = vadd.f32 %v2822, %v3112
        %v3413 = vadd.f32 %v2823, %v3115
        %v3414 = vadd.f32 %v2824, %v3117
        %v3415 = vadd.f32 %v2825, %v3120
        %v3416 = vadd.f32 %v2826, %v3122
        %v3417 = vadd.f32 %v2827, %v3125
        %v3418 = vadd.f32 %v2828, %v3127
        %v3419 = vadd.f32 %v2829, %v3130
        %v3420 = vadd.f32 %v2830, %v3132
        %v3421 = vadd.f32 %v2831, %v3135
        %v3422 = vadd.f32 %v2832, %v3137
        %v3423 = vadd.f32 %v2833, %v3140
        %v3424 = vadd.f32 %v2834, %v3142
        %v3425 = vadd.f32 %v2835, %v3145
        %v3426 = vadd.f32 %v2836, %v3147
        %v3427 = vadd.f32 %v2837, %v3150
        %v3428 = vadd.f32 %v2838, %v3152
        %v3429 = vadd.f32 %v2839, %v3155
        %v3430 = vadd.f32 %v2840, %v3157
        %v3431 = vadd.f32 %v2841, %v3160
        %v3432 = vadd.f32 %v2842, %v3162
        %v3433 = vadd.f32 %v2843, %v3165
        %v3434 = vadd.f32 %v2844, %v3167
        %v3435 = vadd.f32 %v2845, %v3170
        %v3436 = vadd.f32 %v2846, %v3172
        %v3437 = vadd.f32 %v2847, %v3175
        %v3438 = vadd.f32 %v2848, %v3177
        %v3439 = vadd.f32 %v2849, %v3180
        %v3440 = vadd.f32 %v2850, %v3182
        %v3441 = vadd.f32 %v2851, %v3185
        %v3442 = vadd.f32 %v2852, %v3187
        %v3443 = vadd.f32 %v2853, %v3190
        %v3444 = vadd.f32 %v2854, %v3192
        %v3445 = vadd.f32 %v2855, %v3195
        %v3446 = vadd.f32 %v2856, %v3197
        %v3447 = vadd.f32 %v2857, %v3200
        %v3448 = vadd.f32 %v2858, %v3202
        %v3449 = vadd.f32 %v2859, %v3205
        %v3450 = vadd.f32 %v2860, %v3207
        %v3451 = vadd.f32 %v2861, %v3210
        %v3452 = vadd.f32 %v2862, %v3212
        %v3453 = vadd.f32 %v2863, %v3215
        %v3454 = vadd.f32 %v2864, %v3217
        %v3455 = vadd.f32 %v2865, %v3220
        %v3456 = vadd.f32 %v2866, %v3222
        %v3457 = vadd.f32 %v2867, %v3225
        %v3458 = vadd.f32 %v2868, %v3227
        %v3459 = vadd.f32 %v2869, %v3230
        %v3460 = vadd.f32 %v2870, %v3232
        %v3461 = vadd.f32 %v2871, %v3235
        %v3462 = vadd.f32 %v2872, %v3237
        %v3463 = vadd.f32 %v2873, %v3240
        %v3464 = vadd.f32 %v2874, %v3242
        %v3465 = vadd.f32 %v2875, %v3245
        %v3466 = vadd.f32 %v2876, %v3247
        %v3467 = vadd.f32 %v2877, %v3250
        %v3468 = vadd.f32 %v2878, %v3252
        %v3469 = vadd.f32 %v2879, %v3255
        %v3470 = vadd.f32 %v2880, %v3257
        %v3471 = vadd.f32 %v2881, %v3260
        %v3472 = vadd.f32 %v2882, %v3262
        %v3473 = vadd.f32 %v2883, %v3265
        %v3474 = vadd.f32 %v2884, %v3267
        %v3475 = vadd.f32 %v2885, %v3270
        %v3476 = vadd.f32 %v2886, %v3272
        %v3477 = vadd.f32 %v2887, %v3275
        %v3478 = vadd.f32 %v2888, %v3277
        %v3479 = vadd.f32 %v2889, %v3280
        %v3480 = vadd.f32 %v2890, %v3282
        %v3481 = vadd.f32 %v2891, %v3285
        %v3482 = vadd.f32 %v2892, %v3287
        %v3483 = vadd.f32 %v2893, %v3290
        %v3484 = vadd.f32 %v2894, %v3292
        %v3485 = vadd.f32 %v2895, %v3295
        %v3486 = vadd.f32 %v2896, %v3297
        %v3487 = vadd.f32 %v2897, %v3300
        %v3488 = vadd.f32 %v2898, %v3302
        %v3489 = vadd.f32 %v2899, %v3305
        %v3490 = vadd.f32 %v2900, %v3307
        %v3491 = vadd.f32 %v2901, %v3310
        %v3492 = vadd.f32 %v2902, %v3312
        %v3493 = vadd.f32 %v2903, %v3315
        %v3494 = vadd.f32 %v2904, %v3317
        %v3495 = vadd.f32 %v2905, %v3320
        %v3496 = vadd.f32 %v2906, %v3322
        %v3497 = vadd.f32 %v2907, %v3325
        %v3498 = vadd.f32 %v2908, %v3327
        %v3499 = vadd.f32 %v2909, %v3330
        %v3500 = vadd.f32 %v2910, %v3332
        %v3501 = vadd.f32 %v2911, %v3335
        %v3502 = vadd.f32 %v2912, %v3337
        %v3503 = vadd.f32 %v2913, %v3340
        %v3504 = vadd.f32 %v2914, %v3342
        %v3505 = vadd.f32 %v2915, %v3345
        %v3506 = vadd.f32 %v2916, %v3347
        %v3507 = vadd.f32 %v2917, %v3350
        %v3508 = vadd.f32 %v2918, %v3352
        %v3509 = vadd.f32 %v2919, %v3355
        %v3510 = vadd.f32 %v2920, %v3357
        %v3511 = vadd.f32 %v2921, %v3360
        %v3512 = vadd.f32 %v2922, %v3362
        %v3513 = vadd.f32 %v2923, %v3365
        %v3514 = vadd.f32 %v2924, %v3367
        %v3515 = vadd.f32 %v2925, %v3370
        %v3516 = vadd.f32 %v2926, %v3372
        %v3517 = vadd.f32 %v2927, %v3375
        %v3518 = vadd.f32 %v2928, %v3377
        %v3519 = vadd.f32 %v2929, %v3380
        %v3520 = vadd.f32 %v2930, %v3382
        %v3521 = vadd.f32 %v2931, %v3385
        %v3522 = vadd.f32 %v2932, %v3387
        %v3523 = vadd.f32 %v2933, %v3390
        %v3524 = vadd.f32 %v2934, %v3392
        %v3525 = vadd.f32 %v2935, %v3395
        %v3526 = vadd.f32 %v2936, %v3397
        %s3527 = scalar_lea.vmem %s219, 8
        %v3528 = vld [vmem:[%s3527] sm:$0x3]
        %v3529 = vsel %vm1602, %v773, 0
        %v3531 = vsel %vm1602, %v774, 0
        %v3534 = vand.u32 %v3528, %v1798
        %3536 = vmatpush.bf16.msra.mxu0 0
        %3537 = vmatpush.bf16.msra.mxu0 0
        %3538 = vmatpush.bf16.msra.mxu0 0
        %3539 = vmatpush.bf16.msra.mxu0 0
        %3540 = vmatpush.bf16.msra.mxu0 0
        %3541 = vmatpush.bf16.msra.mxu0 0
        %3542 = vmatpush.bf16.msra.mxu0 0
        %3543 = vmatpush.bf16.msra.mxu0 %v3534
        %3544 = vmatmul.bf16.gmra.mxu0 %v2943
        %v3545 = vpop.f32.mrf.mxu0
        %v3546 = vadd.f32 0.0, %v3545
        %v3547 = vpop.f32.mrf.mxu0
        %v3548 = vadd.f32 0.0, %v3547
        %3549 = vmatmul.bf16.gmra.mxu0 %v2945
        %v3550 = vpop.f32.mrf.mxu0
        %v3551 = vadd.f32 0.0, %v3550
        %v3552 = vpop.f32.mrf.mxu0
        %v3553 = vadd.f32 0.0, %v3552
        %3554 = vmatmul.bf16.gmra.mxu0 %v2947
        %v3555 = vpop.f32.mrf.mxu0
        %v3556 = vadd.f32 0.0, %v3555
        %v3557 = vpop.f32.mrf.mxu0
        %v3558 = vadd.f32 0.0, %v3557
        %3559 = vmatmul.bf16.gmra.mxu0 %v2949
        %v3560 = vpop.f32.mrf.mxu0
        %v3561 = vadd.f32 0.0, %v3560
        %v3562 = vpop.f32.mrf.mxu0
        %v3563 = vadd.f32 0.0, %v3562
        %3564 = vmatmul.bf16.gmra.mxu0 %v2951
        %v3565 = vpop.f32.mrf.mxu0
        %v3566 = vadd.f32 0.0, %v3565
        %v3567 = vpop.f32.mrf.mxu0
        %v3568 = vadd.f32 0.0, %v3567
        %3569 = vmatmul.bf16.gmra.mxu0 %v2953
        %v3570 = vpop.f32.mrf.mxu0
        %v3571 = vadd.f32 0.0, %v3570
        %v3572 = vpop.f32.mrf.mxu0
        %v3573 = vadd.f32 0.0, %v3572
        %3574 = vmatmul.bf16.gmra.mxu0 %v2955
        %v3575 = vpop.f32.mrf.mxu0
        %v3576 = vadd.f32 0.0, %v3575
        %v3577 = vpop.f32.mrf.mxu0
        %v3578 = vadd.f32 0.0, %v3577
        %3579 = vmatmul.bf16.gmra.mxu0 %v2957
        %v3580 = vpop.f32.mrf.mxu0
        %v3581 = vadd.f32 0.0, %v3580
        %v3582 = vpop.f32.mrf.mxu0
        %v3583 = vadd.f32 0.0, %v3582
        %3584 = vmatmul.bf16.gmra.mxu0 %v2959
        %v3585 = vpop.f32.mrf.mxu0
        %v3586 = vadd.f32 0.0, %v3585
        %v3587 = vpop.f32.mrf.mxu0
        %v3588 = vadd.f32 0.0, %v3587
        %3589 = vmatmul.bf16.gmra.mxu0 %v2961
        %v3590 = vpop.f32.mrf.mxu0
        %v3591 = vadd.f32 0.0, %v3590
        %v3592 = vpop.f32.mrf.mxu0
        %v3593 = vadd.f32 0.0, %v3592
        %3594 = vmatmul.bf16.gmra.mxu0 %v2963
        %v3595 = vpop.f32.mrf.mxu0
        %v3596 = vadd.f32 0.0, %v3595
        %v3597 = vpop.f32.mrf.mxu0
        %v3598 = vadd.f32 0.0, %v3597
        %3599 = vmatmul.bf16.gmra.mxu0 %v2965
        %v3600 = vpop.f32.mrf.mxu0
        %v3601 = vadd.f32 0.0, %v3600
        %v3602 = vpop.f32.mrf.mxu0
        %v3603 = vadd.f32 0.0, %v3602
        %3604 = vmatmul.bf16.gmra.mxu0 %v2967
        %v3605 = vpop.f32.mrf.mxu0
        %v3606 = vadd.f32 0.0, %v3605
        %v3607 = vpop.f32.mrf.mxu0
        %v3608 = vadd.f32 0.0, %v3607
        %3609 = vmatmul.bf16.gmra.mxu0 %v2969
        %v3610 = vpop.f32.mrf.mxu0
        %v3611 = vadd.f32 0.0, %v3610
        %v3612 = vpop.f32.mrf.mxu0
        %v3613 = vadd.f32 0.0, %v3612
        %3614 = vmatmul.bf16.gmra.mxu0 %v2971
        %v3615 = vpop.f32.mrf.mxu0
        %v3616 = vadd.f32 0.0, %v3615
        %v3617 = vpop.f32.mrf.mxu0
        %v3618 = vadd.f32 0.0, %v3617
        %3619 = vmatmul.bf16.gmra.mxu0 %v2973
        %v3620 = vpop.f32.mrf.mxu0
        %v3621 = vadd.f32 0.0, %v3620
        %v3622 = vpop.f32.mrf.mxu0
        %v3623 = vadd.f32 0.0, %v3622
        %3624 = vmatmul.bf16.gmra.mxu0 %v2975
        %v3625 = vpop.f32.mrf.mxu0
        %v3626 = vadd.f32 0.0, %v3625
        %v3627 = vpop.f32.mrf.mxu0
        %v3628 = vadd.f32 0.0, %v3627
        %3629 = vmatmul.bf16.gmra.mxu0 %v2977
        %v3630 = vpop.f32.mrf.mxu0
        %v3631 = vadd.f32 0.0, %v3630
        %v3632 = vpop.f32.mrf.mxu0
        %v3633 = vadd.f32 0.0, %v3632
        %3634 = vmatmul.bf16.gmra.mxu0 %v2979
        %v3635 = vpop.f32.mrf.mxu0
        %v3636 = vadd.f32 0.0, %v3635
        %v3637 = vpop.f32.mrf.mxu0
        %v3638 = vadd.f32 0.0, %v3637
        %3639 = vmatmul.bf16.gmra.mxu0 %v2981
        %v3640 = vpop.f32.mrf.mxu0
        %v3641 = vadd.f32 0.0, %v3640
        %v3642 = vpop.f32.mrf.mxu0
        %v3643 = vadd.f32 0.0, %v3642
        %3644 = vmatmul.bf16.gmra.mxu0 %v2983
        %v3645 = vpop.f32.mrf.mxu0
        %v3646 = vadd.f32 0.0, %v3645
        %v3647 = vpop.f32.mrf.mxu0
        %v3648 = vadd.f32 0.0, %v3647
        %3649 = vmatmul.bf16.gmra.mxu0 %v2985
        %v3650 = vpop.f32.mrf.mxu0
        %v3651 = vadd.f32 0.0, %v3650
        %v3652 = vpop.f32.mrf.mxu0
        %v3653 = vadd.f32 0.0, %v3652
        %3654 = vmatmul.bf16.gmra.mxu0 %v2987
        %v3655 = vpop.f32.mrf.mxu0
        %v3656 = vadd.f32 0.0, %v3655
        %v3657 = vpop.f32.mrf.mxu0
        %v3658 = vadd.f32 0.0, %v3657
        %3659 = vmatmul.bf16.gmra.mxu0 %v2989
        %v3660 = vpop.f32.mrf.mxu0
        %v3661 = vadd.f32 0.0, %v3660
        %v3662 = vpop.f32.mrf.mxu0
        %v3663 = vadd.f32 0.0, %v3662
        %3664 = vmatmul.bf16.gmra.mxu0 %v2991
        %v3665 = vpop.f32.mrf.mxu0
        %v3666 = vadd.f32 0.0, %v3665
        %v3667 = vpop.f32.mrf.mxu0
        %v3668 = vadd.f32 0.0, %v3667
        %3669 = vmatmul.bf16.gmra.mxu0 %v2993
        %v3670 = vpop.f32.mrf.mxu0
        %v3671 = vadd.f32 0.0, %v3670
        %v3672 = vpop.f32.mrf.mxu0
        %v3673 = vadd.f32 0.0, %v3672
        %3674 = vmatmul.bf16.gmra.mxu0 %v2995
        %v3675 = vpop.f32.mrf.mxu0
        %v3676 = vadd.f32 0.0, %v3675
        %v3677 = vpop.f32.mrf.mxu0
        %v3678 = vadd.f32 0.0, %v3677
        %3679 = vmatmul.bf16.gmra.mxu0 %v2997
        %v3680 = vpop.f32.mrf.mxu0
        %v3681 = vadd.f32 0.0, %v3680
        %v3682 = vpop.f32.mrf.mxu0
        %v3683 = vadd.f32 0.0, %v3682
        %3684 = vmatmul.bf16.gmra.mxu0 %v2999
        %v3685 = vpop.f32.mrf.mxu0
        %v3686 = vadd.f32 0.0, %v3685
        %v3687 = vpop.f32.mrf.mxu0
        %v3688 = vadd.f32 0.0, %v3687
        %3689 = vmatmul.bf16.gmra.mxu0 %v3001
        %v3690 = vpop.f32.mrf.mxu0
        %v3691 = vadd.f32 0.0, %v3690
        %v3692 = vpop.f32.mrf.mxu0
        %v3693 = vadd.f32 0.0, %v3692
        %3694 = vmatmul.bf16.gmra.mxu0 %v3003
        %v3695 = vpop.f32.mrf.mxu0
        %v3696 = vadd.f32 0.0, %v3695
        %v3697 = vpop.f32.mrf.mxu0
        %v3698 = vadd.f32 0.0, %v3697
        %3699 = vmatmul.bf16.gmra.mxu0 %v3005
        %v3700 = vpop.f32.mrf.mxu0
        %v3701 = vadd.f32 0.0, %v3700
        %v3702 = vpop.f32.mrf.mxu0
        %v3703 = vadd.f32 0.0, %v3702
        %3704 = vmatmul.bf16.gmra.mxu0 %v3007
        %v3705 = vpop.f32.mrf.mxu0
        %v3706 = vadd.f32 0.0, %v3705
        %v3707 = vpop.f32.mrf.mxu0
        %v3708 = vadd.f32 0.0, %v3707
        %3709 = vmatmul.bf16.gmra.mxu0 %v3009
        %v3710 = vpop.f32.mrf.mxu0
        %v3711 = vadd.f32 0.0, %v3710
        %v3712 = vpop.f32.mrf.mxu0
        %v3713 = vadd.f32 0.0, %v3712
        %3714 = vmatmul.bf16.gmra.mxu0 %v3011
        %v3715 = vpop.f32.mrf.mxu0
        %v3716 = vadd.f32 0.0, %v3715
        %v3717 = vpop.f32.mrf.mxu0
        %v3718 = vadd.f32 0.0, %v3717
        %3719 = vmatmul.bf16.gmra.mxu0 %v3013
        %v3720 = vpop.f32.mrf.mxu0
        %v3721 = vadd.f32 0.0, %v3720
        %v3722 = vpop.f32.mrf.mxu0
        %v3723 = vadd.f32 0.0, %v3722
        %3724 = vmatmul.bf16.gmra.mxu0 %v3015
        %v3725 = vpop.f32.mrf.mxu0
        %v3726 = vadd.f32 0.0, %v3725
        %v3727 = vpop.f32.mrf.mxu0
        %v3728 = vadd.f32 0.0, %v3727
        %3729 = vmatmul.bf16.gmra.mxu0 %v3017
        %v3730 = vpop.f32.mrf.mxu0
        %v3731 = vadd.f32 0.0, %v3730
        %v3732 = vpop.f32.mrf.mxu0
        %v3733 = vadd.f32 0.0, %v3732
        %3734 = vmatmul.bf16.gmra.mxu0 %v3019
        %v3735 = vpop.f32.mrf.mxu0
        %v3736 = vadd.f32 0.0, %v3735
        %v3737 = vpop.f32.mrf.mxu0
        %v3738 = vadd.f32 0.0, %v3737
        %3739 = vmatmul.bf16.gmra.mxu0 %v3021
        %v3740 = vpop.f32.mrf.mxu0
        %v3741 = vadd.f32 0.0, %v3740
        %v3742 = vpop.f32.mrf.mxu0
        %v3743 = vadd.f32 0.0, %v3742
        %3744 = vmatmul.bf16.gmra.mxu0 %v3023
        %v3745 = vpop.f32.mrf.mxu0
        %v3746 = vadd.f32 0.0, %v3745
        %v3747 = vpop.f32.mrf.mxu0
        %v3748 = vadd.f32 0.0, %v3747
        %3749 = vmatmul.bf16.gmra.mxu0 %v3025
        %v3750 = vpop.f32.mrf.mxu0
        %v3751 = vadd.f32 0.0, %v3750
        %v3752 = vpop.f32.mrf.mxu0
        %v3753 = vadd.f32 0.0, %v3752
        %3754 = vmatmul.bf16.gmra.mxu0 %v3027
        %v3755 = vpop.f32.mrf.mxu0
        %v3756 = vadd.f32 0.0, %v3755
        %v3757 = vpop.f32.mrf.mxu0
        %v3758 = vadd.f32 0.0, %v3757
        %3759 = vmatmul.bf16.gmra.mxu0 %v3029
        %v3760 = vpop.f32.mrf.mxu0
        %v3761 = vadd.f32 0.0, %v3760
        %v3762 = vpop.f32.mrf.mxu0
        %v3763 = vadd.f32 0.0, %v3762
        %3764 = vmatmul.bf16.gmra.mxu0 %v3031
        %v3765 = vpop.f32.mrf.mxu0
        %v3766 = vadd.f32 0.0, %v3765
        %v3767 = vpop.f32.mrf.mxu0
        %v3768 = vadd.f32 0.0, %v3767
        %3769 = vmatmul.bf16.gmra.mxu0 %v3033
        %v3770 = vpop.f32.mrf.mxu0
        %v3771 = vadd.f32 0.0, %v3770
        %v3772 = vpop.f32.mrf.mxu0
        %v3773 = vadd.f32 0.0, %v3772
        %3774 = vmatmul.bf16.gmra.mxu0 %v3035
        %v3775 = vpop.f32.mrf.mxu0
        %v3776 = vadd.f32 0.0, %v3775
        %v3777 = vpop.f32.mrf.mxu0
        %v3778 = vadd.f32 0.0, %v3777
        %3779 = vmatmul.bf16.gmra.mxu0 %v3037
        %v3780 = vpop.f32.mrf.mxu0
        %v3781 = vadd.f32 0.0, %v3780
        %v3782 = vpop.f32.mrf.mxu0
        %v3783 = vadd.f32 0.0, %v3782
        %3784 = vmatmul.bf16.gmra.mxu0 %v3039
        %v3785 = vpop.f32.mrf.mxu0
        %v3786 = vadd.f32 0.0, %v3785
        %v3787 = vpop.f32.mrf.mxu0
        %v3788 = vadd.f32 0.0, %v3787
        %3789 = vmatmul.bf16.gmra.mxu0 %v3041
        %v3790 = vpop.f32.mrf.mxu0
        %v3791 = vadd.f32 0.0, %v3790
        %v3792 = vpop.f32.mrf.mxu0
        %v3793 = vadd.f32 0.0, %v3792
        %3794 = vmatmul.bf16.gmra.mxu0 %v3043
        %v3795 = vpop.f32.mrf.mxu0
        %v3796 = vadd.f32 0.0, %v3795
        %v3797 = vpop.f32.mrf.mxu0
        %v3798 = vadd.f32 0.0, %v3797
        %3799 = vmatmul.bf16.gmra.mxu0 %v3045
        %v3800 = vpop.f32.mrf.mxu0
        %v3801 = vadd.f32 0.0, %v3800
        %v3802 = vpop.f32.mrf.mxu0
        %v3803 = vadd.f32 0.0, %v3802
        %3804 = vmatmul.bf16.gmra.mxu0 %v3047
        %v3805 = vpop.f32.mrf.mxu0
        %v3806 = vadd.f32 0.0, %v3805
        %v3807 = vpop.f32.mrf.mxu0
        %v3808 = vadd.f32 0.0, %v3807
        %3809 = vmatmul.bf16.gmra.mxu0 %v3049
        %v3810 = vpop.f32.mrf.mxu0
        %v3811 = vadd.f32 0.0, %v3810
        %v3812 = vpop.f32.mrf.mxu0
        %v3813 = vadd.f32 0.0, %v3812
        %3814 = vmatmul.bf16.gmra.mxu0 %v3051
        %v3815 = vpop.f32.mrf.mxu0
        %v3816 = vadd.f32 0.0, %v3815
        %v3817 = vpop.f32.mrf.mxu0
        %v3818 = vadd.f32 0.0, %v3817
        %3819 = vmatmul.bf16.gmra.mxu0 %v3053
        %v3820 = vpop.f32.mrf.mxu0
        %v3821 = vadd.f32 0.0, %v3820
        %v3822 = vpop.f32.mrf.mxu0
        %v3823 = vadd.f32 0.0, %v3822
        %3824 = vmatmul.bf16.gmra.mxu0 %v3055
        %v3825 = vpop.f32.mrf.mxu0
        %v3826 = vadd.f32 0.0, %v3825
        %v3827 = vpop.f32.mrf.mxu0
        %v3828 = vadd.f32 0.0, %v3827
        %3829 = vmatmul.bf16.gmra.mxu0 %v3057
        %v3830 = vpop.f32.mrf.mxu0
        %v3831 = vadd.f32 0.0, %v3830
        %v3832 = vpop.f32.mrf.mxu0
        %v3833 = vadd.f32 0.0, %v3832
        %3834 = vmatmul.bf16.gmra.mxu0 %v3059
        %v3835 = vpop.f32.mrf.mxu0
        %v3836 = vadd.f32 0.0, %v3835
        %v3837 = vpop.f32.mrf.mxu0
        %v3838 = vadd.f32 0.0, %v3837
        %3839 = vmatmul.bf16.gmra.mxu0 %v3061
        %v3840 = vpop.f32.mrf.mxu0
        %v3841 = vadd.f32 0.0, %v3840
        %v3842 = vpop.f32.mrf.mxu0
        %v3843 = vadd.f32 0.0, %v3842
        %3844 = vmatmul.bf16.gmra.mxu0 %v3063
        %v3845 = vpop.f32.mrf.mxu0
        %v3846 = vadd.f32 0.0, %v3845
        %v3847 = vpop.f32.mrf.mxu0
        %v3848 = vadd.f32 0.0, %v3847
        %3849 = vmatmul.bf16.gmra.mxu0 %v3065
        %v3850 = vpop.f32.mrf.mxu0
        %v3851 = vadd.f32 0.0, %v3850
        %v3852 = vpop.f32.mrf.mxu0
        %v3853 = vadd.f32 0.0, %v3852
        %3854 = vmatmul.bf16.gmra.mxu0 %v3529
        %v3855 = vpop.f32.mrf.mxu0
        %v3856 = vadd.f32 0.0, %v3855
        %v3857 = vpop.f32.mrf.mxu0
        %v3858 = vadd.f32 0.0, %v3857
        %3859 = vmatmul.bf16.gmra.mxu0 %v3531
        %v3860 = vpop.f32.mrf.mxu0
        %v3861 = vadd.f32 0.0, %v3860
        %v3862 = vpop.f32.mrf.mxu0
        %v3863 = vadd.f32 0.0, %v3862
        %3864 = vdwg.mxu0
        %v3865 = vadd.f32 %v3399, %v3546
        %v3866 = vadd.f32 %v3400, %v3548
        %v3867 = vadd.f32 %v3401, %v3551
        %v3868 = vadd.f32 %v3402, %v3553
        %v3869 = vadd.f32 %v3403, %v3556
        %v3870 = vadd.f32 %v3404, %v3558
        %v3871 = vadd.f32 %v3405, %v3561
        %v3872 = vadd.f32 %v3406, %v3563
        %v3873 = vadd.f32 %v3407, %v3566
        %v3874 = vadd.f32 %v3408, %v3568
        %v3875 = vadd.f32 %v3409, %v3571
        %v3876 = vadd.f32 %v3410, %v3573
        %v3877 = vadd.f32 %v3411, %v3576
        %v3878 = vadd.f32 %v3412, %v3578
        %v3879 = vadd.f32 %v3413, %v3581
        %v3880 = vadd.f32 %v3414, %v3583
        %v3881 = vadd.f32 %v3415, %v3586
        %v3882 = vadd.f32 %v3416, %v3588
        %v3883 = vadd.f32 %v3417, %v3591
        %v3884 = vadd.f32 %v3418, %v3593
        %v3885 = vadd.f32 %v3419, %v3596
        %v3886 = vadd.f32 %v3420, %v3598
        %v3887 = vadd.f32 %v3421, %v3601
        %v3888 = vadd.f32 %v3422, %v3603
        %v3889 = vadd.f32 %v3423, %v3606
        %v3890 = vadd.f32 %v3424, %v3608
        %v3891 = vadd.f32 %v3425, %v3611
        %v3892 = vadd.f32 %v3426, %v3613
        %v3893 = vadd.f32 %v3427, %v3616
        %v3894 = vadd.f32 %v3428, %v3618
        %v3895 = vadd.f32 %v3429, %v3621
        %v3896 = vadd.f32 %v3430, %v3623
        %v3897 = vadd.f32 %v3431, %v3626
        %v3898 = vadd.f32 %v3432, %v3628
        %v3899 = vadd.f32 %v3433, %v3631
        %v3900 = vadd.f32 %v3434, %v3633
        %v3901 = vadd.f32 %v3435, %v3636
        %v3902 = vadd.f32 %v3436, %v3638
        %v3903 = vadd.f32 %v3437, %v3641
        %v3904 = vadd.f32 %v3438, %v3643
        %v3905 = vadd.f32 %v3439, %v3646
        %v3906 = vadd.f32 %v3440, %v3648
        %v3907 = vadd.f32 %v3441, %v3651
        %v3908 = vadd.f32 %v3442, %v3653
        %v3909 = vadd.f32 %v3443, %v3656
        %v3910 = vadd.f32 %v3444, %v3658
        %v3911 = vadd.f32 %v3445, %v3661
        %v3912 = vadd.f32 %v3446, %v3663
        %v3913 = vadd.f32 %v3447, %v3666
        %v3914 = vadd.f32 %v3448, %v3668
        %v3915 = vadd.f32 %v3449, %v3671
        %v3916 = vadd.f32 %v3450, %v3673
        %v3917 = vadd.f32 %v3451, %v3676
        %v3918 = vadd.f32 %v3452, %v3678
        %v3919 = vadd.f32 %v3453, %v3681
        %v3920 = vadd.f32 %v3454, %v3683
        %v3921 = vadd.f32 %v3455, %v3686
        %v3922 = vadd.f32 %v3456, %v3688
        %v3923 = vadd.f32 %v3457, %v3691
        %v3924 = vadd.f32 %v3458, %v3693
        %v3925 = vadd.f32 %v3459, %v3696
        %v3926 = vadd.f32 %v3460, %v3698
        %v3927 = vadd.f32 %v3461, %v3701
        %v3928 = vadd.f32 %v3462, %v3703
        %v3929 = vadd.f32 %v3463, %v3706
        %v3930 = vadd.f32 %v3464, %v3708
        %v3931 = vadd.f32 %v3465, %v3711
        %v3932 = vadd.f32 %v3466, %v3713
        %v3933 = vadd.f32 %v3467, %v3716
        %v3934 = vadd.f32 %v3468, %v3718
        %v3935 = vadd.f32 %v3469, %v3721
        %v3936 = vadd.f32 %v3470, %v3723
        %v3937 = vadd.f32 %v3471, %v3726
        %v3938 = vadd.f32 %v3472, %v3728
        %v3939 = vadd.f32 %v3473, %v3731
        %v3940 = vadd.f32 %v3474, %v3733
        %v3941 = vadd.f32 %v3475, %v3736
        %v3942 = vadd.f32 %v3476, %v3738
        %v3943 = vadd.f32 %v3477, %v3741
        %v3944 = vadd.f32 %v3478, %v3743
        %v3945 = vadd.f32 %v3479, %v3746
        %v3946 = vadd.f32 %v3480, %v3748
        %v3947 = vadd.f32 %v3481, %v3751
        %v3948 = vadd.f32 %v3482, %v3753
        %v3949 = vadd.f32 %v3483, %v3756
        %v3950 = vadd.f32 %v3484, %v3758
        %v3951 = vadd.f32 %v3485, %v3761
        %v3952 = vadd.f32 %v3486, %v3763
        %v3953 = vadd.f32 %v3487, %v3766
        %v3954 = vadd.f32 %v3488, %v3768
        %v3955 = vadd.f32 %v3489, %v3771
        %v3956 = vadd.f32 %v3490, %v3773
        %v3957 = vadd.f32 %v3491, %v3776
        %v3958 = vadd.f32 %v3492, %v3778
        %v3959 = vadd.f32 %v3493, %v3781
        %v3960 = vadd.f32 %v3494, %v3783
        %v3961 = vadd.f32 %v3495, %v3786
        %v3962 = vadd.f32 %v3496, %v3788
        %v3963 = vadd.f32 %v3497, %v3791
        %v3964 = vadd.f32 %v3498, %v3793
        %v3965 = vadd.f32 %v3499, %v3796
        %v3966 = vadd.f32 %v3500, %v3798
        %v3967 = vadd.f32 %v3501, %v3801
        %v3968 = vadd.f32 %v3502, %v3803
        %v3969 = vadd.f32 %v3503, %v3806
        %v3970 = vadd.f32 %v3504, %v3808
        %v3971 = vadd.f32 %v3505, %v3811
        %v3972 = vadd.f32 %v3506, %v3813
        %v3973 = vadd.f32 %v3507, %v3816
        %v3974 = vadd.f32 %v3508, %v3818
        %v3975 = vadd.f32 %v3509, %v3821
        %v3976 = vadd.f32 %v3510, %v3823
        %v3977 = vadd.f32 %v3511, %v3826
        %v3978 = vadd.f32 %v3512, %v3828
        %v3979 = vadd.f32 %v3513, %v3831
        %v3980 = vadd.f32 %v3514, %v3833
        %v3981 = vadd.f32 %v3515, %v3836
        %v3982 = vadd.f32 %v3516, %v3838
        %v3983 = vadd.f32 %v3517, %v3841
        %v3984 = vadd.f32 %v3518, %v3843
        %v3985 = vadd.f32 %v3519, %v3846
        %v3986 = vadd.f32 %v3520, %v3848
        %v3987 = vadd.f32 %v3521, %v3851
        %v3988 = vadd.f32 %v3522, %v3853
        %v3989 = vadd.f32 %v3523, %v3856
        %v3990 = vadd.f32 %v3524, %v3858
        %v3991 = vadd.f32 %v3525, %v3861
        %v3992 = vadd.f32 %v3526, %v3863
        %s3993 = scalar_lea.vmem %s219, 14
        %v3994 = vld [vmem:[%s3993] sm:$0x3]
        %v3995 = vsel %vm1602, %v775, 0
        %v3997 = vsel %vm1602, %v776, 0
        %v4000 = vand.u32 %v3994, %v1798
        %4002 = vmatpush.bf16.msra.mxu0 0
        %4003 = vmatpush.bf16.msra.mxu0 0
        %4004 = vmatpush.bf16.msra.mxu0 0
        %4005 = vmatpush.bf16.msra.mxu0 0
        %4006 = vmatpush.bf16.msra.mxu0 0
        %4007 = vmatpush.bf16.msra.mxu0 0
        %4008 = vmatpush.bf16.msra.mxu0 0
        %4009 = vmatpush.bf16.msra.mxu0 %v4000
        %4010 = vmatmul.bf16.gmra.mxu0 %v2947
        %v4011 = vpop.f32.mrf.mxu0
        %v4012 = vadd.f32 0.0, %v4011
        %v4013 = vpop.f32.mrf.mxu0
        %v4014 = vadd.f32 0.0, %v4013
        %4015 = vmatmul.bf16.gmra.mxu0 %v2949
        %v4016 = vpop.f32.mrf.mxu0
        %v4017 = vadd.f32 0.0, %v4016
        %v4018 = vpop.f32.mrf.mxu0
        %v4019 = vadd.f32 0.0, %v4018
        %4020 = vmatmul.bf16.gmra.mxu0 %v2951
        %v4021 = vpop.f32.mrf.mxu0
        %v4022 = vadd.f32 0.0, %v4021
        %v4023 = vpop.f32.mrf.mxu0
        %v4024 = vadd.f32 0.0, %v4023
        %4025 = vmatmul.bf16.gmra.mxu0 %v2953
        %v4026 = vpop.f32.mrf.mxu0
        %v4027 = vadd.f32 0.0, %v4026
        %v4028 = vpop.f32.mrf.mxu0
        %v4029 = vadd.f32 0.0, %v4028
        %4030 = vmatmul.bf16.gmra.mxu0 %v2955
        %v4031 = vpop.f32.mrf.mxu0
        %v4032 = vadd.f32 0.0, %v4031
        %v4033 = vpop.f32.mrf.mxu0
        %v4034 = vadd.f32 0.0, %v4033
        %4035 = vmatmul.bf16.gmra.mxu0 %v2957
        %v4036 = vpop.f32.mrf.mxu0
        %v4037 = vadd.f32 0.0, %v4036
        %v4038 = vpop.f32.mrf.mxu0
        %v4039 = vadd.f32 0.0, %v4038
        %4040 = vmatmul.bf16.gmra.mxu0 %v2959
        %v4041 = vpop.f32.mrf.mxu0
        %v4042 = vadd.f32 0.0, %v4041
        %v4043 = vpop.f32.mrf.mxu0
        %v4044 = vadd.f32 0.0, %v4043
        %4045 = vmatmul.bf16.gmra.mxu0 %v2961
        %v4046 = vpop.f32.mrf.mxu0
        %v4047 = vadd.f32 0.0, %v4046
        %v4048 = vpop.f32.mrf.mxu0
        %v4049 = vadd.f32 0.0, %v4048
        %4050 = vmatmul.bf16.gmra.mxu0 %v2963
        %v4051 = vpop.f32.mrf.mxu0
        %v4052 = vadd.f32 0.0, %v4051
        %v4053 = vpop.f32.mrf.mxu0
        %v4054 = vadd.f32 0.0, %v4053
        %4055 = vmatmul.bf16.gmra.mxu0 %v2965
        %v4056 = vpop.f32.mrf.mxu0
        %v4057 = vadd.f32 0.0, %v4056
        %v4058 = vpop.f32.mrf.mxu0
        %v4059 = vadd.f32 0.0, %v4058
        %4060 = vmatmul.bf16.gmra.mxu0 %v2967
        %v4061 = vpop.f32.mrf.mxu0
        %v4062 = vadd.f32 0.0, %v4061
        %v4063 = vpop.f32.mrf.mxu0
        %v4064 = vadd.f32 0.0, %v4063
        %4065 = vmatmul.bf16.gmra.mxu0 %v2969
        %v4066 = vpop.f32.mrf.mxu0
        %v4067 = vadd.f32 0.0, %v4066
        %v4068 = vpop.f32.mrf.mxu0
        %v4069 = vadd.f32 0.0, %v4068
        %4070 = vmatmul.bf16.gmra.mxu0 %v2971
        %v4071 = vpop.f32.mrf.mxu0
        %v4072 = vadd.f32 0.0, %v4071
        %v4073 = vpop.f32.mrf.mxu0
        %v4074 = vadd.f32 0.0, %v4073
        %4075 = vmatmul.bf16.gmra.mxu0 %v2973
        %v4076 = vpop.f32.mrf.mxu0
        %v4077 = vadd.f32 0.0, %v4076
        %v4078 = vpop.f32.mrf.mxu0
        %v4079 = vadd.f32 0.0, %v4078
        %4080 = vmatmul.bf16.gmra.mxu0 %v2975
        %v4081 = vpop.f32.mrf.mxu0
        %v4082 = vadd.f32 0.0, %v4081
        %v4083 = vpop.f32.mrf.mxu0
        %v4084 = vadd.f32 0.0, %v4083
        %4085 = vmatmul.bf16.gmra.mxu0 %v2977
        %v4086 = vpop.f32.mrf.mxu0
        %v4087 = vadd.f32 0.0, %v4086
        %v4088 = vpop.f32.mrf.mxu0
        %v4089 = vadd.f32 0.0, %v4088
        %4090 = vmatmul.bf16.gmra.mxu0 %v2979
        %v4091 = vpop.f32.mrf.mxu0
        %v4092 = vadd.f32 0.0, %v4091
        %v4093 = vpop.f32.mrf.mxu0
        %v4094 = vadd.f32 0.0, %v4093
        %4095 = vmatmul.bf16.gmra.mxu0 %v2981
        %v4096 = vpop.f32.mrf.mxu0
        %v4097 = vadd.f32 0.0, %v4096
        %v4098 = vpop.f32.mrf.mxu0
        %v4099 = vadd.f32 0.0, %v4098
        %4100 = vmatmul.bf16.gmra.mxu0 %v2983
        %v4101 = vpop.f32.mrf.mxu0
        %v4102 = vadd.f32 0.0, %v4101
        %v4103 = vpop.f32.mrf.mxu0
        %v4104 = vadd.f32 0.0, %v4103
        %4105 = vmatmul.bf16.gmra.mxu0 %v2985
        %v4106 = vpop.f32.mrf.mxu0
        %v4107 = vadd.f32 0.0, %v4106
        %v4108 = vpop.f32.mrf.mxu0
        %v4109 = vadd.f32 0.0, %v4108
        %4110 = vmatmul.bf16.gmra.mxu0 %v2987
        %v4111 = vpop.f32.mrf.mxu0
        %v4112 = vadd.f32 0.0, %v4111
        %v4113 = vpop.f32.mrf.mxu0
        %v4114 = vadd.f32 0.0, %v4113
        %4115 = vmatmul.bf16.gmra.mxu0 %v2989
        %v4116 = vpop.f32.mrf.mxu0
        %v4117 = vadd.f32 0.0, %v4116
        %v4118 = vpop.f32.mrf.mxu0
        %v4119 = vadd.f32 0.0, %v4118
        %4120 = vmatmul.bf16.gmra.mxu0 %v2991
        %v4121 = vpop.f32.mrf.mxu0
        %v4122 = vadd.f32 0.0, %v4121
        %v4123 = vpop.f32.mrf.mxu0
        %v4124 = vadd.f32 0.0, %v4123
        %4125 = vmatmul.bf16.gmra.mxu0 %v2993
        %v4126 = vpop.f32.mrf.mxu0
        %v4127 = vadd.f32 0.0, %v4126
        %v4128 = vpop.f32.mrf.mxu0
        %v4129 = vadd.f32 0.0, %v4128
        %4130 = vmatmul.bf16.gmra.mxu0 %v2995
        %v4131 = vpop.f32.mrf.mxu0
        %v4132 = vadd.f32 0.0, %v4131
        %v4133 = vpop.f32.mrf.mxu0
        %v4134 = vadd.f32 0.0, %v4133
        %4135 = vmatmul.bf16.gmra.mxu0 %v2997
        %v4136 = vpop.f32.mrf.mxu0
        %v4137 = vadd.f32 0.0, %v4136
        %v4138 = vpop.f32.mrf.mxu0
        %v4139 = vadd.f32 0.0, %v4138
        %4140 = vmatmul.bf16.gmra.mxu0 %v2999
        %v4141 = vpop.f32.mrf.mxu0
        %v4142 = vadd.f32 0.0, %v4141
        %v4143 = vpop.f32.mrf.mxu0
        %v4144 = vadd.f32 0.0, %v4143
        %4145 = vmatmul.bf16.gmra.mxu0 %v3001
        %v4146 = vpop.f32.mrf.mxu0
        %v4147 = vadd.f32 0.0, %v4146
        %v4148 = vpop.f32.mrf.mxu0
        %v4149 = vadd.f32 0.0, %v4148
        %4150 = vmatmul.bf16.gmra.mxu0 %v3003
        %v4151 = vpop.f32.mrf.mxu0
        %v4152 = vadd.f32 0.0, %v4151
        %v4153 = vpop.f32.mrf.mxu0
        %v4154 = vadd.f32 0.0, %v4153
        %4155 = vmatmul.bf16.gmra.mxu0 %v3005
        %v4156 = vpop.f32.mrf.mxu0
        %v4157 = vadd.f32 0.0, %v4156
        %v4158 = vpop.f32.mrf.mxu0
        %v4159 = vadd.f32 0.0, %v4158
        %4160 = vmatmul.bf16.gmra.mxu0 %v3007
        %v4161 = vpop.f32.mrf.mxu0
        %v4162 = vadd.f32 0.0, %v4161
        %v4163 = vpop.f32.mrf.mxu0
        %v4164 = vadd.f32 0.0, %v4163
        %4165 = vmatmul.bf16.gmra.mxu0 %v3009
        %v4166 = vpop.f32.mrf.mxu0
        %v4167 = vadd.f32 0.0, %v4166
        %v4168 = vpop.f32.mrf.mxu0
        %v4169 = vadd.f32 0.0, %v4168
        %4170 = vmatmul.bf16.gmra.mxu0 %v3011
        %v4171 = vpop.f32.mrf.mxu0
        %v4172 = vadd.f32 0.0, %v4171
        %v4173 = vpop.f32.mrf.mxu0
        %v4174 = vadd.f32 0.0, %v4173
        %4175 = vmatmul.bf16.gmra.mxu0 %v3013
        %v4176 = vpop.f32.mrf.mxu0
        %v4177 = vadd.f32 0.0, %v4176
        %v4178 = vpop.f32.mrf.mxu0
        %v4179 = vadd.f32 0.0, %v4178
        %4180 = vmatmul.bf16.gmra.mxu0 %v3015
        %v4181 = vpop.f32.mrf.mxu0
        %v4182 = vadd.f32 0.0, %v4181
        %v4183 = vpop.f32.mrf.mxu0
        %v4184 = vadd.f32 0.0, %v4183
        %4185 = vmatmul.bf16.gmra.mxu0 %v3017
        %v4186 = vpop.f32.mrf.mxu0
        %v4187 = vadd.f32 0.0, %v4186
        %v4188 = vpop.f32.mrf.mxu0
        %v4189 = vadd.f32 0.0, %v4188
        %4190 = vmatmul.bf16.gmra.mxu0 %v3019
        %v4191 = vpop.f32.mrf.mxu0
        %v4192 = vadd.f32 0.0, %v4191
        %v4193 = vpop.f32.mrf.mxu0
        %v4194 = vadd.f32 0.0, %v4193
        %4195 = vmatmul.bf16.gmra.mxu0 %v3021
        %v4196 = vpop.f32.mrf.mxu0
        %v4197 = vadd.f32 0.0, %v4196
        %v4198 = vpop.f32.mrf.mxu0
        %v4199 = vadd.f32 0.0, %v4198
        %4200 = vmatmul.bf16.gmra.mxu0 %v3023
        %v4201 = vpop.f32.mrf.mxu0
        %v4202 = vadd.f32 0.0, %v4201
        %v4203 = vpop.f32.mrf.mxu0
        %v4204 = vadd.f32 0.0, %v4203
        %4205 = vmatmul.bf16.gmra.mxu0 %v3025
        %v4206 = vpop.f32.mrf.mxu0
        %v4207 = vadd.f32 0.0, %v4206
        %v4208 = vpop.f32.mrf.mxu0
        %v4209 = vadd.f32 0.0, %v4208
        %4210 = vmatmul.bf16.gmra.mxu0 %v3027
        %v4211 = vpop.f32.mrf.mxu0
        %v4212 = vadd.f32 0.0, %v4211
        %v4213 = vpop.f32.mrf.mxu0
        %v4214 = vadd.f32 0.0, %v4213
        %4215 = vmatmul.bf16.gmra.mxu0 %v3029
        %v4216 = vpop.f32.mrf.mxu0
        %v4217 = vadd.f32 0.0, %v4216
        %v4218 = vpop.f32.mrf.mxu0
        %v4219 = vadd.f32 0.0, %v4218
        %4220 = vmatmul.bf16.gmra.mxu0 %v3031
        %v4221 = vpop.f32.mrf.mxu0
        %v4222 = vadd.f32 0.0, %v4221
        %v4223 = vpop.f32.mrf.mxu0
        %v4224 = vadd.f32 0.0, %v4223
        %4225 = vmatmul.bf16.gmra.mxu0 %v3033
        %v4226 = vpop.f32.mrf.mxu0
        %v4227 = vadd.f32 0.0, %v4226
        %v4228 = vpop.f32.mrf.mxu0
        %v4229 = vadd.f32 0.0, %v4228
        %4230 = vmatmul.bf16.gmra.mxu0 %v3035
        %v4231 = vpop.f32.mrf.mxu0
        %v4232 = vadd.f32 0.0, %v4231
        %v4233 = vpop.f32.mrf.mxu0
        %v4234 = vadd.f32 0.0, %v4233
        %4235 = vmatmul.bf16.gmra.mxu0 %v3037
        %v4236 = vpop.f32.mrf.mxu0
        %v4237 = vadd.f32 0.0, %v4236
        %v4238 = vpop.f32.mrf.mxu0
        %v4239 = vadd.f32 0.0, %v4238
        %4240 = vmatmul.bf16.gmra.mxu0 %v3039
        %v4241 = vpop.f32.mrf.mxu0
        %v4242 = vadd.f32 0.0, %v4241
        %v4243 = vpop.f32.mrf.mxu0
        %v4244 = vadd.f32 0.0, %v4243
        %4245 = vmatmul.bf16.gmra.mxu0 %v3041
        %v4246 = vpop.f32.mrf.mxu0
        %v4247 = vadd.f32 0.0, %v4246
        %v4248 = vpop.f32.mrf.mxu0
        %v4249 = vadd.f32 0.0, %v4248
        %4250 = vmatmul.bf16.gmra.mxu0 %v3043
        %v4251 = vpop.f32.mrf.mxu0
        %v4252 = vadd.f32 0.0, %v4251
        %v4253 = vpop.f32.mrf.mxu0
        %v4254 = vadd.f32 0.0, %v4253
        %4255 = vmatmul.bf16.gmra.mxu0 %v3045
        %v4256 = vpop.f32.mrf.mxu0
        %v4257 = vadd.f32 0.0, %v4256
        %v4258 = vpop.f32.mrf.mxu0
        %v4259 = vadd.f32 0.0, %v4258
        %4260 = vmatmul.bf16.gmra.mxu0 %v3047
        %v4261 = vpop.f32.mrf.mxu0
        %v4262 = vadd.f32 0.0, %v4261
        %v4263 = vpop.f32.mrf.mxu0
        %v4264 = vadd.f32 0.0, %v4263
        %4265 = vmatmul.bf16.gmra.mxu0 %v3049
        %v4266 = vpop.f32.mrf.mxu0
        %v4267 = vadd.f32 0.0, %v4266
        %v4268 = vpop.f32.mrf.mxu0
        %v4269 = vadd.f32 0.0, %v4268
        %4270 = vmatmul.bf16.gmra.mxu0 %v3051
        %v4271 = vpop.f32.mrf.mxu0
        %v4272 = vadd.f32 0.0, %v4271
        %v4273 = vpop.f32.mrf.mxu0
        %v4274 = vadd.f32 0.0, %v4273
        %4275 = vmatmul.bf16.gmra.mxu0 %v3053
        %v4276 = vpop.f32.mrf.mxu0
        %v4277 = vadd.f32 0.0, %v4276
        %v4278 = vpop.f32.mrf.mxu0
        %v4279 = vadd.f32 0.0, %v4278
        %4280 = vmatmul.bf16.gmra.mxu0 %v3055
        %v4281 = vpop.f32.mrf.mxu0
        %v4282 = vadd.f32 0.0, %v4281
        %v4283 = vpop.f32.mrf.mxu0
        %v4284 = vadd.f32 0.0, %v4283
        %4285 = vmatmul.bf16.gmra.mxu0 %v3057
        %v4286 = vpop.f32.mrf.mxu0
        %v4287 = vadd.f32 0.0, %v4286
        %v4288 = vpop.f32.mrf.mxu0
        %v4289 = vadd.f32 0.0, %v4288
        %4290 = vmatmul.bf16.gmra.mxu0 %v3059
        %v4291 = vpop.f32.mrf.mxu0
        %v4292 = vadd.f32 0.0, %v4291
        %v4293 = vpop.f32.mrf.mxu0
        %v4294 = vadd.f32 0.0, %v4293
        %4295 = vmatmul.bf16.gmra.mxu0 %v3061
        %v4296 = vpop.f32.mrf.mxu0
        %v4297 = vadd.f32 0.0, %v4296
        %v4298 = vpop.f32.mrf.mxu0
        %v4299 = vadd.f32 0.0, %v4298
        %4300 = vmatmul.bf16.gmra.mxu0 %v3063
        %v4301 = vpop.f32.mrf.mxu0
        %v4302 = vadd.f32 0.0, %v4301
        %v4303 = vpop.f32.mrf.mxu0
        %v4304 = vadd.f32 0.0, %v4303
        %4305 = vmatmul.bf16.gmra.mxu0 %v3065
        %v4306 = vpop.f32.mrf.mxu0
        %v4307 = vadd.f32 0.0, %v4306
        %v4308 = vpop.f32.mrf.mxu0
        %v4309 = vadd.f32 0.0, %v4308
        %4310 = vmatmul.bf16.gmra.mxu0 %v3529
        %v4311 = vpop.f32.mrf.mxu0
        %v4312 = vadd.f32 0.0, %v4311
        %v4313 = vpop.f32.mrf.mxu0
        %v4314 = vadd.f32 0.0, %v4313
        %4315 = vmatmul.bf16.gmra.mxu0 %v3531
        %v4316 = vpop.f32.mrf.mxu0
        %v4317 = vadd.f32 0.0, %v4316
        %v4318 = vpop.f32.mrf.mxu0
        %v4319 = vadd.f32 0.0, %v4318
        %4320 = vmatmul.bf16.gmra.mxu0 %v3995
        %v4321 = vpop.f32.mrf.mxu0
        %v4322 = vadd.f32 0.0, %v4321
        %v4323 = vpop.f32.mrf.mxu0
        %v4324 = vadd.f32 0.0, %v4323
        %4325 = vmatmul.bf16.gmra.mxu0 %v3997
        %v4326 = vpop.f32.mrf.mxu0
        %v4327 = vadd.f32 0.0, %v4326
        %v4328 = vpop.f32.mrf.mxu0
        %v4329 = vadd.f32 0.0, %v4328
        %4330 = vdwg.mxu0
        %v4331 = vadd.f32 %v3865, %v4012
        %v4332 = vadd.f32 %v3866, %v4014
        %v4333 = vadd.f32 %v3867, %v4017
        %v4334 = vadd.f32 %v3868, %v4019
        %v4335 = vadd.f32 %v3869, %v4022
        %v4336 = vadd.f32 %v3870, %v4024
        %v4337 = vadd.f32 %v3871, %v4027
        %v4338 = vadd.f32 %v3872, %v4029
        %v4339 = vadd.f32 %v3873, %v4032
        %v4340 = vadd.f32 %v3874, %v4034
        %v4341 = vadd.f32 %v3875, %v4037
        %v4342 = vadd.f32 %v3876, %v4039
        %v4343 = vadd.f32 %v3877, %v4042
        %v4344 = vadd.f32 %v3878, %v4044
        %v4345 = vadd.f32 %v3879, %v4047
        %v4346 = vadd.f32 %v3880, %v4049
        %v4347 = vadd.f32 %v3881, %v4052
        %v4348 = vadd.f32 %v3882, %v4054
        %v4349 = vadd.f32 %v3883, %v4057
        %v4350 = vadd.f32 %v3884, %v4059
        %v4351 = vadd.f32 %v3885, %v4062
        %v4352 = vadd.f32 %v3886, %v4064
        %v4353 = vadd.f32 %v3887, %v4067
        %v4354 = vadd.f32 %v3888, %v4069
        %v4355 = vadd.f32 %v3889, %v4072
        %v4356 = vadd.f32 %v3890, %v4074
        %v4357 = vadd.f32 %v3891, %v4077
        %v4358 = vadd.f32 %v3892, %v4079
        %v4359 = vadd.f32 %v3893, %v4082
        %v4360 = vadd.f32 %v3894, %v4084
        %v4361 = vadd.f32 %v3895, %v4087
        %v4362 = vadd.f32 %v3896, %v4089
        %v4363 = vadd.f32 %v3897, %v4092
        %v4364 = vadd.f32 %v3898, %v4094
        %v4365 = vadd.f32 %v3899, %v4097
        %v4366 = vadd.f32 %v3900, %v4099
        %v4367 = vadd.f32 %v3901, %v4102
        %v4368 = vadd.f32 %v3902, %v4104
        %v4369 = vadd.f32 %v3903, %v4107
        %v4370 = vadd.f32 %v3904, %v4109
        %v4371 = vadd.f32 %v3905, %v4112
        %v4372 = vadd.f32 %v3906, %v4114
        %v4373 = vadd.f32 %v3907, %v4117
        %v4374 = vadd.f32 %v3908, %v4119
        %v4375 = vadd.f32 %v3909, %v4122
        %v4376 = vadd.f32 %v3910, %v4124
        %v4377 = vadd.f32 %v3911, %v4127
        %v4378 = vadd.f32 %v3912, %v4129
        %v4379 = vadd.f32 %v3913, %v4132
        %v4380 = vadd.f32 %v3914, %v4134
        %v4381 = vadd.f32 %v3915, %v4137
        %v4382 = vadd.f32 %v3916, %v4139
        %v4383 = vadd.f32 %v3917, %v4142
        %v4384 = vadd.f32 %v3918, %v4144
        %v4385 = vadd.f32 %v3919, %v4147
        %v4386 = vadd.f32 %v3920, %v4149
        %v4387 = vadd.f32 %v3921, %v4152
        %v4388 = vadd.f32 %v3922, %v4154
        %v4389 = vadd.f32 %v3923, %v4157
        %v4390 = vadd.f32 %v3924, %v4159
        %v4391 = vadd.f32 %v3925, %v4162
        %v4392 = vadd.f32 %v3926, %v4164
        %v4393 = vadd.f32 %v3927, %v4167
        %v4394 = vadd.f32 %v3928, %v4169
        %v4395 = vadd.f32 %v3929, %v4172
        %v4396 = vadd.f32 %v3930, %v4174
        %v4397 = vadd.f32 %v3931, %v4177
        %v4398 = vadd.f32 %v3932, %v4179
        %v4399 = vadd.f32 %v3933, %v4182
        %v4400 = vadd.f32 %v3934, %v4184
        %v4401 = vadd.f32 %v3935, %v4187
        %v4402 = vadd.f32 %v3936, %v4189
        %v4403 = vadd.f32 %v3937, %v4192
        %v4404 = vadd.f32 %v3938, %v4194
        %v4405 = vadd.f32 %v3939, %v4197
        %v4406 = vadd.f32 %v3940, %v4199
        %v4407 = vadd.f32 %v3941, %v4202
        %v4408 = vadd.f32 %v3942, %v4204
        %v4409 = vadd.f32 %v3943, %v4207
        %v4410 = vadd.f32 %v3944, %v4209
        %v4411 = vadd.f32 %v3945, %v4212
        %v4412 = vadd.f32 %v3946, %v4214
        %v4413 = vadd.f32 %v3947, %v4217
        %v4414 = vadd.f32 %v3948, %v4219
        %v4415 = vadd.f32 %v3949, %v4222
        %v4416 = vadd.f32 %v3950, %v4224
        %v4417 = vadd.f32 %v3951, %v4227
        %v4418 = vadd.f32 %v3952, %v4229
        %v4419 = vadd.f32 %v3953, %v4232
        %v4420 = vadd.f32 %v3954, %v4234
        %v4421 = vadd.f32 %v3955, %v4237
        %v4422 = vadd.f32 %v3956, %v4239
        %v4423 = vadd.f32 %v3957, %v4242
        %v4424 = vadd.f32 %v3958, %v4244
        %v4425 = vadd.f32 %v3959, %v4247
        %v4426 = vadd.f32 %v3960, %v4249
        %v4427 = vadd.f32 %v3961, %v4252
        %v4428 = vadd.f32 %v3962, %v4254
        %v4429 = vadd.f32 %v3963, %v4257
        %v4430 = vadd.f32 %v3964, %v4259
        %v4431 = vadd.f32 %v3965, %v4262
        %v4432 = vadd.f32 %v3966, %v4264
        %v4433 = vadd.f32 %v3967, %v4267
        %v4434 = vadd.f32 %v3968, %v4269
        %v4435 = vadd.f32 %v3969, %v4272
        %v4436 = vadd.f32 %v3970, %v4274
        %v4437 = vadd.f32 %v3971, %v4277
        %v4438 = vadd.f32 %v3972, %v4279
        %v4439 = vadd.f32 %v3973, %v4282
        %v4440 = vadd.f32 %v3974, %v4284
        %v4441 = vadd.f32 %v3975, %v4287
        %v4442 = vadd.f32 %v3976, %v4289
        %v4443 = vadd.f32 %v3977, %v4292
        %v4444 = vadd.f32 %v3978, %v4294
        %v4445 = vadd.f32 %v3979, %v4297
        %v4446 = vadd.f32 %v3980, %v4299
        %v4447 = vadd.f32 %v3981, %v4302
        %v4448 = vadd.f32 %v3982, %v4304
        %v4449 = vadd.f32 %v3983, %v4307
        %v4450 = vadd.f32 %v3984, %v4309
        %v4451 = vadd.f32 %v3985, %v4312
        %v4452 = vadd.f32 %v3986, %v4314
        %v4453 = vadd.f32 %v3987, %v4317
        %v4454 = vadd.f32 %v3988, %v4319
        %v4455 = vadd.f32 %v3989, %v4322
        %v4456 = vadd.f32 %v3990, %v4324
        %v4457 = vadd.f32 %v3991, %v4327
        %v4458 = vadd.f32 %v3992, %v4329
        %s4459 = scalar_lea.vmem %s219, 4
        %v4460 = vld [vmem:[%s4459] sm:$0x3]
        %v4462 = vsel %vm1602, %v1362, 0
        %v4465 = vsel %vm1602, %v1565, 0
        %v4468 = vsel %vm1602, %v1367, 0
        %v4471 = vsel %vm1602, %v1566, 0
        %v4474 = vsel %vm1602, %v1372, 0
        %v4477 = vsel %vm1602, %v1567, 0
        %v4480 = vsel %vm1602, %v1377, 0
        %v4483 = vsel %vm1602, %v1568, 0
        %v4486 = vsel %vm1602, %v1382, 0
        %v4489 = vsel %vm1602, %v1569, 0
        %v4492 = vsel %vm1602, %v1387, 0
        %v4495 = vsel %vm1602, %v1570, 0
        %v4498 = vsel %vm1602, %v1392, 0
        %v4501 = vsel %vm1602, %v1571, 0
        %v4504 = vsel %vm1602, %v1397, 0
        %v4507 = vsel %vm1602, %v1572, 0
        %v4510 = vsel %vm1602, %v1402, 0
        %v4513 = vsel %vm1602, %v1573, 0
        %v4516 = vsel %vm1602, %v1407, 0
        %v4519 = vsel %vm1602, %v1574, 0
        %v4522 = vsel %vm1602, %v1412, 0
        %v4525 = vsel %vm1602, %v1575, 0
        %v4528 = vsel %vm1602, %v1417, 0
        %v4531 = vsel %vm1602, %v1576, 0
        %v4534 = vsel %vm1602, %v1422, 0
        %v4537 = vsel %vm1602, %v1577, 0
        %v4540 = vsel %vm1602, %v1427, 0
        %v4543 = vsel %vm1602, %v1578, 0
        %v4546 = vsel %vm1602, %v1432, 0
        %v4549 = vsel %vm1602, %v1579, 0
        %v4552 = vsel %vm1602, %v1437, 0
        %v4555 = vsel %vm1602, %v1580, 0
        %v4558 = vsel %vm1602, %v1442, 0
        %v4561 = vsel %vm1602, %v1581, 0
        %v4564 = vsel %vm1602, %v1447, 0
        %v4567 = vsel %vm1602, %v1582, 0
        %v4570 = vsel %vm1602, %v1452, 0
        %v4573 = vsel %vm1602, %v1583, 0
        %v4576 = vsel %vm1602, %v1457, 0
        %v4579 = vsel %vm1602, %v1584, 0
        %v4582 = vsel %vm1602, %v1462, 0
        %v4585 = vsel %vm1602, %v1585, 0
        %v4588 = vsel %vm1602, %v1467, 0
        %v4591 = vsel %vm1602, %v1586, 0
        %v4594 = vsel %vm1602, %v1472, 0
        %v4597 = vsel %vm1602, %v1587, 0
        %v4600 = vsel %vm1602, %v1477, 0
        %v4603 = vsel %vm1602, %v1588, 0
        %v4606 = vsel %vm1602, %v1482, 0
        %v4609 = vsel %vm1602, %v1589, 0
        %v4612 = vsel %vm1602, %v1487, 0
        %v4615 = vsel %vm1602, %v1590, 0
        %v4618 = vsel %vm1602, %v1492, 0
        %v4621 = vsel %vm1602, %v1591, 0
        %v4624 = vsel %vm1602, %v1497, 0
        %v4627 = vsel %vm1602, %v1592, 0
        %v4630 = vsel %vm1602, %v1502, 0
        %v4633 = vsel %vm1602, %v1593, 0
        %v4636 = vsel %vm1602, %v1507, 0
        %v4639 = vsel %vm1602, %v1594, 0
        %v4642 = vsel %vm1602, %v1512, 0
        %v4645 = vsel %vm1602, %v1595, 0
        %v4648 = vsel %vm1602, %v1517, 0
        %v4651 = vsel %vm1602, %v1596, 0
        %v4654 = vand.u32 %v4460, %v1798
        %4656 = vmatpush.bf16.msra.mxu0 0
        %4657 = vmatpush.bf16.msra.mxu0 0
        %4658 = vmatpush.bf16.msra.mxu0 0
        %4659 = vmatpush.bf16.msra.mxu0 0
        %4660 = vmatpush.bf16.msra.mxu0 0
        %4661 = vmatpush.bf16.msra.mxu0 0
        %4662 = vmatpush.bf16.msra.mxu0 0
        %4663 = vmatpush.bf16.msra.mxu0 %v4654
        %4664 = vmatmul.bf16.gmra.mxu0 %v4462
        %v4665 = vpop.f32.mrf.mxu0
        %v4666 = vadd.f32 0.0, %v4665
        %v4667 = vpop.f32.mrf.mxu0
        %v4668 = vadd.f32 0.0, %v4667
        %4669 = vmatmul.bf16.gmra.mxu0 %v4465
        %v4670 = vpop.f32.mrf.mxu0
        %v4671 = vadd.f32 0.0, %v4670
        %v4672 = vpop.f32.mrf.mxu0
        %v4673 = vadd.f32 0.0, %v4672
        %4674 = vmatmul.bf16.gmra.mxu0 %v4468
        %v4675 = vpop.f32.mrf.mxu0
        %v4676 = vadd.f32 0.0, %v4675
        %v4677 = vpop.f32.mrf.mxu0
        %v4678 = vadd.f32 0.0, %v4677
        %4679 = vmatmul.bf16.gmra.mxu0 %v4471
        %v4680 = vpop.f32.mrf.mxu0
        %v4681 = vadd.f32 0.0, %v4680
        %v4682 = vpop.f32.mrf.mxu0
        %v4683 = vadd.f32 0.0, %v4682
        %4684 = vmatmul.bf16.gmra.mxu0 %v4474
        %v4685 = vpop.f32.mrf.mxu0
        %v4686 = vadd.f32 0.0, %v4685
        %v4687 = vpop.f32.mrf.mxu0
        %v4688 = vadd.f32 0.0, %v4687
        %4689 = vmatmul.bf16.gmra.mxu0 %v4477
        %v4690 = vpop.f32.mrf.mxu0
        %v4691 = vadd.f32 0.0, %v4690
        %v4692 = vpop.f32.mrf.mxu0
        %v4693 = vadd.f32 0.0, %v4692
        %4694 = vmatmul.bf16.gmra.mxu0 %v4480
        %v4695 = vpop.f32.mrf.mxu0
        %v4696 = vadd.f32 0.0, %v4695
        %v4697 = vpop.f32.mrf.mxu0
        %v4698 = vadd.f32 0.0, %v4697
        %4699 = vmatmul.bf16.gmra.mxu0 %v4483
        %v4700 = vpop.f32.mrf.mxu0
        %v4701 = vadd.f32 0.0, %v4700
        %v4702 = vpop.f32.mrf.mxu0
        %v4703 = vadd.f32 0.0, %v4702
        %4704 = vmatmul.bf16.gmra.mxu0 %v4486
        %v4705 = vpop.f32.mrf.mxu0
        %v4706 = vadd.f32 0.0, %v4705
        %v4707 = vpop.f32.mrf.mxu0
        %v4708 = vadd.f32 0.0, %v4707
        %4709 = vmatmul.bf16.gmra.mxu0 %v4489
        %v4710 = vpop.f32.mrf.mxu0
        %v4711 = vadd.f32 0.0, %v4710
        %v4712 = vpop.f32.mrf.mxu0
        %v4713 = vadd.f32 0.0, %v4712
        %4714 = vmatmul.bf16.gmra.mxu0 %v4492
        %v4715 = vpop.f32.mrf.mxu0
        %v4716 = vadd.f32 0.0, %v4715
        %v4717 = vpop.f32.mrf.mxu0
        %v4718 = vadd.f32 0.0, %v4717
        %4719 = vmatmul.bf16.gmra.mxu0 %v4495
        %v4720 = vpop.f32.mrf.mxu0
        %v4721 = vadd.f32 0.0, %v4720
        %v4722 = vpop.f32.mrf.mxu0
        %v4723 = vadd.f32 0.0, %v4722
        %4724 = vmatmul.bf16.gmra.mxu0 %v4498
        %v4725 = vpop.f32.mrf.mxu0
        %v4726 = vadd.f32 0.0, %v4725
        %v4727 = vpop.f32.mrf.mxu0
        %v4728 = vadd.f32 0.0, %v4727
        %4729 = vmatmul.bf16.gmra.mxu0 %v4501
        %v4730 = vpop.f32.mrf.mxu0
        %v4731 = vadd.f32 0.0, %v4730
        %v4732 = vpop.f32.mrf.mxu0
        %v4733 = vadd.f32 0.0, %v4732
        %4734 = vmatmul.bf16.gmra.mxu0 %v4504
        %v4735 = vpop.f32.mrf.mxu0
        %v4736 = vadd.f32 0.0, %v4735
        %v4737 = vpop.f32.mrf.mxu0
        %v4738 = vadd.f32 0.0, %v4737
        %4739 = vmatmul.bf16.gmra.mxu0 %v4507
        %v4740 = vpop.f32.mrf.mxu0
        %v4741 = vadd.f32 0.0, %v4740
        %v4742 = vpop.f32.mrf.mxu0
        %v4743 = vadd.f32 0.0, %v4742
        %4744 = vmatmul.bf16.gmra.mxu0 %v4510
        %v4745 = vpop.f32.mrf.mxu0
        %v4746 = vadd.f32 0.0, %v4745
        %v4747 = vpop.f32.mrf.mxu0
        %v4748 = vadd.f32 0.0, %v4747
        %4749 = vmatmul.bf16.gmra.mxu0 %v4513
        %v4750 = vpop.f32.mrf.mxu0
        %v4751 = vadd.f32 0.0, %v4750
        %v4752 = vpop.f32.mrf.mxu0
        %v4753 = vadd.f32 0.0, %v4752
        %4754 = vmatmul.bf16.gmra.mxu0 %v4516
        %v4755 = vpop.f32.mrf.mxu0
        %v4756 = vadd.f32 0.0, %v4755
        %v4757 = vpop.f32.mrf.mxu0
        %v4758 = vadd.f32 0.0, %v4757
        %4759 = vmatmul.bf16.gmra.mxu0 %v4519
        %v4760 = vpop.f32.mrf.mxu0
        %v4761 = vadd.f32 0.0, %v4760
        %v4762 = vpop.f32.mrf.mxu0
        %v4763 = vadd.f32 0.0, %v4762
        %4764 = vmatmul.bf16.gmra.mxu0 %v4522
        %v4765 = vpop.f32.mrf.mxu0
        %v4766 = vadd.f32 0.0, %v4765
        %v4767 = vpop.f32.mrf.mxu0
        %v4768 = vadd.f32 0.0, %v4767
        %4769 = vmatmul.bf16.gmra.mxu0 %v4525
        %v4770 = vpop.f32.mrf.mxu0
        %v4771 = vadd.f32 0.0, %v4770
        %v4772 = vpop.f32.mrf.mxu0
        %v4773 = vadd.f32 0.0, %v4772
        %4774 = vmatmul.bf16.gmra.mxu0 %v4528
        %v4775 = vpop.f32.mrf.mxu0
        %v4776 = vadd.f32 0.0, %v4775
        %v4777 = vpop.f32.mrf.mxu0
        %v4778 = vadd.f32 0.0, %v4777
        %4779 = vmatmul.bf16.gmra.mxu0 %v4531
        %v4780 = vpop.f32.mrf.mxu0
        %v4781 = vadd.f32 0.0, %v4780
        %v4782 = vpop.f32.mrf.mxu0
        %v4783 = vadd.f32 0.0, %v4782
        %4784 = vmatmul.bf16.gmra.mxu0 %v4534
        %v4785 = vpop.f32.mrf.mxu0
        %v4786 = vadd.f32 0.0, %v4785
        %v4787 = vpop.f32.mrf.mxu0
        %v4788 = vadd.f32 0.0, %v4787
        %4789 = vmatmul.bf16.gmra.mxu0 %v4537
        %v4790 = vpop.f32.mrf.mxu0
        %v4791 = vadd.f32 0.0, %v4790
        %v4792 = vpop.f32.mrf.mxu0
        %v4793 = vadd.f32 0.0, %v4792
        %4794 = vmatmul.bf16.gmra.mxu0 %v4540
        %v4795 = vpop.f32.mrf.mxu0
        %v4796 = vadd.f32 0.0, %v4795
        %v4797 = vpop.f32.mrf.mxu0
        %v4798 = vadd.f32 0.0, %v4797
        %4799 = vmatmul.bf16.gmra.mxu0 %v4543
        %v4800 = vpop.f32.mrf.mxu0
        %v4801 = vadd.f32 0.0, %v4800
        %v4802 = vpop.f32.mrf.mxu0
        %v4803 = vadd.f32 0.0, %v4802
        %4804 = vmatmul.bf16.gmra.mxu0 %v4546
        %v4805 = vpop.f32.mrf.mxu0
        %v4806 = vadd.f32 0.0, %v4805
        %v4807 = vpop.f32.mrf.mxu0
        %v4808 = vadd.f32 0.0, %v4807
        %4809 = vmatmul.bf16.gmra.mxu0 %v4549
        %v4810 = vpop.f32.mrf.mxu0
        %v4811 = vadd.f32 0.0, %v4810
        %v4812 = vpop.f32.mrf.mxu0
        %v4813 = vadd.f32 0.0, %v4812
        %4814 = vmatmul.bf16.gmra.mxu0 %v4552
        %v4815 = vpop.f32.mrf.mxu0
        %v4816 = vadd.f32 0.0, %v4815
        %v4817 = vpop.f32.mrf.mxu0
        %v4818 = vadd.f32 0.0, %v4817
        %4819 = vmatmul.bf16.gmra.mxu0 %v4555
        %v4820 = vpop.f32.mrf.mxu0
        %v4821 = vadd.f32 0.0, %v4820
        %v4822 = vpop.f32.mrf.mxu0
        %v4823 = vadd.f32 0.0, %v4822
        %4824 = vmatmul.bf16.gmra.mxu0 %v4558
        %v4825 = vpop.f32.mrf.mxu0
        %v4826 = vadd.f32 0.0, %v4825
        %v4827 = vpop.f32.mrf.mxu0
        %v4828 = vadd.f32 0.0, %v4827
        %4829 = vmatmul.bf16.gmra.mxu0 %v4561
        %v4830 = vpop.f32.mrf.mxu0
        %v4831 = vadd.f32 0.0, %v4830
        %v4832 = vpop.f32.mrf.mxu0
        %v4833 = vadd.f32 0.0, %v4832
        %4834 = vmatmul.bf16.gmra.mxu0 %v4564
        %v4835 = vpop.f32.mrf.mxu0
        %v4836 = vadd.f32 0.0, %v4835
        %v4837 = vpop.f32.mrf.mxu0
        %v4838 = vadd.f32 0.0, %v4837
        %4839 = vmatmul.bf16.gmra.mxu0 %v4567
        %v4840 = vpop.f32.mrf.mxu0
        %v4841 = vadd.f32 0.0, %v4840
        %v4842 = vpop.f32.mrf.mxu0
        %v4843 = vadd.f32 0.0, %v4842
        %4844 = vmatmul.bf16.gmra.mxu0 %v4570
        %v4845 = vpop.f32.mrf.mxu0
        %v4846 = vadd.f32 0.0, %v4845
        %v4847 = vpop.f32.mrf.mxu0
        %v4848 = vadd.f32 0.0, %v4847
        %4849 = vmatmul.bf16.gmra.mxu0 %v4573
        %v4850 = vpop.f32.mrf.mxu0
        %v4851 = vadd.f32 0.0, %v4850
        %v4852 = vpop.f32.mrf.mxu0
        %v4853 = vadd.f32 0.0, %v4852
        %4854 = vmatmul.bf16.gmra.mxu0 %v4576
        %v4855 = vpop.f32.mrf.mxu0
        %v4856 = vadd.f32 0.0, %v4855
        %v4857 = vpop.f32.mrf.mxu0
        %v4858 = vadd.f32 0.0, %v4857
        %4859 = vmatmul.bf16.gmra.mxu0 %v4579
        %v4860 = vpop.f32.mrf.mxu0
        %v4861 = vadd.f32 0.0, %v4860
        %v4862 = vpop.f32.mrf.mxu0
        %v4863 = vadd.f32 0.0, %v4862
        %4864 = vmatmul.bf16.gmra.mxu0 %v4582
        %v4865 = vpop.f32.mrf.mxu0
        %v4866 = vadd.f32 0.0, %v4865
        %v4867 = vpop.f32.mrf.mxu0
        %v4868 = vadd.f32 0.0, %v4867
        %4869 = vmatmul.bf16.gmra.mxu0 %v4585
        %v4870 = vpop.f32.mrf.mxu0
        %v4871 = vadd.f32 0.0, %v4870
        %v4872 = vpop.f32.mrf.mxu0
        %v4873 = vadd.f32 0.0, %v4872
        %4874 = vmatmul.bf16.gmra.mxu0 %v4588
        %v4875 = vpop.f32.mrf.mxu0
        %v4876 = vadd.f32 0.0, %v4875
        %v4877 = vpop.f32.mrf.mxu0
        %v4878 = vadd.f32 0.0, %v4877
        %4879 = vmatmul.bf16.gmra.mxu0 %v4591
        %v4880 = vpop.f32.mrf.mxu0
        %v4881 = vadd.f32 0.0, %v4880
        %v4882 = vpop.f32.mrf.mxu0
        %v4883 = vadd.f32 0.0, %v4882
        %4884 = vmatmul.bf16.gmra.mxu0 %v4594
        %v4885 = vpop.f32.mrf.mxu0
        %v4886 = vadd.f32 0.0, %v4885
        %v4887 = vpop.f32.mrf.mxu0
        %v4888 = vadd.f32 0.0, %v4887
        %4889 = vmatmul.bf16.gmra.mxu0 %v4597
        %v4890 = vpop.f32.mrf.mxu0
        %v4891 = vadd.f32 0.0, %v4890
        %v4892 = vpop.f32.mrf.mxu0
        %v4893 = vadd.f32 0.0, %v4892
        %4894 = vmatmul.bf16.gmra.mxu0 %v4600
        %v4895 = vpop.f32.mrf.mxu0
        %v4896 = vadd.f32 0.0, %v4895
        %v4897 = vpop.f32.mrf.mxu0
        %v4898 = vadd.f32 0.0, %v4897
        %4899 = vmatmul.bf16.gmra.mxu0 %v4603
        %v4900 = vpop.f32.mrf.mxu0
        %v4901 = vadd.f32 0.0, %v4900
        %v4902 = vpop.f32.mrf.mxu0
        %v4903 = vadd.f32 0.0, %v4902
        %4904 = vmatmul.bf16.gmra.mxu0 %v4606
        %v4905 = vpop.f32.mrf.mxu0
        %v4906 = vadd.f32 0.0, %v4905
        %v4907 = vpop.f32.mrf.mxu0
        %v4908 = vadd.f32 0.0, %v4907
        %4909 = vmatmul.bf16.gmra.mxu0 %v4609
        %v4910 = vpop.f32.mrf.mxu0
        %v4911 = vadd.f32 0.0, %v4910
        %v4912 = vpop.f32.mrf.mxu0
        %v4913 = vadd.f32 0.0, %v4912
        %4914 = vmatmul.bf16.gmra.mxu0 %v4612
        %v4915 = vpop.f32.mrf.mxu0
        %v4916 = vadd.f32 0.0, %v4915
        %v4917 = vpop.f32.mrf.mxu0
        %v4918 = vadd.f32 0.0, %v4917
        %4919 = vmatmul.bf16.gmra.mxu0 %v4615
        %v4920 = vpop.f32.mrf.mxu0
        %v4921 = vadd.f32 0.0, %v4920
        %v4922 = vpop.f32.mrf.mxu0
        %v4923 = vadd.f32 0.0, %v4922
        %4924 = vmatmul.bf16.gmra.mxu0 %v4618
        %v4925 = vpop.f32.mrf.mxu0
        %v4926 = vadd.f32 0.0, %v4925
        %v4927 = vpop.f32.mrf.mxu0
        %v4928 = vadd.f32 0.0, %v4927
        %4929 = vmatmul.bf16.gmra.mxu0 %v4621
        %v4930 = vpop.f32.mrf.mxu0
        %v4931 = vadd.f32 0.0, %v4930
        %v4932 = vpop.f32.mrf.mxu0
        %v4933 = vadd.f32 0.0, %v4932
        %4934 = vmatmul.bf16.gmra.mxu0 %v4624
        %v4935 = vpop.f32.mrf.mxu0
        %v4936 = vadd.f32 0.0, %v4935
        %v4937 = vpop.f32.mrf.mxu0
        %v4938 = vadd.f32 0.0, %v4937
        %4939 = vmatmul.bf16.gmra.mxu0 %v4627
        %v4940 = vpop.f32.mrf.mxu0
        %v4941 = vadd.f32 0.0, %v4940
        %v4942 = vpop.f32.mrf.mxu0
        %v4943 = vadd.f32 0.0, %v4942
        %4944 = vmatmul.bf16.gmra.mxu0 %v4630
        %v4945 = vpop.f32.mrf.mxu0
        %v4946 = vadd.f32 0.0, %v4945
        %v4947 = vpop.f32.mrf.mxu0
        %v4948 = vadd.f32 0.0, %v4947
        %4949 = vmatmul.bf16.gmra.mxu0 %v4633
        %v4950 = vpop.f32.mrf.mxu0
        %v4951 = vadd.f32 0.0, %v4950
        %v4952 = vpop.f32.mrf.mxu0
        %v4953 = vadd.f32 0.0, %v4952
        %4954 = vmatmul.bf16.gmra.mxu0 %v4636
        %v4955 = vpop.f32.mrf.mxu0
        %v4956 = vadd.f32 0.0, %v4955
        %v4957 = vpop.f32.mrf.mxu0
        %v4958 = vadd.f32 0.0, %v4957
        %4959 = vmatmul.bf16.gmra.mxu0 %v4639
        %v4960 = vpop.f32.mrf.mxu0
        %v4961 = vadd.f32 0.0, %v4960
        %v4962 = vpop.f32.mrf.mxu0
        %v4963 = vadd.f32 0.0, %v4962
        %4964 = vmatmul.bf16.gmra.mxu0 %v4642
        %v4965 = vpop.f32.mrf.mxu0
        %v4966 = vadd.f32 0.0, %v4965
        %v4967 = vpop.f32.mrf.mxu0
        %v4968 = vadd.f32 0.0, %v4967
        %4969 = vmatmul.bf16.gmra.mxu0 %v4645
        %v4970 = vpop.f32.mrf.mxu0
        %v4971 = vadd.f32 0.0, %v4970
        %v4972 = vpop.f32.mrf.mxu0
        %v4973 = vadd.f32 0.0, %v4972
        %4974 = vmatmul.bf16.gmra.mxu0 %v4648
        %v4975 = vpop.f32.mrf.mxu0
        %v4976 = vadd.f32 0.0, %v4975
        %v4977 = vpop.f32.mrf.mxu0
        %v4978 = vadd.f32 0.0, %v4977
        %4979 = vmatmul.bf16.gmra.mxu0 %v4651
        %v4980 = vpop.f32.mrf.mxu0
        %v4981 = vadd.f32 0.0, %v4980
        %v4982 = vpop.f32.mrf.mxu0
        %v4983 = vadd.f32 0.0, %v4982
        %4984 = vdwg.mxu0
        %v4985 = vadd.f32 %v4331, %v4666
        %v4986 = vadd.f32 %v4332, %v4668
        %v4987 = vadd.f32 %v4333, %v4671
        %v4988 = vadd.f32 %v4334, %v4673
        %v4989 = vadd.f32 %v4335, %v4676
        %v4990 = vadd.f32 %v4336, %v4678
        %v4991 = vadd.f32 %v4337, %v4681
        %v4992 = vadd.f32 %v4338, %v4683
        %v4993 = vadd.f32 %v4339, %v4686
        %v4994 = vadd.f32 %v4340, %v4688
        %v4995 = vadd.f32 %v4341, %v4691
        %v4996 = vadd.f32 %v4342, %v4693
        %v4997 = vadd.f32 %v4343, %v4696
        %v4998 = vadd.f32 %v4344, %v4698
        %v4999 = vadd.f32 %v4345, %v4701
        %v5000 = vadd.f32 %v4346, %v4703
        %v5001 = vadd.f32 %v4347, %v4706
        %v5002 = vadd.f32 %v4348, %v4708
        %v5003 = vadd.f32 %v4349, %v4711
        %v5004 = vadd.f32 %v4350, %v4713
        %v5005 = vadd.f32 %v4351, %v4716
        %v5006 = vadd.f32 %v4352, %v4718
        %v5007 = vadd.f32 %v4353, %v4721
        %v5008 = vadd.f32 %v4354, %v4723
        %v5009 = vadd.f32 %v4355, %v4726
        %v5010 = vadd.f32 %v4356, %v4728
        %v5011 = vadd.f32 %v4357, %v4731
        %v5012 = vadd.f32 %v4358, %v4733
        %v5013 = vadd.f32 %v4359, %v4736
        %v5014 = vadd.f32 %v4360, %v4738
        %v5015 = vadd.f32 %v4361, %v4741
        %v5016 = vadd.f32 %v4362, %v4743
        %v5017 = vadd.f32 %v4363, %v4746
        %v5018 = vadd.f32 %v4364, %v4748
        %v5019 = vadd.f32 %v4365, %v4751
        %v5020 = vadd.f32 %v4366, %v4753
        %v5021 = vadd.f32 %v4367, %v4756
        %v5022 = vadd.f32 %v4368, %v4758
        %v5023 = vadd.f32 %v4369, %v4761
        %v5024 = vadd.f32 %v4370, %v4763
        %v5025 = vadd.f32 %v4371, %v4766
        %v5026 = vadd.f32 %v4372, %v4768
        %v5027 = vadd.f32 %v4373, %v4771
        %v5028 = vadd.f32 %v4374, %v4773
        %v5029 = vadd.f32 %v4375, %v4776
        %v5030 = vadd.f32 %v4376, %v4778
        %v5031 = vadd.f32 %v4377, %v4781
        %v5032 = vadd.f32 %v4378, %v4783
        %v5033 = vadd.f32 %v4379, %v4786
        %v5034 = vadd.f32 %v4380, %v4788
        %v5035 = vadd.f32 %v4381, %v4791
        %v5036 = vadd.f32 %v4382, %v4793
        %v5037 = vadd.f32 %v4383, %v4796
        %v5038 = vadd.f32 %v4384, %v4798
        %v5039 = vadd.f32 %v4385, %v4801
        %v5040 = vadd.f32 %v4386, %v4803
        %v5041 = vadd.f32 %v4387, %v4806
        %v5042 = vadd.f32 %v4388, %v4808
        %v5043 = vadd.f32 %v4389, %v4811
        %v5044 = vadd.f32 %v4390, %v4813
        %v5045 = vadd.f32 %v4391, %v4816
        %v5046 = vadd.f32 %v4392, %v4818
        %v5047 = vadd.f32 %v4393, %v4821
        %v5048 = vadd.f32 %v4394, %v4823
        %v5049 = vadd.f32 %v4395, %v4826
        %v5050 = vadd.f32 %v4396, %v4828
        %v5051 = vadd.f32 %v4397, %v4831
        %v5052 = vadd.f32 %v4398, %v4833
        %v5053 = vadd.f32 %v4399, %v4836
        %v5054 = vadd.f32 %v4400, %v4838
        %v5055 = vadd.f32 %v4401, %v4841
        %v5056 = vadd.f32 %v4402, %v4843
        %v5057 = vadd.f32 %v4403, %v4846
        %v5058 = vadd.f32 %v4404, %v4848
        %v5059 = vadd.f32 %v4405, %v4851
        %v5060 = vadd.f32 %v4406, %v4853
        %v5061 = vadd.f32 %v4407, %v4856
        %v5062 = vadd.f32 %v4408, %v4858
        %v5063 = vadd.f32 %v4409, %v4861
        %v5064 = vadd.f32 %v4410, %v4863
        %v5065 = vadd.f32 %v4411, %v4866
        %v5066 = vadd.f32 %v4412, %v4868
        %v5067 = vadd.f32 %v4413, %v4871
        %v5068 = vadd.f32 %v4414, %v4873
        %v5069 = vadd.f32 %v4415, %v4876
        %v5070 = vadd.f32 %v4416, %v4878
        %v5071 = vadd.f32 %v4417, %v4881
        %v5072 = vadd.f32 %v4418, %v4883
        %v5073 = vadd.f32 %v4419, %v4886
        %v5074 = vadd.f32 %v4420, %v4888
        %v5075 = vadd.f32 %v4421, %v4891
        %v5076 = vadd.f32 %v4422, %v4893
        %v5077 = vadd.f32 %v4423, %v4896
        %v5078 = vadd.f32 %v4424, %v4898
        %v5079 = vadd.f32 %v4425, %v4901
        %v5080 = vadd.f32 %v4426, %v4903
        %v5081 = vadd.f32 %v4427, %v4906
        %v5082 = vadd.f32 %v4428, %v4908
        %v5083 = vadd.f32 %v4429, %v4911
        %v5084 = vadd.f32 %v4430, %v4913
        %v5085 = vadd.f32 %v4431, %v4916
        %v5086 = vadd.f32 %v4432, %v4918
        %v5087 = vadd.f32 %v4433, %v4921
        %v5088 = vadd.f32 %v4434, %v4923
        %v5089 = vadd.f32 %v4435, %v4926
        %v5090 = vadd.f32 %v4436, %v4928
        %v5091 = vadd.f32 %v4437, %v4931
        %v5092 = vadd.f32 %v4438, %v4933
        %v5093 = vadd.f32 %v4439, %v4936
        %v5094 = vadd.f32 %v4440, %v4938
        %v5095 = vadd.f32 %v4441, %v4941
        %v5096 = vadd.f32 %v4442, %v4943
        %v5097 = vadd.f32 %v4443, %v4946
        %v5098 = vadd.f32 %v4444, %v4948
        %v5099 = vadd.f32 %v4445, %v4951
        %v5100 = vadd.f32 %v4446, %v4953
        %v5101 = vadd.f32 %v4447, %v4956
        %v5102 = vadd.f32 %v4448, %v4958
        %v5103 = vadd.f32 %v4449, %v4961
        %v5104 = vadd.f32 %v4450, %v4963
        %v5105 = vadd.f32 %v4451, %v4966
        %v5106 = vadd.f32 %v4452, %v4968
        %v5107 = vadd.f32 %v4453, %v4971
        %v5108 = vadd.f32 %v4454, %v4973
        %v5109 = vadd.f32 %v4455, %v4976
        %v5110 = vadd.f32 %v4456, %v4978
        %v5111 = vadd.f32 %v4457, %v4981
        %v5112 = vadd.f32 %v4458, %v4983
        %s5113 = scalar_lea.vmem %s219, 10
        %v5114 = vld [vmem:[%s5113] sm:$0x3]
        %v5116 = vsel %vm1602, %v1522, 0
        %v5119 = vsel %vm1602, %v1597, 0
        %v5122 = vand.u32 %v5114, %v1798
        %5124 = vmatpush.bf16.msra.mxu0 0
        %5125 = vmatpush.bf16.msra.mxu0 0
        %5126 = vmatpush.bf16.msra.mxu0 0
        %5127 = vmatpush.bf16.msra.mxu0 0
        %5128 = vmatpush.bf16.msra.mxu0 0
        %5129 = vmatpush.bf16.msra.mxu0 0
        %5130 = vmatpush.bf16.msra.mxu0 0
        %5131 = vmatpush.bf16.msra.mxu0 %v5122
        %5132 = vmatmul.bf16.gmra.mxu0 %v4468
        %v5133 = vpop.f32.mrf.mxu0
        %v5134 = vadd.f32 0.0, %v5133
        %v5135 = vpop.f32.mrf.mxu0
        %v5136 = vadd.f32 0.0, %v5135
        %5137 = vmatmul.bf16.gmra.mxu0 %v4471
        %v5138 = vpop.f32.mrf.mxu0
        %v5139 = vadd.f32 0.0, %v5138
        %v5140 = vpop.f32.mrf.mxu0
        %v5141 = vadd.f32 0.0, %v5140
        %5142 = vmatmul.bf16.gmra.mxu0 %v4474
        %v5143 = vpop.f32.mrf.mxu0
        %v5144 = vadd.f32 0.0, %v5143
        %v5145 = vpop.f32.mrf.mxu0
        %v5146 = vadd.f32 0.0, %v5145
        %5147 = vmatmul.bf16.gmra.mxu0 %v4477
        %v5148 = vpop.f32.mrf.mxu0
        %v5149 = vadd.f32 0.0, %v5148
        %v5150 = vpop.f32.mrf.mxu0
        %v5151 = vadd.f32 0.0, %v5150
        %5152 = vmatmul.bf16.gmra.mxu0 %v4480
        %v5153 = vpop.f32.mrf.mxu0
        %v5154 = vadd.f32 0.0, %v5153
        %v5155 = vpop.f32.mrf.mxu0
        %v5156 = vadd.f32 0.0, %v5155
        %5157 = vmatmul.bf16.gmra.mxu0 %v4483
        %v5158 = vpop.f32.mrf.mxu0
        %v5159 = vadd.f32 0.0, %v5158
        %v5160 = vpop.f32.mrf.mxu0
        %v5161 = vadd.f32 0.0, %v5160
        %5162 = vmatmul.bf16.gmra.mxu0 %v4486
        %v5163 = vpop.f32.mrf.mxu0
        %v5164 = vadd.f32 0.0, %v5163
        %v5165 = vpop.f32.mrf.mxu0
        %v5166 = vadd.f32 0.0, %v5165
        %5167 = vmatmul.bf16.gmra.mxu0 %v4489
        %v5168 = vpop.f32.mrf.mxu0
        %v5169 = vadd.f32 0.0, %v5168
        %v5170 = vpop.f32.mrf.mxu0
        %v5171 = vadd.f32 0.0, %v5170
        %5172 = vmatmul.bf16.gmra.mxu0 %v4492
        %v5173 = vpop.f32.mrf.mxu0
        %v5174 = vadd.f32 0.0, %v5173
        %v5175 = vpop.f32.mrf.mxu0
        %v5176 = vadd.f32 0.0, %v5175
        %5177 = vmatmul.bf16.gmra.mxu0 %v4495
        %v5178 = vpop.f32.mrf.mxu0
        %v5179 = vadd.f32 0.0, %v5178
        %v5180 = vpop.f32.mrf.mxu0
        %v5181 = vadd.f32 0.0, %v5180
        %5182 = vmatmul.bf16.gmra.mxu0 %v4498
        %v5183 = vpop.f32.mrf.mxu0
        %v5184 = vadd.f32 0.0, %v5183
        %v5185 = vpop.f32.mrf.mxu0
        %v5186 = vadd.f32 0.0, %v5185
        %5187 = vmatmul.bf16.gmra.mxu0 %v4501
        %v5188 = vpop.f32.mrf.mxu0
        %v5189 = vadd.f32 0.0, %v5188
        %v5190 = vpop.f32.mrf.mxu0
        %v5191 = vadd.f32 0.0, %v5190
        %5192 = vmatmul.bf16.gmra.mxu0 %v4504
        %v5193 = vpop.f32.mrf.mxu0
        %v5194 = vadd.f32 0.0, %v5193
        %v5195 = vpop.f32.mrf.mxu0
        %v5196 = vadd.f32 0.0, %v5195
        %5197 = vmatmul.bf16.gmra.mxu0 %v4507
        %v5198 = vpop.f32.mrf.mxu0
        %v5199 = vadd.f32 0.0, %v5198
        %v5200 = vpop.f32.mrf.mxu0
        %v5201 = vadd.f32 0.0, %v5200
        %5202 = vmatmul.bf16.gmra.mxu0 %v4510
        %v5203 = vpop.f32.mrf.mxu0
        %v5204 = vadd.f32 0.0, %v5203
        %v5205 = vpop.f32.mrf.mxu0
        %v5206 = vadd.f32 0.0, %v5205
        %5207 = vmatmul.bf16.gmra.mxu0 %v4513
        %v5208 = vpop.f32.mrf.mxu0
        %v5209 = vadd.f32 0.0, %v5208
        %v5210 = vpop.f32.mrf.mxu0
        %v5211 = vadd.f32 0.0, %v5210
        %5212 = vmatmul.bf16.gmra.mxu0 %v4516
        %v5213 = vpop.f32.mrf.mxu0
        %v5214 = vadd.f32 0.0, %v5213
        %v5215 = vpop.f32.mrf.mxu0
        %v5216 = vadd.f32 0.0, %v5215
        %5217 = vmatmul.bf16.gmra.mxu0 %v4519
        %v5218 = vpop.f32.mrf.mxu0
        %v5219 = vadd.f32 0.0, %v5218
        %v5220 = vpop.f32.mrf.mxu0
        %v5221 = vadd.f32 0.0, %v5220
        %5222 = vmatmul.bf16.gmra.mxu0 %v4522
        %v5223 = vpop.f32.mrf.mxu0
        %v5224 = vadd.f32 0.0, %v5223
        %v5225 = vpop.f32.mrf.mxu0
        %v5226 = vadd.f32 0.0, %v5225
        %5227 = vmatmul.bf16.gmra.mxu0 %v4525
        %v5228 = vpop.f32.mrf.mxu0
        %v5229 = vadd.f32 0.0, %v5228
        %v5230 = vpop.f32.mrf.mxu0
        %v5231 = vadd.f32 0.0, %v5230
        %5232 = vmatmul.bf16.gmra.mxu0 %v4528
        %v5233 = vpop.f32.mrf.mxu0
        %v5234 = vadd.f32 0.0, %v5233
        %v5235 = vpop.f32.mrf.mxu0
        %v5236 = vadd.f32 0.0, %v5235
        %5237 = vmatmul.bf16.gmra.mxu0 %v4531
        %v5238 = vpop.f32.mrf.mxu0
        %v5239 = vadd.f32 0.0, %v5238
        %v5240 = vpop.f32.mrf.mxu0
        %v5241 = vadd.f32 0.0, %v5240
        %5242 = vmatmul.bf16.gmra.mxu0 %v4534
        %v5243 = vpop.f32.mrf.mxu0
        %v5244 = vadd.f32 0.0, %v5243
        %v5245 = vpop.f32.mrf.mxu0
        %v5246 = vadd.f32 0.0, %v5245
        %5247 = vmatmul.bf16.gmra.mxu0 %v4537
        %v5248 = vpop.f32.mrf.mxu0
        %v5249 = vadd.f32 0.0, %v5248
        %v5250 = vpop.f32.mrf.mxu0
        %v5251 = vadd.f32 0.0, %v5250
        %5252 = vmatmul.bf16.gmra.mxu0 %v4540
        %v5253 = vpop.f32.mrf.mxu0
        %v5254 = vadd.f32 0.0, %v5253
        %v5255 = vpop.f32.mrf.mxu0
        %v5256 = vadd.f32 0.0, %v5255
        %5257 = vmatmul.bf16.gmra.mxu0 %v4543
        %v5258 = vpop.f32.mrf.mxu0
        %v5259 = vadd.f32 0.0, %v5258
        %v5260 = vpop.f32.mrf.mxu0
        %v5261 = vadd.f32 0.0, %v5260
        %5262 = vmatmul.bf16.gmra.mxu0 %v4546
        %v5263 = vpop.f32.mrf.mxu0
        %v5264 = vadd.f32 0.0, %v5263
        %v5265 = vpop.f32.mrf.mxu0
        %v5266 = vadd.f32 0.0, %v5265
        %5267 = vmatmul.bf16.gmra.mxu0 %v4549
        %v5268 = vpop.f32.mrf.mxu0
        %v5269 = vadd.f32 0.0, %v5268
        %v5270 = vpop.f32.mrf.mxu0
        %v5271 = vadd.f32 0.0, %v5270
        %5272 = vmatmul.bf16.gmra.mxu0 %v4552
        %v5273 = vpop.f32.mrf.mxu0
        %v5274 = vadd.f32 0.0, %v5273
        %v5275 = vpop.f32.mrf.mxu0
        %v5276 = vadd.f32 0.0, %v5275
        %5277 = vmatmul.bf16.gmra.mxu0 %v4555
        %v5278 = vpop.f32.mrf.mxu0
        %v5279 = vadd.f32 0.0, %v5278
        %v5280 = vpop.f32.mrf.mxu0
        %v5281 = vadd.f32 0.0, %v5280
        %5282 = vmatmul.bf16.gmra.mxu0 %v4558
        %v5283 = vpop.f32.mrf.mxu0
        %v5284 = vadd.f32 0.0, %v5283
        %v5285 = vpop.f32.mrf.mxu0
        %v5286 = vadd.f32 0.0, %v5285
        %5287 = vmatmul.bf16.gmra.mxu0 %v4561
        %v5288 = vpop.f32.mrf.mxu0
        %v5289 = vadd.f32 0.0, %v5288
        %v5290 = vpop.f32.mrf.mxu0
        %v5291 = vadd.f32 0.0, %v5290
        %5292 = vmatmul.bf16.gmra.mxu0 %v4564
        %v5293 = vpop.f32.mrf.mxu0
        %v5294 = vadd.f32 0.0, %v5293
        %v5295 = vpop.f32.mrf.mxu0
        %v5296 = vadd.f32 0.0, %v5295
        %5297 = vmatmul.bf16.gmra.mxu0 %v4567
        %v5298 = vpop.f32.mrf.mxu0
        %v5299 = vadd.f32 0.0, %v5298
        %v5300 = vpop.f32.mrf.mxu0
        %v5301 = vadd.f32 0.0, %v5300
        %5302 = vmatmul.bf16.gmra.mxu0 %v4570
        %v5303 = vpop.f32.mrf.mxu0
        %v5304 = vadd.f32 0.0, %v5303
        %v5305 = vpop.f32.mrf.mxu0
        %v5306 = vadd.f32 0.0, %v5305
        %5307 = vmatmul.bf16.gmra.mxu0 %v4573
        %v5308 = vpop.f32.mrf.mxu0
        %v5309 = vadd.f32 0.0, %v5308
        %v5310 = vpop.f32.mrf.mxu0
        %v5311 = vadd.f32 0.0, %v5310
        %5312 = vmatmul.bf16.gmra.mxu0 %v4576
        %v5313 = vpop.f32.mrf.mxu0
        %v5314 = vadd.f32 0.0, %v5313
        %v5315 = vpop.f32.mrf.mxu0
        %v5316 = vadd.f32 0.0, %v5315
        %5317 = vmatmul.bf16.gmra.mxu0 %v4579
        %v5318 = vpop.f32.mrf.mxu0
        %v5319 = vadd.f32 0.0, %v5318
        %v5320 = vpop.f32.mrf.mxu0
        %v5321 = vadd.f32 0.0, %v5320
        %5322 = vmatmul.bf16.gmra.mxu0 %v4582
        %v5323 = vpop.f32.mrf.mxu0
        %v5324 = vadd.f32 0.0, %v5323
        %v5325 = vpop.f32.mrf.mxu0
        %v5326 = vadd.f32 0.0, %v5325
        %5327 = vmatmul.bf16.gmra.mxu0 %v4585
        %v5328 = vpop.f32.mrf.mxu0
        %v5329 = vadd.f32 0.0, %v5328
        %v5330 = vpop.f32.mrf.mxu0
        %v5331 = vadd.f32 0.0, %v5330
        %5332 = vmatmul.bf16.gmra.mxu0 %v4588
        %v5333 = vpop.f32.mrf.mxu0
        %v5334 = vadd.f32 0.0, %v5333
        %v5335 = vpop.f32.mrf.mxu0
        %v5336 = vadd.f32 0.0, %v5335
        %5337 = vmatmul.bf16.gmra.mxu0 %v4591
        %v5338 = vpop.f32.mrf.mxu0
        %v5339 = vadd.f32 0.0, %v5338
        %v5340 = vpop.f32.mrf.mxu0
        %v5341 = vadd.f32 0.0, %v5340
        %5342 = vmatmul.bf16.gmra.mxu0 %v4594
        %v5343 = vpop.f32.mrf.mxu0
        %v5344 = vadd.f32 0.0, %v5343
        %v5345 = vpop.f32.mrf.mxu0
        %v5346 = vadd.f32 0.0, %v5345
        %5347 = vmatmul.bf16.gmra.mxu0 %v4597
        %v5348 = vpop.f32.mrf.mxu0
        %v5349 = vadd.f32 0.0, %v5348
        %v5350 = vpop.f32.mrf.mxu0
        %v5351 = vadd.f32 0.0, %v5350
        %5352 = vmatmul.bf16.gmra.mxu0 %v4600
        %v5353 = vpop.f32.mrf.mxu0
        %v5354 = vadd.f32 0.0, %v5353
        %v5355 = vpop.f32.mrf.mxu0
        %v5356 = vadd.f32 0.0, %v5355
        %5357 = vmatmul.bf16.gmra.mxu0 %v4603
        %v5358 = vpop.f32.mrf.mxu0
        %v5359 = vadd.f32 0.0, %v5358
        %v5360 = vpop.f32.mrf.mxu0
        %v5361 = vadd.f32 0.0, %v5360
        %5362 = vmatmul.bf16.gmra.mxu0 %v4606
        %v5363 = vpop.f32.mrf.mxu0
        %v5364 = vadd.f32 0.0, %v5363
        %v5365 = vpop.f32.mrf.mxu0
        %v5366 = vadd.f32 0.0, %v5365
        %5367 = vmatmul.bf16.gmra.mxu0 %v4609
        %v5368 = vpop.f32.mrf.mxu0
        %v5369 = vadd.f32 0.0, %v5368
        %v5370 = vpop.f32.mrf.mxu0
        %v5371 = vadd.f32 0.0, %v5370
        %5372 = vmatmul.bf16.gmra.mxu0 %v4612
        %v5373 = vpop.f32.mrf.mxu0
        %v5374 = vadd.f32 0.0, %v5373
        %v5375 = vpop.f32.mrf.mxu0
        %v5376 = vadd.f32 0.0, %v5375
        %5377 = vmatmul.bf16.gmra.mxu0 %v4615
        %v5378 = vpop.f32.mrf.mxu0
        %v5379 = vadd.f32 0.0, %v5378
        %v5380 = vpop.f32.mrf.mxu0
        %v5381 = vadd.f32 0.0, %v5380
        %5382 = vmatmul.bf16.gmra.mxu0 %v4618
        %v5383 = vpop.f32.mrf.mxu0
        %v5384 = vadd.f32 0.0, %v5383
        %v5385 = vpop.f32.mrf.mxu0
        %v5386 = vadd.f32 0.0, %v5385
        %5387 = vmatmul.bf16.gmra.mxu0 %v4621
        %v5388 = vpop.f32.mrf.mxu0
        %v5389 = vadd.f32 0.0, %v5388
        %v5390 = vpop.f32.mrf.mxu0
        %v5391 = vadd.f32 0.0, %v5390
        %5392 = vmatmul.bf16.gmra.mxu0 %v4624
        %v5393 = vpop.f32.mrf.mxu0
        %v5394 = vadd.f32 0.0, %v5393
        %v5395 = vpop.f32.mrf.mxu0
        %v5396 = vadd.f32 0.0, %v5395
        %5397 = vmatmul.bf16.gmra.mxu0 %v4627
        %v5398 = vpop.f32.mrf.mxu0
        %v5399 = vadd.f32 0.0, %v5398
        %v5400 = vpop.f32.mrf.mxu0
        %v5401 = vadd.f32 0.0, %v5400
        %5402 = vmatmul.bf16.gmra.mxu0 %v4630
        %v5403 = vpop.f32.mrf.mxu0
        %v5404 = vadd.f32 0.0, %v5403
        %v5405 = vpop.f32.mrf.mxu0
        %v5406 = vadd.f32 0.0, %v5405
        %5407 = vmatmul.bf16.gmra.mxu0 %v4633
        %v5408 = vpop.f32.mrf.mxu0
        %v5409 = vadd.f32 0.0, %v5408
        %v5410 = vpop.f32.mrf.mxu0
        %v5411 = vadd.f32 0.0, %v5410
        %5412 = vmatmul.bf16.gmra.mxu0 %v4636
        %v5413 = vpop.f32.mrf.mxu0
        %v5414 = vadd.f32 0.0, %v5413
        %v5415 = vpop.f32.mrf.mxu0
        %v5416 = vadd.f32 0.0, %v5415
        %5417 = vmatmul.bf16.gmra.mxu0 %v4639
        %v5418 = vpop.f32.mrf.mxu0
        %v5419 = vadd.f32 0.0, %v5418
        %v5420 = vpop.f32.mrf.mxu0
        %v5421 = vadd.f32 0.0, %v5420
        %5422 = vmatmul.bf16.gmra.mxu0 %v4642
        %v5423 = vpop.f32.mrf.mxu0
        %v5424 = vadd.f32 0.0, %v5423
        %v5425 = vpop.f32.mrf.mxu0
        %v5426 = vadd.f32 0.0, %v5425
        %5427 = vmatmul.bf16.gmra.mxu0 %v4645
        %v5428 = vpop.f32.mrf.mxu0
        %v5429 = vadd.f32 0.0, %v5428
        %v5430 = vpop.f32.mrf.mxu0
        %v5431 = vadd.f32 0.0, %v5430
        %5432 = vmatmul.bf16.gmra.mxu0 %v4648
        %v5433 = vpop.f32.mrf.mxu0
        %v5434 = vadd.f32 0.0, %v5433
        %v5435 = vpop.f32.mrf.mxu0
        %v5436 = vadd.f32 0.0, %v5435
        %5437 = vmatmul.bf16.gmra.mxu0 %v4651
        %v5438 = vpop.f32.mrf.mxu0
        %v5439 = vadd.f32 0.0, %v5438
        %v5440 = vpop.f32.mrf.mxu0
        %v5441 = vadd.f32 0.0, %v5440
        %5442 = vmatmul.bf16.gmra.mxu0 %v5116
        %v5443 = vpop.f32.mrf.mxu0
        %v5444 = vadd.f32 0.0, %v5443
        %v5445 = vpop.f32.mrf.mxu0
        %v5446 = vadd.f32 0.0, %v5445
        %5447 = vmatmul.bf16.gmra.mxu0 %v5119
        %v5448 = vpop.f32.mrf.mxu0
        %v5449 = vadd.f32 0.0, %v5448
        %v5450 = vpop.f32.mrf.mxu0
        %v5451 = vadd.f32 0.0, %v5450
        %5452 = vdwg.mxu0
        %v5453 = vadd.f32 %v4985, %v5134
        %v5454 = vadd.f32 %v4986, %v5136
        %v5455 = vadd.f32 %v4987, %v5139
        %v5456 = vadd.f32 %v4988, %v5141
        %v5457 = vadd.f32 %v4989, %v5144
        %v5458 = vadd.f32 %v4990, %v5146
        %v5459 = vadd.f32 %v4991, %v5149
        %v5460 = vadd.f32 %v4992, %v5151
        %v5461 = vadd.f32 %v4993, %v5154
        %v5462 = vadd.f32 %v4994, %v5156
        %v5463 = vadd.f32 %v4995, %v5159
        %v5464 = vadd.f32 %v4996, %v5161
        %v5465 = vadd.f32 %v4997, %v5164
        %v5466 = vadd.f32 %v4998, %v5166
        %v5467 = vadd.f32 %v4999, %v5169
        %v5468 = vadd.f32 %v5000, %v5171
        %v5469 = vadd.f32 %v5001, %v5174
        %v5470 = vadd.f32 %v5002, %v5176
        %v5471 = vadd.f32 %v5003, %v5179
        %v5472 = vadd.f32 %v5004, %v5181
        %v5473 = vadd.f32 %v5005, %v5184
        %v5474 = vadd.f32 %v5006, %v5186
        %v5475 = vadd.f32 %v5007, %v5189
        %v5476 = vadd.f32 %v5008, %v5191
        %v5477 = vadd.f32 %v5009, %v5194
        %v5478 = vadd.f32 %v5010, %v5196
        %v5479 = vadd.f32 %v5011, %v5199
        %v5480 = vadd.f32 %v5012, %v5201
        %v5481 = vadd.f32 %v5013, %v5204
        %v5482 = vadd.f32 %v5014, %v5206
        %v5483 = vadd.f32 %v5015, %v5209
        %v5484 = vadd.f32 %v5016, %v5211
        %v5485 = vadd.f32 %v5017, %v5214
        %v5486 = vadd.f32 %v5018, %v5216
        %v5487 = vadd.f32 %v5019, %v5219
        %v5488 = vadd.f32 %v5020, %v5221
        %v5489 = vadd.f32 %v5021, %v5224
        %v5490 = vadd.f32 %v5022, %v5226
        %v5491 = vadd.f32 %v5023, %v5229
        %v5492 = vadd.f32 %v5024, %v5231
        %v5493 = vadd.f32 %v5025, %v5234
        %v5494 = vadd.f32 %v5026, %v5236
        %v5495 = vadd.f32 %v5027, %v5239
        %v5496 = vadd.f32 %v5028, %v5241
        %v5497 = vadd.f32 %v5029, %v5244
        %v5498 = vadd.f32 %v5030, %v5246
        %v5499 = vadd.f32 %v5031, %v5249
        %v5500 = vadd.f32 %v5032, %v5251
        %v5501 = vadd.f32 %v5033, %v5254
        %v5502 = vadd.f32 %v5034, %v5256
        %v5503 = vadd.f32 %v5035, %v5259
        %v5504 = vadd.f32 %v5036, %v5261
        %v5505 = vadd.f32 %v5037, %v5264
        %v5506 = vadd.f32 %v5038, %v5266
        %v5507 = vadd.f32 %v5039, %v5269
        %v5508 = vadd.f32 %v5040, %v5271
        %v5509 = vadd.f32 %v5041, %v5274
        %v5510 = vadd.f32 %v5042, %v5276
        %v5511 = vadd.f32 %v5043, %v5279
        %v5512 = vadd.f32 %v5044, %v5281
        %v5513 = vadd.f32 %v5045, %v5284
        %v5514 = vadd.f32 %v5046, %v5286
        %v5515 = vadd.f32 %v5047, %v5289
        %v5516 = vadd.f32 %v5048, %v5291
        %v5517 = vadd.f32 %v5049, %v5294
        %v5518 = vadd.f32 %v5050, %v5296
        %v5519 = vadd.f32 %v5051, %v5299
        %v5520 = vadd.f32 %v5052, %v5301
        %v5521 = vadd.f32 %v5053, %v5304
        %v5522 = vadd.f32 %v5054, %v5306
        %v5523 = vadd.f32 %v5055, %v5309
        %v5524 = vadd.f32 %v5056, %v5311
        %v5525 = vadd.f32 %v5057, %v5314
        %v5526 = vadd.f32 %v5058, %v5316
        %v5527 = vadd.f32 %v5059, %v5319
        %v5528 = vadd.f32 %v5060, %v5321
        %v5529 = vadd.f32 %v5061, %v5324
        %v5530 = vadd.f32 %v5062, %v5326
        %v5531 = vadd.f32 %v5063, %v5329
        %v5532 = vadd.f32 %v5064, %v5331
        %v5533 = vadd.f32 %v5065, %v5334
        %v5534 = vadd.f32 %v5066, %v5336
        %v5535 = vadd.f32 %v5067, %v5339
        %v5536 = vadd.f32 %v5068, %v5341
        %v5537 = vadd.f32 %v5069, %v5344
        %v5538 = vadd.f32 %v5070, %v5346
        %v5539 = vadd.f32 %v5071, %v5349
        %v5540 = vadd.f32 %v5072, %v5351
        %v5541 = vadd.f32 %v5073, %v5354
        %v5542 = vadd.f32 %v5074, %v5356
        %v5543 = vadd.f32 %v5075, %v5359
        %v5544 = vadd.f32 %v5076, %v5361
        %v5545 = vadd.f32 %v5077, %v5364
        %v5546 = vadd.f32 %v5078, %v5366
        %v5547 = vadd.f32 %v5079, %v5369
        %v5548 = vadd.f32 %v5080, %v5371
        %v5549 = vadd.f32 %v5081, %v5374
        %v5550 = vadd.f32 %v5082, %v5376
        %v5551 = vadd.f32 %v5083, %v5379
        %v5552 = vadd.f32 %v5084, %v5381
        %v5553 = vadd.f32 %v5085, %v5384
        %v5554 = vadd.f32 %v5086, %v5386
        %v5555 = vadd.f32 %v5087, %v5389
        %v5556 = vadd.f32 %v5088, %v5391
        %v5557 = vadd.f32 %v5089, %v5394
        %v5558 = vadd.f32 %v5090, %v5396
        %v5559 = vadd.f32 %v5091, %v5399
        %v5560 = vadd.f32 %v5092, %v5401
        %v5561 = vadd.f32 %v5093, %v5404
        %v5562 = vadd.f32 %v5094, %v5406
        %v5563 = vadd.f32 %v5095, %v5409
        %v5564 = vadd.f32 %v5096, %v5411
        %v5565 = vadd.f32 %v5097, %v5414
        %v5566 = vadd.f32 %v5098, %v5416
        %v5567 = vadd.f32 %v5099, %v5419
        %v5568 = vadd.f32 %v5100, %v5421
        %v5569 = vadd.f32 %v5101, %v5424
        %v5570 = vadd.f32 %v5102, %v5426
        %v5571 = vadd.f32 %v5103, %v5429
        %v5572 = vadd.f32 %v5104, %v5431
        %v5573 = vadd.f32 %v5105, %v5434
        %v5574 = vadd.f32 %v5106, %v5436
        %v5575 = vadd.f32 %v5107, %v5439
        %v5576 = vadd.f32 %v5108, %v5441
        %v5577 = vadd.f32 %v5109, %v5444
        %v5578 = vadd.f32 %v5110, %v5446
        %v5579 = vadd.f32 %v5111, %v5449
        %v5580 = vadd.f32 %v5112, %v5451
        %s5581 = scalar_lea.vmem %s219, 16
        %v5582 = vld [vmem:[%s5581] sm:$0x3]
        %v5584 = vsel %vm1602, %v1527, 0
        %v5587 = vsel %vm1602, %v1598, 0
        %v5590 = vand.u32 %v5582, %v1798
        %5592 = vmatpush.bf16.msra.mxu0 0
        %5593 = vmatpush.bf16.msra.mxu0 0
        %5594 = vmatpush.bf16.msra.mxu0 0
        %5595 = vmatpush.bf16.msra.mxu0 0
        %5596 = vmatpush.bf16.msra.mxu0 0
        %5597 = vmatpush.bf16.msra.mxu0 0
        %5598 = vmatpush.bf16.msra.mxu0 0
        %5599 = vmatpush.bf16.msra.mxu0 %v5590
        %5600 = vmatmul.bf16.gmra.mxu0 %v4474
        %v5601 = vpop.f32.mrf.mxu0
        %v5602 = vadd.f32 0.0, %v5601
        %v5603 = vpop.f32.mrf.mxu0
        %v5604 = vadd.f32 0.0, %v5603
        %5605 = vmatmul.bf16.gmra.mxu0 %v4477
        %v5606 = vpop.f32.mrf.mxu0
        %v5607 = vadd.f32 0.0, %v5606
        %v5608 = vpop.f32.mrf.mxu0
        %v5609 = vadd.f32 0.0, %v5608
        %5610 = vmatmul.bf16.gmra.mxu0 %v4480
        %v5611 = vpop.f32.mrf.mxu0
        %v5612 = vadd.f32 0.0, %v5611
        %v5613 = vpop.f32.mrf.mxu0
        %v5614 = vadd.f32 0.0, %v5613
        %5615 = vmatmul.bf16.gmra.mxu0 %v4483
        %v5616 = vpop.f32.mrf.mxu0
        %v5617 = vadd.f32 0.0, %v5616
        %v5618 = vpop.f32.mrf.mxu0
        %v5619 = vadd.f32 0.0, %v5618
        %5620 = vmatmul.bf16.gmra.mxu0 %v4486
        %v5621 = vpop.f32.mrf.mxu0
        %v5622 = vadd.f32 0.0, %v5621
        %v5623 = vpop.f32.mrf.mxu0
        %v5624 = vadd.f32 0.0, %v5623
        %5625 = vmatmul.bf16.gmra.mxu0 %v4489
        %v5626 = vpop.f32.mrf.mxu0
        %v5627 = vadd.f32 0.0, %v5626
        %v5628 = vpop.f32.mrf.mxu0
        %v5629 = vadd.f32 0.0, %v5628
        %5630 = vmatmul.bf16.gmra.mxu0 %v4492
        %v5631 = vpop.f32.mrf.mxu0
        %v5632 = vadd.f32 0.0, %v5631
        %v5633 = vpop.f32.mrf.mxu0
        %v5634 = vadd.f32 0.0, %v5633
        %5635 = vmatmul.bf16.gmra.mxu0 %v4495
        %v5636 = vpop.f32.mrf.mxu0
        %v5637 = vadd.f32 0.0, %v5636
        %v5638 = vpop.f32.mrf.mxu0
        %v5639 = vadd.f32 0.0, %v5638
        %5640 = vmatmul.bf16.gmra.mxu0 %v4498
        %v5641 = vpop.f32.mrf.mxu0
        %v5642 = vadd.f32 0.0, %v5641
        %v5643 = vpop.f32.mrf.mxu0
        %v5644 = vadd.f32 0.0, %v5643
        %5645 = vmatmul.bf16.gmra.mxu0 %v4501
        %v5646 = vpop.f32.mrf.mxu0
        %v5647 = vadd.f32 0.0, %v5646
        %v5648 = vpop.f32.mrf.mxu0
        %v5649 = vadd.f32 0.0, %v5648
        %5650 = vmatmul.bf16.gmra.mxu0 %v4504
        %v5651 = vpop.f32.mrf.mxu0
        %v5652 = vadd.f32 0.0, %v5651
        %v5653 = vpop.f32.mrf.mxu0
        %v5654 = vadd.f32 0.0, %v5653
        %5655 = vmatmul.bf16.gmra.mxu0 %v4507
        %v5656 = vpop.f32.mrf.mxu0
        %v5657 = vadd.f32 0.0, %v5656
        %v5658 = vpop.f32.mrf.mxu0
        %v5659 = vadd.f32 0.0, %v5658
        %5660 = vmatmul.bf16.gmra.mxu0 %v4510
        %v5661 = vpop.f32.mrf.mxu0
        %v5662 = vadd.f32 0.0, %v5661
        %v5663 = vpop.f32.mrf.mxu0
        %v5664 = vadd.f32 0.0, %v5663
        %5665 = vmatmul.bf16.gmra.mxu0 %v4513
        %v5666 = vpop.f32.mrf.mxu0
        %v5667 = vadd.f32 0.0, %v5666
        %v5668 = vpop.f32.mrf.mxu0
        %v5669 = vadd.f32 0.0, %v5668
        %5670 = vmatmul.bf16.gmra.mxu0 %v4516
        %v5671 = vpop.f32.mrf.mxu0
        %v5672 = vadd.f32 0.0, %v5671
        %v5673 = vpop.f32.mrf.mxu0
        %v5674 = vadd.f32 0.0, %v5673
        %5675 = vmatmul.bf16.gmra.mxu0 %v4519
        %v5676 = vpop.f32.mrf.mxu0
        %v5677 = vadd.f32 0.0, %v5676
        %v5678 = vpop.f32.mrf.mxu0
        %v5679 = vadd.f32 0.0, %v5678
        %5680 = vmatmul.bf16.gmra.mxu0 %v4522
        %v5681 = vpop.f32.mrf.mxu0
        %v5682 = vadd.f32 0.0, %v5681
        %v5683 = vpop.f32.mrf.mxu0
        %v5684 = vadd.f32 0.0, %v5683
        %5685 = vmatmul.bf16.gmra.mxu0 %v4525
        %v5686 = vpop.f32.mrf.mxu0
        %v5687 = vadd.f32 0.0, %v5686
        %v5688 = vpop.f32.mrf.mxu0
        %v5689 = vadd.f32 0.0, %v5688
        %5690 = vmatmul.bf16.gmra.mxu0 %v4528
        %v5691 = vpop.f32.mrf.mxu0
        %v5692 = vadd.f32 0.0, %v5691
        %v5693 = vpop.f32.mrf.mxu0
        %v5694 = vadd.f32 0.0, %v5693
        %5695 = vmatmul.bf16.gmra.mxu0 %v4531
        %v5696 = vpop.f32.mrf.mxu0
        %v5697 = vadd.f32 0.0, %v5696
        %v5698 = vpop.f32.mrf.mxu0
        %v5699 = vadd.f32 0.0, %v5698
        %5700 = vmatmul.bf16.gmra.mxu0 %v4534
        %v5701 = vpop.f32.mrf.mxu0
        %v5702 = vadd.f32 0.0, %v5701
        %v5703 = vpop.f32.mrf.mxu0
        %v5704 = vadd.f32 0.0, %v5703
        %5705 = vmatmul.bf16.gmra.mxu0 %v4537
        %v5706 = vpop.f32.mrf.mxu0
        %v5707 = vadd.f32 0.0, %v5706
        %v5708 = vpop.f32.mrf.mxu0
        %v5709 = vadd.f32 0.0, %v5708
        %5710 = vmatmul.bf16.gmra.mxu0 %v4540
        %v5711 = vpop.f32.mrf.mxu0
        %v5712 = vadd.f32 0.0, %v5711
        %v5713 = vpop.f32.mrf.mxu0
        %v5714 = vadd.f32 0.0, %v5713
        %5715 = vmatmul.bf16.gmra.mxu0 %v4543
        %v5716 = vpop.f32.mrf.mxu0
        %v5717 = vadd.f32 0.0, %v5716
        %v5718 = vpop.f32.mrf.mxu0
        %v5719 = vadd.f32 0.0, %v5718
        %5720 = vmatmul.bf16.gmra.mxu0 %v4546
        %v5721 = vpop.f32.mrf.mxu0
        %v5722 = vadd.f32 0.0, %v5721
        %v5723 = vpop.f32.mrf.mxu0
        %v5724 = vadd.f32 0.0, %v5723
        %5725 = vmatmul.bf16.gmra.mxu0 %v4549
        %v5726 = vpop.f32.mrf.mxu0
        %v5727 = vadd.f32 0.0, %v5726
        %v5728 = vpop.f32.mrf.mxu0
        %v5729 = vadd.f32 0.0, %v5728
        %5730 = vmatmul.bf16.gmra.mxu0 %v4552
        %v5731 = vpop.f32.mrf.mxu0
        %v5732 = vadd.f32 0.0, %v5731
        %v5733 = vpop.f32.mrf.mxu0
        %v5734 = vadd.f32 0.0, %v5733
        %5735 = vmatmul.bf16.gmra.mxu0 %v4555
        %v5736 = vpop.f32.mrf.mxu0
        %v5737 = vadd.f32 0.0, %v5736
        %v5738 = vpop.f32.mrf.mxu0
        %v5739 = vadd.f32 0.0, %v5738
        %5740 = vmatmul.bf16.gmra.mxu0 %v4558
        %v5741 = vpop.f32.mrf.mxu0
        %v5742 = vadd.f32 0.0, %v5741
        %v5743 = vpop.f32.mrf.mxu0
        %v5744 = vadd.f32 0.0, %v5743
        %5745 = vmatmul.bf16.gmra.mxu0 %v4561
        %v5746 = vpop.f32.mrf.mxu0
        %v5747 = vadd.f32 0.0, %v5746
        %v5748 = vpop.f32.mrf.mxu0
        %v5749 = vadd.f32 0.0, %v5748
        %5750 = vmatmul.bf16.gmra.mxu0 %v4564
        %v5751 = vpop.f32.mrf.mxu0
        %v5752 = vadd.f32 0.0, %v5751
        %v5753 = vpop.f32.mrf.mxu0
        %v5754 = vadd.f32 0.0, %v5753
        %5755 = vmatmul.bf16.gmra.mxu0 %v4567
        %v5756 = vpop.f32.mrf.mxu0
        %v5757 = vadd.f32 0.0, %v5756
        %v5758 = vpop.f32.mrf.mxu0
        %v5759 = vadd.f32 0.0, %v5758
        %5760 = vmatmul.bf16.gmra.mxu0 %v4570
        %v5761 = vpop.f32.mrf.mxu0
        %v5762 = vadd.f32 0.0, %v5761
        %v5763 = vpop.f32.mrf.mxu0
        %v5764 = vadd.f32 0.0, %v5763
        %5765 = vmatmul.bf16.gmra.mxu0 %v4573
        %v5766 = vpop.f32.mrf.mxu0
        %v5767 = vadd.f32 0.0, %v5766
        %v5768 = vpop.f32.mrf.mxu0
        %v5769 = vadd.f32 0.0, %v5768
        %5770 = vmatmul.bf16.gmra.mxu0 %v4576
        %v5771 = vpop.f32.mrf.mxu0
        %v5772 = vadd.f32 0.0, %v5771
        %v5773 = vpop.f32.mrf.mxu0
        %v5774 = vadd.f32 0.0, %v5773
        %5775 = vmatmul.bf16.gmra.mxu0 %v4579
        %v5776 = vpop.f32.mrf.mxu0
        %v5777 = vadd.f32 0.0, %v5776
        %v5778 = vpop.f32.mrf.mxu0
        %v5779 = vadd.f32 0.0, %v5778
        %5780 = vmatmul.bf16.gmra.mxu0 %v4582
        %v5781 = vpop.f32.mrf.mxu0
        %v5782 = vadd.f32 0.0, %v5781
        %v5783 = vpop.f32.mrf.mxu0
        %v5784 = vadd.f32 0.0, %v5783
        %5785 = vmatmul.bf16.gmra.mxu0 %v4585
        %v5786 = vpop.f32.mrf.mxu0
        %v5787 = vadd.f32 0.0, %v5786
        %v5788 = vpop.f32.mrf.mxu0
        %v5789 = vadd.f32 0.0, %v5788
        %5790 = vmatmul.bf16.gmra.mxu0 %v4588
        %v5791 = vpop.f32.mrf.mxu0
        %v5792 = vadd.f32 0.0, %v5791
        %v5793 = vpop.f32.mrf.mxu0
        %v5794 = vadd.f32 0.0, %v5793
        %5795 = vmatmul.bf16.gmra.mxu0 %v4591
        %v5796 = vpop.f32.mrf.mxu0
        %v5797 = vadd.f32 0.0, %v5796
        %v5798 = vpop.f32.mrf.mxu0
        %v5799 = vadd.f32 0.0, %v5798
        %5800 = vmatmul.bf16.gmra.mxu0 %v4594
        %v5801 = vpop.f32.mrf.mxu0
        %v5802 = vadd.f32 0.0, %v5801
        %v5803 = vpop.f32.mrf.mxu0
        %v5804 = vadd.f32 0.0, %v5803
        %5805 = vmatmul.bf16.gmra.mxu0 %v4597
        %v5806 = vpop.f32.mrf.mxu0
        %v5807 = vadd.f32 0.0, %v5806
        %v5808 = vpop.f32.mrf.mxu0
        %v5809 = vadd.f32 0.0, %v5808
        %5810 = vmatmul.bf16.gmra.mxu0 %v4600
        %v5811 = vpop.f32.mrf.mxu0
        %v5812 = vadd.f32 0.0, %v5811
        %v5813 = vpop.f32.mrf.mxu0
        %v5814 = vadd.f32 0.0, %v5813
        %5815 = vmatmul.bf16.gmra.mxu0 %v4603
        %v5816 = vpop.f32.mrf.mxu0
        %v5817 = vadd.f32 0.0, %v5816
        %v5818 = vpop.f32.mrf.mxu0
        %v5819 = vadd.f32 0.0, %v5818
        %5820 = vmatmul.bf16.gmra.mxu0 %v4606
        %v5821 = vpop.f32.mrf.mxu0
        %v5822 = vadd.f32 0.0, %v5821
        %v5823 = vpop.f32.mrf.mxu0
        %v5824 = vadd.f32 0.0, %v5823
        %5825 = vmatmul.bf16.gmra.mxu0 %v4609
        %v5826 = vpop.f32.mrf.mxu0
        %v5827 = vadd.f32 0.0, %v5826
        %v5828 = vpop.f32.mrf.mxu0
        %v5829 = vadd.f32 0.0, %v5828
        %5830 = vmatmul.bf16.gmra.mxu0 %v4612
        %v5831 = vpop.f32.mrf.mxu0
        %v5832 = vadd.f32 0.0, %v5831
        %v5833 = vpop.f32.mrf.mxu0
        %v5834 = vadd.f32 0.0, %v5833
        %5835 = vmatmul.bf16.gmra.mxu0 %v4615
        %v5836 = vpop.f32.mrf.mxu0
        %v5837 = vadd.f32 0.0, %v5836
        %v5838 = vpop.f32.mrf.mxu0
        %v5839 = vadd.f32 0.0, %v5838
        %5840 = vmatmul.bf16.gmra.mxu0 %v4618
        %v5841 = vpop.f32.mrf.mxu0
        %v5842 = vadd.f32 0.0, %v5841
        %v5843 = vpop.f32.mrf.mxu0
        %v5844 = vadd.f32 0.0, %v5843
        %5845 = vmatmul.bf16.gmra.mxu0 %v4621
        %v5846 = vpop.f32.mrf.mxu0
        %v5847 = vadd.f32 0.0, %v5846
        %v5848 = vpop.f32.mrf.mxu0
        %v5849 = vadd.f32 0.0, %v5848
        %5850 = vmatmul.bf16.gmra.mxu0 %v4624
        %v5851 = vpop.f32.mrf.mxu0
        %v5852 = vadd.f32 0.0, %v5851
        %v5853 = vpop.f32.mrf.mxu0
        %v5854 = vadd.f32 0.0, %v5853
        %5855 = vmatmul.bf16.gmra.mxu0 %v4627
        %v5856 = vpop.f32.mrf.mxu0
        %v5857 = vadd.f32 0.0, %v5856
        %v5858 = vpop.f32.mrf.mxu0
        %v5859 = vadd.f32 0.0, %v5858
        %5860 = vmatmul.bf16.gmra.mxu0 %v4630
        %v5861 = vpop.f32.mrf.mxu0
        %v5862 = vadd.f32 0.0, %v5861
        %v5863 = vpop.f32.mrf.mxu0
        %v5864 = vadd.f32 0.0, %v5863
        %5865 = vmatmul.bf16.gmra.mxu0 %v4633
        %v5866 = vpop.f32.mrf.mxu0
        %v5867 = vadd.f32 0.0, %v5866
        %v5868 = vpop.f32.mrf.mxu0
        %v5869 = vadd.f32 0.0, %v5868
        %5870 = vmatmul.bf16.gmra.mxu0 %v4636
        %v5871 = vpop.f32.mrf.mxu0
        %v5872 = vadd.f32 0.0, %v5871
        %v5873 = vpop.f32.mrf.mxu0
        %v5874 = vadd.f32 0.0, %v5873
        %5875 = vmatmul.bf16.gmra.mxu0 %v4639
        %v5876 = vpop.f32.mrf.mxu0
        %v5877 = vadd.f32 0.0, %v5876
        %v5878 = vpop.f32.mrf.mxu0
        %v5879 = vadd.f32 0.0, %v5878
        %5880 = vmatmul.bf16.gmra.mxu0 %v4642
        %v5881 = vpop.f32.mrf.mxu0
        %v5882 = vadd.f32 0.0, %v5881
        %v5883 = vpop.f32.mrf.mxu0
        %v5884 = vadd.f32 0.0, %v5883
        %5885 = vmatmul.bf16.gmra.mxu0 %v4645
        %v5886 = vpop.f32.mrf.mxu0
        %v5887 = vadd.f32 0.0, %v5886
        %v5888 = vpop.f32.mrf.mxu0
        %v5889 = vadd.f32 0.0, %v5888
        %5890 = vmatmul.bf16.gmra.mxu0 %v4648
        %v5891 = vpop.f32.mrf.mxu0
        %v5892 = vadd.f32 0.0, %v5891
        %v5893 = vpop.f32.mrf.mxu0
        %v5894 = vadd.f32 0.0, %v5893
        %5895 = vmatmul.bf16.gmra.mxu0 %v4651
        %v5896 = vpop.f32.mrf.mxu0
        %v5897 = vadd.f32 0.0, %v5896
        %v5898 = vpop.f32.mrf.mxu0
        %v5899 = vadd.f32 0.0, %v5898
        %5900 = vmatmul.bf16.gmra.mxu0 %v5116
        %v5901 = vpop.f32.mrf.mxu0
        %v5902 = vadd.f32 0.0, %v5901
        %v5903 = vpop.f32.mrf.mxu0
        %v5904 = vadd.f32 0.0, %v5903
        %5905 = vmatmul.bf16.gmra.mxu0 %v5119
        %v5906 = vpop.f32.mrf.mxu0
        %v5907 = vadd.f32 0.0, %v5906
        %v5908 = vpop.f32.mrf.mxu0
        %v5909 = vadd.f32 0.0, %v5908
        %5910 = vmatmul.bf16.gmra.mxu0 %v5584
        %v5911 = vpop.f32.mrf.mxu0
        %v5912 = vadd.f32 0.0, %v5911
        %v5913 = vpop.f32.mrf.mxu0
        %v5914 = vadd.f32 0.0, %v5913
        %5915 = vmatmul.bf16.gmra.mxu0 %v5587
        %v5916 = vpop.f32.mrf.mxu0
        %v5917 = vadd.f32 0.0, %v5916
        %v5918 = vpop.f32.mrf.mxu0
        %v5919 = vadd.f32 0.0, %v5918
        %5920 = vdwg.mxu0
        %v5921 = vadd.f32 %v5453, %v5602
        %v5922 = vadd.f32 %v5454, %v5604
        %v5923 = vadd.f32 %v5455, %v5607
        %v5924 = vadd.f32 %v5456, %v5609
        %v5925 = vadd.f32 %v5457, %v5612
        %v5926 = vadd.f32 %v5458, %v5614
        %v5927 = vadd.f32 %v5459, %v5617
        %v5928 = vadd.f32 %v5460, %v5619
        %v5929 = vadd.f32 %v5461, %v5622
        %v5930 = vadd.f32 %v5462, %v5624
        %v5931 = vadd.f32 %v5463, %v5627
        %v5932 = vadd.f32 %v5464, %v5629
        %v5933 = vadd.f32 %v5465, %v5632
        %v5934 = vadd.f32 %v5466, %v5634
        %v5935 = vadd.f32 %v5467, %v5637
        %v5936 = vadd.f32 %v5468, %v5639
        %v5937 = vadd.f32 %v5469, %v5642
        %v5938 = vadd.f32 %v5470, %v5644
        %v5939 = vadd.f32 %v5471, %v5647
        %v5940 = vadd.f32 %v5472, %v5649
        %v5941 = vadd.f32 %v5473, %v5652
        %v5942 = vadd.f32 %v5474, %v5654
        %v5943 = vadd.f32 %v5475, %v5657
        %v5944 = vadd.f32 %v5476, %v5659
        %v5945 = vadd.f32 %v5477, %v5662
        %v5946 = vadd.f32 %v5478, %v5664
        %v5947 = vadd.f32 %v5479, %v5667
        %v5948 = vadd.f32 %v5480, %v5669
        %v5949 = vadd.f32 %v5481, %v5672
        %v5950 = vadd.f32 %v5482, %v5674
        %v5951 = vadd.f32 %v5483, %v5677
        %v5952 = vadd.f32 %v5484, %v5679
        %v5953 = vadd.f32 %v5485, %v5682
        %v5954 = vadd.f32 %v5486, %v5684
        %v5955 = vadd.f32 %v5487, %v5687
        %v5956 = vadd.f32 %v5488, %v5689
        %v5957 = vadd.f32 %v5489, %v5692
        %v5958 = vadd.f32 %v5490, %v5694
        %v5959 = vadd.f32 %v5491, %v5697
        %v5960 = vadd.f32 %v5492, %v5699
        %v5961 = vadd.f32 %v5493, %v5702
        %v5962 = vadd.f32 %v5494, %v5704
        %v5963 = vadd.f32 %v5495, %v5707
        %v5964 = vadd.f32 %v5496, %v5709
        %v5965 = vadd.f32 %v5497, %v5712
        %v5966 = vadd.f32 %v5498, %v5714
        %v5967 = vadd.f32 %v5499, %v5717
        %v5968 = vadd.f32 %v5500, %v5719
        %v5969 = vadd.f32 %v5501, %v5722
        %v5970 = vadd.f32 %v5502, %v5724
        %v5971 = vadd.f32 %v5503, %v5727
        %v5972 = vadd.f32 %v5504, %v5729
        %v5973 = vadd.f32 %v5505, %v5732
        %v5974 = vadd.f32 %v5506, %v5734
        %v5975 = vadd.f32 %v5507, %v5737
        %v5976 = vadd.f32 %v5508, %v5739
        %v5977 = vadd.f32 %v5509, %v5742
        %v5978 = vadd.f32 %v5510, %v5744
        %v5979 = vadd.f32 %v5511, %v5747
        %v5980 = vadd.f32 %v5512, %v5749
        %v5981 = vadd.f32 %v5513, %v5752
        %v5982 = vadd.f32 %v5514, %v5754
        %v5983 = vadd.f32 %v5515, %v5757
        %v5984 = vadd.f32 %v5516, %v5759
        %v5985 = vadd.f32 %v5517, %v5762
        %v5986 = vadd.f32 %v5518, %v5764
        %v5987 = vadd.f32 %v5519, %v5767
        %v5988 = vadd.f32 %v5520, %v5769
        %v5989 = vadd.f32 %v5521, %v5772
        %v5990 = vadd.f32 %v5522, %v5774
        %v5991 = vadd.f32 %v5523, %v5777
        %v5992 = vadd.f32 %v5524, %v5779
        %v5993 = vadd.f32 %v5525, %v5782
        %v5994 = vadd.f32 %v5526, %v5784
        %v5995 = vadd.f32 %v5527, %v5787
        %v5996 = vadd.f32 %v5528, %v5789
        %v5997 = vadd.f32 %v5529, %v5792
        %v5998 = vadd.f32 %v5530, %v5794
        %v5999 = vadd.f32 %v5531, %v5797
        %v6000 = vadd.f32 %v5532, %v5799
        %v6001 = vadd.f32 %v5533, %v5802
        %v6002 = vadd.f32 %v5534, %v5804
        %v6003 = vadd.f32 %v5535, %v5807
        %v6004 = vadd.f32 %v5536, %v5809
        %v6005 = vadd.f32 %v5537, %v5812
        %v6006 = vadd.f32 %v5538, %v5814
        %v6007 = vadd.f32 %v5539, %v5817
        %v6008 = vadd.f32 %v5540, %v5819
        %v6009 = vadd.f32 %v5541, %v5822
        %v6010 = vadd.f32 %v5542, %v5824
        %v6011 = vadd.f32 %v5543, %v5827
        %v6012 = vadd.f32 %v5544, %v5829
        %v6013 = vadd.f32 %v5545, %v5832
        %v6014 = vadd.f32 %v5546, %v5834
        %v6015 = vadd.f32 %v5547, %v5837
        %v6016 = vadd.f32 %v5548, %v5839
        %v6017 = vadd.f32 %v5549, %v5842
        %v6018 = vadd.f32 %v5550, %v5844
        %v6019 = vadd.f32 %v5551, %v5847
        %v6020 = vadd.f32 %v5552, %v5849
        %v6021 = vadd.f32 %v5553, %v5852
        %v6022 = vadd.f32 %v5554, %v5854
        %v6023 = vadd.f32 %v5555, %v5857
        %v6024 = vadd.f32 %v5556, %v5859
        %v6025 = vadd.f32 %v5557, %v5862
        %v6026 = vadd.f32 %v5558, %v5864
        %v6027 = vadd.f32 %v5559, %v5867
        %v6028 = vadd.f32 %v5560, %v5869
        %v6029 = vadd.f32 %v5561, %v5872
        %v6030 = vadd.f32 %v5562, %v5874
        %v6031 = vadd.f32 %v5563, %v5877
        %v6032 = vadd.f32 %v5564, %v5879
        %v6033 = vadd.f32 %v5565, %v5882
        %v6034 = vadd.f32 %v5566, %v5884
        %v6035 = vadd.f32 %v5567, %v5887
        %v6036 = vadd.f32 %v5568, %v5889
        %v6037 = vadd.f32 %v5569, %v5892
        %v6038 = vadd.f32 %v5570, %v5894
        %v6039 = vadd.f32 %v5571, %v5897
        %v6040 = vadd.f32 %v5572, %v5899
        %v6041 = vadd.f32 %v5573, %v5902
        %v6042 = vadd.f32 %v5574, %v5904
        %v6043 = vadd.f32 %v5575, %v5907
        %v6044 = vadd.f32 %v5576, %v5909
        %v6045 = vadd.f32 %v5577, %v5912
        %v6046 = vadd.f32 %v5578, %v5914
        %v6047 = vadd.f32 %v5579, %v5917
        %v6048 = vadd.f32 %v5580, %v5919
        %v6049 = vld [vmem:[%s222] sm:$0x1]
        %v6051 = vperm.slane %v6049, 0
        %v6053 = vadd.f32 %v5921, %v6051
        %v6054 = vadd.f32 %v5922, %v6051
        %v6055 = vadd.f32 %v5923, %v6051
        %v6056 = vadd.f32 %v5924, %v6051
        %v6057 = vadd.f32 %v5925, %v6051
        %v6058 = vadd.f32 %v5926, %v6051
        %v6059 = vadd.f32 %v5927, %v6051
        %v6060 = vadd.f32 %v5928, %v6051
        %v6061 = vadd.f32 %v5929, %v6051
        %v6062 = vadd.f32 %v5930, %v6051
        %v6063 = vadd.f32 %v5931, %v6051
        %v6064 = vadd.f32 %v5932, %v6051
        %v6065 = vadd.f32 %v5933, %v6051
        %v6066 = vadd.f32 %v5934, %v6051
        %v6067 = vadd.f32 %v5935, %v6051
        %v6068 = vadd.f32 %v5936, %v6051
        %v6069 = vadd.f32 %v5937, %v6051
        %v6070 = vadd.f32 %v5938, %v6051
        %v6071 = vadd.f32 %v5939, %v6051
        %v6072 = vadd.f32 %v5940, %v6051
        %v6073 = vadd.f32 %v5941, %v6051
        %v6074 = vadd.f32 %v5942, %v6051
        %v6075 = vadd.f32 %v5943, %v6051
        %v6076 = vadd.f32 %v5944, %v6051
        %v6077 = vadd.f32 %v5945, %v6051
        %v6078 = vadd.f32 %v5946, %v6051
        %v6079 = vadd.f32 %v5947, %v6051
        %v6080 = vadd.f32 %v5948, %v6051
        %v6081 = vadd.f32 %v5949, %v6051
        %v6082 = vadd.f32 %v5950, %v6051
        %v6083 = vadd.f32 %v5951, %v6051
        %v6084 = vadd.f32 %v5952, %v6051
        %v6085 = vadd.f32 %v5953, %v6051
        %v6086 = vadd.f32 %v5954, %v6051
        %v6087 = vadd.f32 %v5955, %v6051
        %v6088 = vadd.f32 %v5956, %v6051
        %v6089 = vadd.f32 %v5957, %v6051
        %v6090 = vadd.f32 %v5958, %v6051
        %v6091 = vadd.f32 %v5959, %v6051
        %v6092 = vadd.f32 %v5960, %v6051
        %v6093 = vadd.f32 %v5961, %v6051
        %v6094 = vadd.f32 %v5962, %v6051
        %v6095 = vadd.f32 %v5963, %v6051
        %v6096 = vadd.f32 %v5964, %v6051
        %v6097 = vadd.f32 %v5965, %v6051
        %v6098 = vadd.f32 %v5966, %v6051
        %v6099 = vadd.f32 %v5967, %v6051
        %v6100 = vadd.f32 %v5968, %v6051
        %v6101 = vadd.f32 %v5969, %v6051
        %v6102 = vadd.f32 %v5970, %v6051
        %v6103 = vadd.f32 %v5971, %v6051
        %v6104 = vadd.f32 %v5972, %v6051
        %v6105 = vadd.f32 %v5973, %v6051
        %v6106 = vadd.f32 %v5974, %v6051
        %v6107 = vadd.f32 %v5975, %v6051
        %v6108 = vadd.f32 %v5976, %v6051
        %v6109 = vadd.f32 %v5977, %v6051
        %v6110 = vadd.f32 %v5978, %v6051
        %v6111 = vadd.f32 %v5979, %v6051
        %v6112 = vadd.f32 %v5980, %v6051
        %v6113 = vadd.f32 %v5981, %v6051
        %v6114 = vadd.f32 %v5982, %v6051
        %v6115 = vadd.f32 %v5983, %v6051
        %v6116 = vadd.f32 %v5984, %v6051
        %v6117 = vadd.f32 %v5985, %v6051
        %v6118 = vadd.f32 %v5986, %v6051
        %v6119 = vadd.f32 %v5987, %v6051
        %v6120 = vadd.f32 %v5988, %v6051
        %v6121 = vadd.f32 %v5989, %v6051
        %v6122 = vadd.f32 %v5990, %v6051
        %v6123 = vadd.f32 %v5991, %v6051
        %v6124 = vadd.f32 %v5992, %v6051
        %v6125 = vadd.f32 %v5993, %v6051
        %v6126 = vadd.f32 %v5994, %v6051
        %v6127 = vadd.f32 %v5995, %v6051
        %v6128 = vadd.f32 %v5996, %v6051
        %v6129 = vadd.f32 %v5997, %v6051
        %v6130 = vadd.f32 %v5998, %v6051
        %v6131 = vadd.f32 %v5999, %v6051
        %v6132 = vadd.f32 %v6000, %v6051
        %v6133 = vadd.f32 %v6001, %v6051
        %v6134 = vadd.f32 %v6002, %v6051
        %v6135 = vadd.f32 %v6003, %v6051
        %v6136 = vadd.f32 %v6004, %v6051
        %v6137 = vadd.f32 %v6005, %v6051
        %v6138 = vadd.f32 %v6006, %v6051
        %v6139 = vadd.f32 %v6007, %v6051
        %v6140 = vadd.f32 %v6008, %v6051
        %v6141 = vadd.f32 %v6009, %v6051
        %v6142 = vadd.f32 %v6010, %v6051
        %v6143 = vadd.f32 %v6011, %v6051
        %v6144 = vadd.f32 %v6012, %v6051
        %v6145 = vadd.f32 %v6013, %v6051
        %v6146 = vadd.f32 %v6014, %v6051
        %v6147 = vadd.f32 %v6015, %v6051
        %v6148 = vadd.f32 %v6016, %v6051
        %v6149 = vadd.f32 %v6017, %v6051
        %v6150 = vadd.f32 %v6018, %v6051
        %v6151 = vadd.f32 %v6019, %v6051
        %v6152 = vadd.f32 %v6020, %v6051
        %v6153 = vadd.f32 %v6021, %v6051
        %v6154 = vadd.f32 %v6022, %v6051
        %v6155 = vadd.f32 %v6023, %v6051
        %v6156 = vadd.f32 %v6024, %v6051
        %v6157 = vadd.f32 %v6025, %v6051
        %v6158 = vadd.f32 %v6026, %v6051
        %v6159 = vadd.f32 %v6027, %v6051
        %v6160 = vadd.f32 %v6028, %v6051
        %v6161 = vadd.f32 %v6029, %v6051
        %v6162 = vadd.f32 %v6030, %v6051
        %v6163 = vadd.f32 %v6031, %v6051
        %v6164 = vadd.f32 %v6032, %v6051
        %v6165 = vadd.f32 %v6033, %v6051
        %v6166 = vadd.f32 %v6034, %v6051
        %v6167 = vadd.f32 %v6035, %v6051
        %v6168 = vadd.f32 %v6036, %v6051
        %v6169 = vadd.f32 %v6037, %v6051
        %v6170 = vadd.f32 %v6038, %v6051
        %v6171 = vadd.f32 %v6039, %v6051
        %v6172 = vadd.f32 %v6040, %v6051
        %v6173 = vadd.f32 %v6041, %v6051
        %v6174 = vadd.f32 %v6042, %v6051
        %v6175 = vadd.f32 %v6043, %v6051
        %v6176 = vadd.f32 %v6044, %v6051
        %v6177 = vadd.f32 %v6045, %v6051
        %v6178 = vadd.f32 %v6046, %v6051
        %v6179 = vadd.f32 %v6047, %v6051
        %v6180 = vadd.f32 %v6048, %v6051
        %v6181 = vmax.f32 %v6053, 0.0
        %v6182 = vmax.f32 %v6054, 0.0
        %v6183 = vmax.f32 %v6055, 0.0
        %v6184 = vmax.f32 %v6056, 0.0
        %v6185 = vmax.f32 %v6057, 0.0
        %v6186 = vmax.f32 %v6058, 0.0
        %v6187 = vmax.f32 %v6059, 0.0
        %v6188 = vmax.f32 %v6060, 0.0
        %v6189 = vmax.f32 %v6061, 0.0
        %v6190 = vmax.f32 %v6062, 0.0
        %v6191 = vmax.f32 %v6063, 0.0
        %v6192 = vmax.f32 %v6064, 0.0
        %v6193 = vmax.f32 %v6065, 0.0
        %v6194 = vmax.f32 %v6066, 0.0
        %v6195 = vmax.f32 %v6067, 0.0
        %v6196 = vmax.f32 %v6068, 0.0
        %v6197 = vmax.f32 %v6069, 0.0
        %v6198 = vmax.f32 %v6070, 0.0
        %v6199 = vmax.f32 %v6071, 0.0
        %v6200 = vmax.f32 %v6072, 0.0
        %v6201 = vmax.f32 %v6073, 0.0
        %v6202 = vmax.f32 %v6074, 0.0
        %v6203 = vmax.f32 %v6075, 0.0
        %v6204 = vmax.f32 %v6076, 0.0
        %v6205 = vmax.f32 %v6077, 0.0
        %v6206 = vmax.f32 %v6078, 0.0
        %v6207 = vmax.f32 %v6079, 0.0
        %v6208 = vmax.f32 %v6080, 0.0
        %v6209 = vmax.f32 %v6081, 0.0
        %v6210 = vmax.f32 %v6082, 0.0
        %v6211 = vmax.f32 %v6083, 0.0
        %v6212 = vmax.f32 %v6084, 0.0
        %v6213 = vmax.f32 %v6085, 0.0
        %v6214 = vmax.f32 %v6086, 0.0
        %v6215 = vmax.f32 %v6087, 0.0
        %v6216 = vmax.f32 %v6088, 0.0
        %v6217 = vmax.f32 %v6089, 0.0
        %v6218 = vmax.f32 %v6090, 0.0
        %v6219 = vmax.f32 %v6091, 0.0
        %v6220 = vmax.f32 %v6092, 0.0
        %v6221 = vmax.f32 %v6093, 0.0
        %v6222 = vmax.f32 %v6094, 0.0
        %v6223 = vmax.f32 %v6095, 0.0
        %v6224 = vmax.f32 %v6096, 0.0
        %v6225 = vmax.f32 %v6097, 0.0
        %v6226 = vmax.f32 %v6098, 0.0
        %v6227 = vmax.f32 %v6099, 0.0
        %v6228 = vmax.f32 %v6100, 0.0
        %v6229 = vmax.f32 %v6101, 0.0
        %v6230 = vmax.f32 %v6102, 0.0
        %v6231 = vmax.f32 %v6103, 0.0
        %v6232 = vmax.f32 %v6104, 0.0
        %v6233 = vmax.f32 %v6105, 0.0
        %v6234 = vmax.f32 %v6106, 0.0
        %v6235 = vmax.f32 %v6107, 0.0
        %v6236 = vmax.f32 %v6108, 0.0
        %v6237 = vmax.f32 %v6109, 0.0
        %v6238 = vmax.f32 %v6110, 0.0
        %v6239 = vmax.f32 %v6111, 0.0
        %v6240 = vmax.f32 %v6112, 0.0
        %v6241 = vmax.f32 %v6113, 0.0
        %v6242 = vmax.f32 %v6114, 0.0
        %v6243 = vmax.f32 %v6115, 0.0
        %v6244 = vmax.f32 %v6116, 0.0
        %v6245 = vmax.f32 %v6117, 0.0
        %v6246 = vmax.f32 %v6118, 0.0
        %v6247 = vmax.f32 %v6119, 0.0
        %v6248 = vmax.f32 %v6120, 0.0
        %v6249 = vmax.f32 %v6121, 0.0
        %v6250 = vmax.f32 %v6122, 0.0
        %v6251 = vmax.f32 %v6123, 0.0
        %v6252 = vmax.f32 %v6124, 0.0
        %v6253 = vmax.f32 %v6125, 0.0
        %v6254 = vmax.f32 %v6126, 0.0
        %v6255 = vmax.f32 %v6127, 0.0
        %v6256 = vmax.f32 %v6128, 0.0
        %v6257 = vmax.f32 %v6129, 0.0
        %v6258 = vmax.f32 %v6130, 0.0
        %v6259 = vmax.f32 %v6131, 0.0
        %v6260 = vmax.f32 %v6132, 0.0
        %v6261 = vmax.f32 %v6133, 0.0
        %v6262 = vmax.f32 %v6134, 0.0
        %v6263 = vmax.f32 %v6135, 0.0
        %v6264 = vmax.f32 %v6136, 0.0
        %v6265 = vmax.f32 %v6137, 0.0
        %v6266 = vmax.f32 %v6138, 0.0
        %v6267 = vmax.f32 %v6139, 0.0
        %v6268 = vmax.f32 %v6140, 0.0
        %v6269 = vmax.f32 %v6141, 0.0
        %v6270 = vmax.f32 %v6142, 0.0
        %v6271 = vmax.f32 %v6143, 0.0
        %v6272 = vmax.f32 %v6144, 0.0
        %v6273 = vmax.f32 %v6145, 0.0
        %v6274 = vmax.f32 %v6146, 0.0
        %v6275 = vmax.f32 %v6147, 0.0
        %v6276 = vmax.f32 %v6148, 0.0
        %v6277 = vmax.f32 %v6149, 0.0
        %v6278 = vmax.f32 %v6150, 0.0
        %v6279 = vmax.f32 %v6151, 0.0
        %v6280 = vmax.f32 %v6152, 0.0
        %v6281 = vmax.f32 %v6153, 0.0
        %v6282 = vmax.f32 %v6154, 0.0
        %v6283 = vmax.f32 %v6155, 0.0
        %v6284 = vmax.f32 %v6156, 0.0
        %v6285 = vmax.f32 %v6157, 0.0
        %v6286 = vmax.f32 %v6158, 0.0
        %v6287 = vmax.f32 %v6159, 0.0
        %v6288 = vmax.f32 %v6160, 0.0
        %v6289 = vmax.f32 %v6161, 0.0
        %v6290 = vmax.f32 %v6162, 0.0
        %v6291 = vmax.f32 %v6163, 0.0
        %v6292 = vmax.f32 %v6164, 0.0
        %v6293 = vmax.f32 %v6165, 0.0
        %v6294 = vmax.f32 %v6166, 0.0
        %v6295 = vmax.f32 %v6167, 0.0
        %v6296 = vmax.f32 %v6168, 0.0
        %v6297 = vmax.f32 %v6169, 0.0
        %v6298 = vmax.f32 %v6170, 0.0
        %v6299 = vmax.f32 %v6171, 0.0
        %v6300 = vmax.f32 %v6172, 0.0
        %v6301 = vmax.f32 %v6173, 0.0
        %v6302 = vmax.f32 %v6174, 0.0
        %v6303 = vmax.f32 %v6175, 0.0
        %v6304 = vmax.f32 %v6176, 0.0
        %v6305 = vmax.f32 %v6177, 0.0
        %v6306 = vmax.f32 %v6178, 0.0
        %v6307 = vmax.f32 %v6179, 0.0
        %v6308 = vmax.f32 %v6180, 0.0
        %v6309 = vpack.c.bf16 %v6181, %v6181
        %v6310 = vpack.c.bf16 %v6182, %v6182
        %v6311 = vpack.c.bf16 %v6183, %v6183
        %v6312 = vpack.c.bf16 %v6184, %v6184
        %v6313 = vpack.c.bf16 %v6185, %v6185
        %v6314 = vpack.c.bf16 %v6186, %v6186
        %v6315 = vpack.c.bf16 %v6187, %v6187
        %v6316 = vpack.c.bf16 %v6188, %v6188
        %v6317 = vpack.c.bf16 %v6189, %v6189
        %v6318 = vpack.c.bf16 %v6190, %v6190
        %v6319 = vpack.c.bf16 %v6191, %v6191
        %v6320 = vpack.c.bf16 %v6192, %v6192
        %v6321 = vpack.c.bf16 %v6193, %v6193
        %v6322 = vpack.c.bf16 %v6194, %v6194
        %v6323 = vpack.c.bf16 %v6195, %v6195
        %v6324 = vpack.c.bf16 %v6196, %v6196
        %v6325 = vpack.c.bf16 %v6197, %v6197
        %v6326 = vpack.c.bf16 %v6198, %v6198
        %v6327 = vpack.c.bf16 %v6199, %v6199
        %v6328 = vpack.c.bf16 %v6200, %v6200
        %v6329 = vpack.c.bf16 %v6201, %v6201
        %v6330 = vpack.c.bf16 %v6202, %v6202
        %v6331 = vpack.c.bf16 %v6203, %v6203
        %v6332 = vpack.c.bf16 %v6204, %v6204
        %v6333 = vpack.c.bf16 %v6205, %v6205
        %v6334 = vpack.c.bf16 %v6206, %v6206
        %v6335 = vpack.c.bf16 %v6207, %v6207
        %v6336 = vpack.c.bf16 %v6208, %v6208
        %v6337 = vpack.c.bf16 %v6209, %v6209
        %v6338 = vpack.c.bf16 %v6210, %v6210
        %v6339 = vpack.c.bf16 %v6211, %v6211
        %v6340 = vpack.c.bf16 %v6212, %v6212
        %v6341 = vpack.c.bf16 %v6213, %v6213
        %v6342 = vpack.c.bf16 %v6214, %v6214
        %v6343 = vpack.c.bf16 %v6215, %v6215
        %v6344 = vpack.c.bf16 %v6216, %v6216
        %v6345 = vpack.c.bf16 %v6217, %v6217
        %v6346 = vpack.c.bf16 %v6218, %v6218
        %v6347 = vpack.c.bf16 %v6219, %v6219
        %v6348 = vpack.c.bf16 %v6220, %v6220
        %v6349 = vpack.c.bf16 %v6221, %v6221
        %v6350 = vpack.c.bf16 %v6222, %v6222
        %v6351 = vpack.c.bf16 %v6223, %v6223
        %v6352 = vpack.c.bf16 %v6224, %v6224
        %v6353 = vpack.c.bf16 %v6225, %v6225
        %v6354 = vpack.c.bf16 %v6226, %v6226
        %v6355 = vpack.c.bf16 %v6227, %v6227
        %v6356 = vpack.c.bf16 %v6228, %v6228
        %v6357 = vpack.c.bf16 %v6229, %v6229
        %v6358 = vpack.c.bf16 %v6230, %v6230
        %v6359 = vpack.c.bf16 %v6231, %v6231
        %v6360 = vpack.c.bf16 %v6232, %v6232
        %v6361 = vpack.c.bf16 %v6233, %v6233
        %v6362 = vpack.c.bf16 %v6234, %v6234
        %v6363 = vpack.c.bf16 %v6235, %v6235
        %v6364 = vpack.c.bf16 %v6236, %v6236
        %v6365 = vpack.c.bf16 %v6237, %v6237
        %v6366 = vpack.c.bf16 %v6238, %v6238
        %v6367 = vpack.c.bf16 %v6239, %v6239
        %v6368 = vpack.c.bf16 %v6240, %v6240
        %v6369 = vpack.c.bf16 %v6241, %v6241
        %v6370 = vpack.c.bf16 %v6242, %v6242
        %v6371 = vpack.c.bf16 %v6243, %v6243
        %v6372 = vpack.c.bf16 %v6244, %v6244
        %v6373 = vpack.c.bf16 %v6245, %v6245
        %v6374 = vpack.c.bf16 %v6246, %v6246
        %v6375 = vpack.c.bf16 %v6247, %v6247
        %v6376 = vpack.c.bf16 %v6248, %v6248
        %v6377 = vpack.c.bf16 %v6249, %v6249
        %v6378 = vpack.c.bf16 %v6250, %v6250
        %v6379 = vpack.c.bf16 %v6251, %v6251
        %v6380 = vpack.c.bf16 %v6252, %v6252
        %v6381 = vpack.c.bf16 %v6253, %v6253
        %v6382 = vpack.c.bf16 %v6254, %v6254
        %v6383 = vpack.c.bf16 %v6255, %v6255
        %v6384 = vpack.c.bf16 %v6256, %v6256
        %v6385 = vpack.c.bf16 %v6257, %v6257
        %v6386 = vpack.c.bf16 %v6258, %v6258
        %v6387 = vpack.c.bf16 %v6259, %v6259
        %v6388 = vpack.c.bf16 %v6260, %v6260
        %v6389 = vpack.c.bf16 %v6261, %v6261
        %v6390 = vpack.c.bf16 %v6262, %v6262
        %v6391 = vpack.c.bf16 %v6263, %v6263
        %v6392 = vpack.c.bf16 %v6264, %v6264
        %v6393 = vpack.c.bf16 %v6265, %v6265
        %v6394 = vpack.c.bf16 %v6266, %v6266
        %v6395 = vpack.c.bf16 %v6267, %v6267
        %v6396 = vpack.c.bf16 %v6268, %v6268
        %v6397 = vpack.c.bf16 %v6269, %v6269
        %v6398 = vpack.c.bf16 %v6270, %v6270
        %v6399 = vpack.c.bf16 %v6271, %v6271
        %v6400 = vpack.c.bf16 %v6272, %v6272
        %v6401 = vpack.c.bf16 %v6273, %v6273
        %v6402 = vpack.c.bf16 %v6274, %v6274
        %v6403 = vpack.c.bf16 %v6275, %v6275
        %v6404 = vpack.c.bf16 %v6276, %v6276
        %v6405 = vpack.c.bf16 %v6277, %v6277
        %v6406 = vpack.c.bf16 %v6278, %v6278
        %v6407 = vpack.c.bf16 %v6279, %v6279
        %v6408 = vpack.c.bf16 %v6280, %v6280
        %v6409 = vpack.c.bf16 %v6281, %v6281
        %v6410 = vpack.c.bf16 %v6282, %v6282
        %v6411 = vpack.c.bf16 %v6283, %v6283
        %v6412 = vpack.c.bf16 %v6284, %v6284
        %v6413 = vpack.c.bf16 %v6285, %v6285
        %v6414 = vpack.c.bf16 %v6286, %v6286
        %v6415 = vpack.c.bf16 %v6287, %v6287
        %v6416 = vpack.c.bf16 %v6288, %v6288
        %v6417 = vpack.c.bf16 %v6289, %v6289
        %v6418 = vpack.c.bf16 %v6290, %v6290
        %v6419 = vpack.c.bf16 %v6291, %v6291
        %v6420 = vpack.c.bf16 %v6292, %v6292
        %v6421 = vpack.c.bf16 %v6293, %v6293
        %v6422 = vpack.c.bf16 %v6294, %v6294
        %v6423 = vpack.c.bf16 %v6295, %v6295
        %v6424 = vpack.c.bf16 %v6296, %v6296
        %v6425 = vpack.c.bf16 %v6297, %v6297
        %v6426 = vpack.c.bf16 %v6298, %v6298
        %v6427 = vpack.c.bf16 %v6299, %v6299
        %v6428 = vpack.c.bf16 %v6300, %v6300
        %v6429 = vpack.c.bf16 %v6301, %v6301
        %v6430 = vpack.c.bf16 %v6302, %v6302
        %v6431 = vpack.c.bf16 %v6303, %v6303
        %v6432 = vpack.c.bf16 %v6304, %v6304
        %v6433 = vpack.c.bf16 %v6305, %v6305
        %v6434 = vpack.c.bf16 %v6306, %v6306
        %v6435 = vpack.c.bf16 %v6307, %v6307
        %v6436 = vpack.c.bf16 %v6308, %v6308
        %vm6437 = vcmask 519168
        %6438 = vst.msk [vmem:[%s210] sm:$0xf] %vm6437, %v6309
        %6439 = vst.msk [vmem:[%s210 + $0x4] sm:$0xf] %vm6437, %v6310
        %6440 = vst.msk [vmem:[%s210 + $0x8] sm:$0xf] %vm6437, %v6311
        %6441 = vst.msk [vmem:[%s210 + $0xc] sm:$0xf] %vm6437, %v6312
        %6442 = vst.msk [vmem:[%s210 + $0x10] sm:$0xf] %vm6437, %v6313
        %6443 = vst.msk [vmem:[%s210 + $0x14] sm:$0xf] %vm6437, %v6314
        %6444 = vst.msk [vmem:[%s210 + $0x18] sm:$0xf] %vm6437, %v6315
        %6445 = vst.msk [vmem:[%s210 + $0x1c] sm:$0xf] %vm6437, %v6316
        %6446 = vst.msk [vmem:[%s210 + $0x20] sm:$0xf] %vm6437, %v6317
        %6447 = vst.msk [vmem:[%s210 + $0x24] sm:$0xf] %vm6437, %v6318
        %6448 = vst.msk [vmem:[%s210 + $0x28] sm:$0xf] %vm6437, %v6319
        %6449 = vst.msk [vmem:[%s210 + $0x2c] sm:$0xf] %vm6437, %v6320
        %6450 = vst.msk [vmem:[%s210 + $0x30] sm:$0xf] %vm6437, %v6321
        %6451 = vst.msk [vmem:[%s210 + $0x34] sm:$0xf] %vm6437, %v6322
        %6452 = vst.msk [vmem:[%s210 + $0x38] sm:$0xf] %vm6437, %v6323
        %6453 = vst.msk [vmem:[%s210 + $0x3c] sm:$0xf] %vm6437, %v6324
        %6454 = vst.msk [vmem:[%s210 + $0x40] sm:$0xf] %vm6437, %v6325
        %6455 = vst.msk [vmem:[%s210 + $0x44] sm:$0xf] %vm6437, %v6326
        %6456 = vst.msk [vmem:[%s210 + $0x48] sm:$0xf] %vm6437, %v6327
        %6457 = vst.msk [vmem:[%s210 + $0x4c] sm:$0xf] %vm6437, %v6328
        %6458 = vst.msk [vmem:[%s210 + $0x50] sm:$0xf] %vm6437, %v6329
        %6459 = vst.msk [vmem:[%s210 + $0x54] sm:$0xf] %vm6437, %v6330
        %6460 = vst.msk [vmem:[%s210 + $0x58] sm:$0xf] %vm6437, %v6331
        %6461 = vst.msk [vmem:[%s210 + $0x5c] sm:$0xf] %vm6437, %v6332
        %6462 = vst.msk [vmem:[%s210 + $0x60] sm:$0xf] %vm6437, %v6333
        %6463 = vst.msk [vmem:[%s210 + $0x64] sm:$0xf] %vm6437, %v6334
        %6464 = vst.msk [vmem:[%s210 + $0x68] sm:$0xf] %vm6437, %v6335
        %6465 = vst.msk [vmem:[%s210 + $0x6c] sm:$0xf] %vm6437, %v6336
        %6466 = vst.msk [vmem:[%s210 + $0x70] sm:$0xf] %vm6437, %v6337
        %6467 = vst.msk [vmem:[%s210 + $0x74] sm:$0xf] %vm6437, %v6338
        %6468 = vst.msk [vmem:[%s210 + $0x78] sm:$0xf] %vm6437, %v6339
        %6469 = vst.msk [vmem:[%s210 + $0x7c] sm:$0xf] %vm6437, %v6340
        %6470 = vst.msk [vmem:[%s210 + $0x80] sm:$0xf] %vm6437, %v6341
        %6471 = vst.msk [vmem:[%s210 + $0x84] sm:$0xf] %vm6437, %v6342
        %6472 = vst.msk [vmem:[%s210 + $0x88] sm:$0xf] %vm6437, %v6343
        %6473 = vst.msk [vmem:[%s210 + $0x8c] sm:$0xf] %vm6437, %v6344
        %6474 = vst.msk [vmem:[%s210 + $0x90] sm:$0xf] %vm6437, %v6345
        %6475 = vst.msk [vmem:[%s210 + $0x94] sm:$0xf] %vm6437, %v6346
        %6476 = vst.msk [vmem:[%s210 + $0x98] sm:$0xf] %vm6437, %v6347
        %6477 = vst.msk [vmem:[%s210 + $0x9c] sm:$0xf] %vm6437, %v6348
        %6478 = vst.msk [vmem:[%s210 + $0xa0] sm:$0xf] %vm6437, %v6349
        %6479 = vst.msk [vmem:[%s210 + $0xa4] sm:$0xf] %vm6437, %v6350
        %6480 = vst.msk [vmem:[%s210 + $0xa8] sm:$0xf] %vm6437, %v6351
        %6481 = vst.msk [vmem:[%s210 + $0xac] sm:$0xf] %vm6437, %v6352
        %6482 = vst.msk [vmem:[%s210 + $0xb0] sm:$0xf] %vm6437, %v6353
        %6483 = vst.msk [vmem:[%s210 + $0xb4] sm:$0xf] %vm6437, %v6354
        %6484 = vst.msk [vmem:[%s210 + $0xb8] sm:$0xf] %vm6437, %v6355
        %6485 = vst.msk [vmem:[%s210 + $0xbc] sm:$0xf] %vm6437, %v6356
        %6486 = vst.msk [vmem:[%s210 + $0xc0] sm:$0xf] %vm6437, %v6357
        %6487 = vst.msk [vmem:[%s210 + $0xc4] sm:$0xf] %vm6437, %v6358
        %6488 = vst.msk [vmem:[%s210 + $0xc8] sm:$0xf] %vm6437, %v6359
        %6489 = vst.msk [vmem:[%s210 + $0xcc] sm:$0xf] %vm6437, %v6360
        %6490 = vst.msk [vmem:[%s210 + $0xd0] sm:$0xf] %vm6437, %v6361
        %6491 = vst.msk [vmem:[%s210 + $0xd4] sm:$0xf] %vm6437, %v6362
        %6492 = vst.msk [vmem:[%s210 + $0xd8] sm:$0xf] %vm6437, %v6363
        %6493 = vst.msk [vmem:[%s210 + $0xdc] sm:$0xf] %vm6437, %v6364
        %6494 = vst.msk [vmem:[%s210 + $0xe0] sm:$0xf] %vm6437, %v6365
        %6495 = vst.msk [vmem:[%s210 + $0xe4] sm:$0xf] %vm6437, %v6366
        %6496 = vst.msk [vmem:[%s210 + $0xe8] sm:$0xf] %vm6437, %v6367
        %6497 = vst.msk [vmem:[%s210 + $0xec] sm:$0xf] %vm6437, %v6368
        %6498 = vst.msk [vmem:[%s210 + $0xf0] sm:$0xf] %vm6437, %v6369
        %6499 = vst.msk [vmem:[%s210 + $0xf4] sm:$0xf] %vm6437, %v6370
        %6500 = vst.msk [vmem:[%s210 + $0xf8] sm:$0xf] %vm6437, %v6371
        %6501 = vst.msk [vmem:[%s210 + $0xfc] sm:$0xf] %vm6437, %v6372
        %6502 = vst.msk [vmem:[%s210 + $0x100] sm:$0xf] %vm6437, %v6373
        %6503 = vst.msk [vmem:[%s210 + $0x104] sm:$0xf] %vm6437, %v6374
        %6504 = vst.msk [vmem:[%s210 + $0x108] sm:$0xf] %vm6437, %v6375
        %6505 = vst.msk [vmem:[%s210 + $0x10c] sm:$0xf] %vm6437, %v6376
        %6506 = vst.msk [vmem:[%s210 + $0x110] sm:$0xf] %vm6437, %v6377
        %6507 = vst.msk [vmem:[%s210 + $0x114] sm:$0xf] %vm6437, %v6378
        %6508 = vst.msk [vmem:[%s210 + $0x118] sm:$0xf] %vm6437, %v6379
        %6509 = vst.msk [vmem:[%s210 + $0x11c] sm:$0xf] %vm6437, %v6380
        %6510 = vst.msk [vmem:[%s210 + $0x120] sm:$0xf] %vm6437, %v6381
        %6511 = vst.msk [vmem:[%s210 + $0x124] sm:$0xf] %vm6437, %v6382
        %6512 = vst.msk [vmem:[%s210 + $0x128] sm:$0xf] %vm6437, %v6383
        %6513 = vst.msk [vmem:[%s210 + $0x12c] sm:$0xf] %vm6437, %v6384
        %6514 = vst.msk [vmem:[%s210 + $0x130] sm:$0xf] %vm6437, %v6385
        %6515 = vst.msk [vmem:[%s210 + $0x134] sm:$0xf] %vm6437, %v6386
        %6516 = vst.msk [vmem:[%s210 + $0x138] sm:$0xf] %vm6437, %v6387
        %6517 = vst.msk [vmem:[%s210 + $0x13c] sm:$0xf] %vm6437, %v6388
        %6518 = vst.msk [vmem:[%s210 + $0x140] sm:$0xf] %vm6437, %v6389
        %6519 = vst.msk [vmem:[%s210 + $0x144] sm:$0xf] %vm6437, %v6390
        %6520 = vst.msk [vmem:[%s210 + $0x148] sm:$0xf] %vm6437, %v6391
        %6521 = vst.msk [vmem:[%s210 + $0x14c] sm:$0xf] %vm6437, %v6392
        %6522 = vst.msk [vmem:[%s210 + $0x150] sm:$0xf] %vm6437, %v6393
        %6523 = vst.msk [vmem:[%s210 + $0x154] sm:$0xf] %vm6437, %v6394
        %6524 = vst.msk [vmem:[%s210 + $0x158] sm:$0xf] %vm6437, %v6395
        %6525 = vst.msk [vmem:[%s210 + $0x15c] sm:$0xf] %vm6437, %v6396
        %6526 = vst.msk [vmem:[%s210 + $0x160] sm:$0xf] %vm6437, %v6397
        %6527 = vst.msk [vmem:[%s210 + $0x164] sm:$0xf] %vm6437, %v6398
        %6528 = vst.msk [vmem:[%s210 + $0x168] sm:$0xf] %vm6437, %v6399
        %6529 = vst.msk [vmem:[%s210 + $0x16c] sm:$0xf] %vm6437, %v6400
        %6530 = vst.msk [vmem:[%s210 + $0x170] sm:$0xf] %vm6437, %v6401
        %6531 = vst.msk [vmem:[%s210 + $0x174] sm:$0xf] %vm6437, %v6402
        %6532 = vst.msk [vmem:[%s210 + $0x178] sm:$0xf] %vm6437, %v6403
        %6533 = vst.msk [vmem:[%s210 + $0x17c] sm:$0xf] %vm6437, %v6404
        %6534 = vst.msk [vmem:[%s210 + $0x180] sm:$0xf] %vm6437, %v6405
        %6535 = vst.msk [vmem:[%s210 + $0x184] sm:$0xf] %vm6437, %v6406
        %6536 = vst.msk [vmem:[%s210 + $0x188] sm:$0xf] %vm6437, %v6407
        %6537 = vst.msk [vmem:[%s210 + $0x18c] sm:$0xf] %vm6437, %v6408
        %6538 = vst.msk [vmem:[%s210 + $0x190] sm:$0xf] %vm6437, %v6409
        %6539 = vst.msk [vmem:[%s210 + $0x194] sm:$0xf] %vm6437, %v6410
        %6540 = vst.msk [vmem:[%s210 + $0x198] sm:$0xf] %vm6437, %v6411
        %6541 = vst.msk [vmem:[%s210 + $0x19c] sm:$0xf] %vm6437, %v6412
        %6542 = vst.msk [vmem:[%s210 + $0x1a0] sm:$0xf] %vm6437, %v6413
        %6543 = vst.msk [vmem:[%s210 + $0x1a4] sm:$0xf] %vm6437, %v6414
        %6544 = vst.msk [vmem:[%s210 + $0x1a8] sm:$0xf] %vm6437, %v6415
        %6545 = vst.msk [vmem:[%s210 + $0x1ac] sm:$0xf] %vm6437, %v6416
        %6546 = vst.msk [vmem:[%s210 + $0x1b0] sm:$0xf] %vm6437, %v6417
        %6547 = vst.msk [vmem:[%s210 + $0x1b4] sm:$0xf] %vm6437, %v6418
        %6548 = vst.msk [vmem:[%s210 + $0x1b8] sm:$0xf] %vm6437, %v6419
        %6549 = vst.msk [vmem:[%s210 + $0x1bc] sm:$0xf] %vm6437, %v6420
        %6550 = vst.msk [vmem:[%s210 + $0x1c0] sm:$0xf] %vm6437, %v6421
        %6551 = vst.msk [vmem:[%s210 + $0x1c4] sm:$0xf] %vm6437, %v6422
        %6552 = vst.msk [vmem:[%s210 + $0x1c8] sm:$0xf] %vm6437, %v6423
        %6553 = vst.msk [vmem:[%s210 + $0x1cc] sm:$0xf] %vm6437, %v6424
        %6554 = vst.msk [vmem:[%s210 + $0x1d0] sm:$0xf] %vm6437, %v6425
        %6555 = vst.msk [vmem:[%s210 + $0x1d4] sm:$0xf] %vm6437, %v6426
        %6556 = vst.msk [vmem:[%s210 + $0x1d8] sm:$0xf] %vm6437, %v6427
        %6557 = vst.msk [vmem:[%s210 + $0x1dc] sm:$0xf] %vm6437, %v6428
        %6558 = vst.msk [vmem:[%s210 + $0x1e0] sm:$0xf] %vm6437, %v6429
        %6559 = vst.msk [vmem:[%s210 + $0x1e4] sm:$0xf] %vm6437, %v6430
        %6560 = vst.msk [vmem:[%s210 + $0x1e8] sm:$0xf] %vm6437, %v6431
        %6561 = vst.msk [vmem:[%s210 + $0x1ec] sm:$0xf] %vm6437, %v6432
        %6562 = vst.msk [vmem:[%s210 + $0x1f0] sm:$0xf] %vm6437, %v6433
        %6563 = vst.msk [vmem:[%s210 + $0x1f4] sm:$0xf] %vm6437, %v6434
        %6564 = vst.msk [vmem:[%s210 + $0x1f8] sm:$0xf] %vm6437, %v6435
        %6565 = vst.msk [vmem:[%s210 + $0x1fc] sm:$0xf] %vm6437, %v6436
        %s6566 = sand.u32 %s126, 1
        %s6567 = scalar_lea.sflag [#allocation3], %s6566
        %s6568 = sand.u32 %s126, 1
        %s6569 = smul.addr %s6568, 512
        %s6570 = scalar_lea.vmem [#allocation2], %s6569
        // Predicated region
        $region33: #{tpu_custom_call.1} parent=31 // pred_check
          %p6571 = pneg %p136
        $region34: #{tpu_custom_call.1} parent=31 // pred_check_branch
          %6573 = sbr.rel (%p6571) target = $region36
        $region35: #{tpu_custom_call.1} parent=31 // pred_region
          %s6574 = smul.u32 32, %s24
          %6576 = vsyncadd %s6567, 0
          %s6577 = smul.addr %s6574, 4
          %s6578 = sadd.s32 %s22, %s6577
          %s6579 = smul.addr %s23, 128
          %s6580 = sadd.s32 %s6578, %s6579
          %s6581 = smul.addr %s6580, 4
          %s6582 = scalar_lea.hbm %s3, %s6581
          %s6583 = sshll.u32 %s6570, 4
          %s6584 = int_to_ptr.vmem [resolvable:$true] %s6583
          %s6585 = sshll.u32 %s6582, 4
          %s6586 = int_to_ptr.hbm [resolvable:$true] %s6585
          %6591 = dma.vmem_to_hbm [thread:$0]  %s6584, 8192, %s6586, %s6567, 64, 64, 4
        $region36: #{tpu_custom_call.1} parent=31 // pred_fallthru
          _
      $region32: #{tpu_custom_call.1} parent=5 // pred_fallthru
        _
      %p6592 = scmp.le.s32.totalorder 2, %s12
      // Predicated region
      $region37: #{tpu_custom_call.1} parent=5 // pred_check
        %p6593 = pneg %p6592
      $region38: #{tpu_custom_call.1} parent=5 // pred_check_branch
        %6595 = sbr.rel (%p6593) target = $region40
      $region39: #{tpu_custom_call.1} parent=5 // pred_region
        %s6596 = ssub.s32 %s12, 2
        // Predicated region
        $region41: #{tpu_custom_call.1} parent=39 // pred_check
          %p6597 = pneg %p142
        $region42: #{tpu_custom_call.1} parent=39 // pred_check_branch
          %6599 = sbr.rel (%p6597) target = $region44
        $region43: #{tpu_custom_call.1} parent=39 // pred_region
          %s6600 = sand.u32 %s127, 1
          %s6601 = scalar_lea.sflag [#allocation3], %s6600
          %s6602 = sand.u32 %s127, 1
          %s6603 = smul.addr %s6602, 512
          %s6604 = scalar_lea.vmem [#allocation2], %s6603
          %6606 = dma.done %s6601, 8192
        $region44: #{tpu_custom_call.1} parent=39 // pred_fallthru
          _
      $region40: #{tpu_custom_call.1} parent=5 // pred_fallthru
        _
    $region6: #{tpu_custom_call.1} parent=1 // loop_footer
      %s16 = sadd.s32 1, %s12
    $region7: #{tpu_custom_call.1} parent=1 // loop_footer_branch
      %11 = sbr.rel target = $region3
    $region8: #{tpu_custom_call.1} parent=1 // loop_exit
      _
    %6607 = vsyncpa [#allocation3], 1
    %s6608 = scalar_lea.sflag [#allocation3], 1
    %6609 = vsyncpa %s6608, 1

</llo_original>
